<compile_context>
chip_gen: v7x
topology: tpu7x:2x2x1
jax: 0.10.0
libtpu: 0.0.40
codegen_flags: <defaults>
</compile_context>

<pallas_src>
import functools

import jax
import jax.numpy as jnp
from jax.experimental import pallas as pl
from jax.experimental.pallas import tpu as pltpu

_VMEM_LIMIT = 48 * 1024 * 1024  # below v7x's 64 MiB physical, above the 32 MiB default


def _pick_tile(dim, target, align):
    """Largest tile <= target that divides dim and respects alignment (or full dim)."""
    if dim <= target:
        return dim
    for t in range(target, 0, -1):
        if t % align == 0 and dim % t == 0:
            return t
    return dim


# ---------------------------------------------------------------------------
# Tiled linear (+ bias, optional activation, optional fused residual+LayerNorm)
# ---------------------------------------------------------------------------

def _linear_kernel(x_ref, w_ref, b_ref, *rest, activation, fuse_ln, eps):
    if fuse_ln:
        res_ref, g_ref, beta_ref, o_ref, acc_ref = rest
    else:
        o_ref, acc_ref = rest

    k_idx = pl.program_id(2)

    @pl.when(k_idx == 0)
    def _():
        acc_ref[...] = jnp.zeros(acc_ref.shape, acc_ref.dtype)

    acc_ref[...] += jnp.dot(x_ref[...], w_ref[...], preferred_element_type=jnp.float32)

    @pl.when(k_idx == pl.num_programs(2) - 1)
    def _():
        y = acc_ref[...] + b_ref[...].astype(jnp.float32)
        if activation == "gelu":
            # TODO(synk): HF BERT uses exact erf gelu; tanh approximation used here.
            y = jax.nn.gelu(y, approximate=True)
        elif activation == "tanh":
            y = jnp.tanh(y)
        if fuse_ln:
            h = y + res_ref[...].astype(jnp.float32)
            mu = jnp.mean(h, axis=-1, keepdims=True)
            var = jnp.mean(jnp.square(h - mu), axis=-1, keepdims=True)
            y = ((h - mu) * jax.lax.rsqrt(var + eps)
                 * g_ref[...].astype(jnp.float32) + beta_ref[...].astype(jnp.float32))
        o_ref[...] = y.astype(o_ref.dtype)


def pallas_linear(x, w, b, *, activation=None, residual=None, ln_gamma=None, ln_beta=None,
                  eps=1e-12, out_dtype=jnp.bfloat16,
                  tm_target=256, tn_target=512, tk_target=512):
    M, K = x.shape
    N = w.shape[1]
    fuse_ln = ln_gamma is not None

    tm = _pick_tile(M, tm_target, 8)
    tk = _pick_tile(K, tk_target, 128)
    # LayerNorm needs the whole row: keep the full N in one tile when fusing LN.
    tn = N if fuse_ln else _pick_tile(N, tn_target, 128)
    grid = (M // tm, N // tn, K // tk)

    in_specs = [
        pl.BlockSpec((tm, tk), lambda i, j, k: (i, k)),
        pl.BlockSpec((tk, tn), lambda i, j, k: (k, j)),
        pl.BlockSpec((1, tn), lambda i, j, k: (0, j)),
    ]
    args = [x, w, b.reshape(1, N)]
    if fuse_ln:
        in_specs += [
            pl.BlockSpec((tm, tn), lambda i, j, k: (i, j)),
            pl.BlockSpec((1, tn), lambda i, j, k: (0, j)),
            pl.BlockSpec((1, tn), lambda i, j, k: (0, j)),
        ]
        args += [residual, ln_gamma.reshape(1, N), ln_beta.reshape(1, N)]

    kernel = functools.partial(_linear_kernel, activation=activation,
                               fuse_ln=fuse_ln, eps=eps)
    return pl.pallas_call(
        kernel,
        out_shape=jax.ShapeDtypeStruct((M, N), out_dtype),
        grid=grid,
        in_specs=in_specs,
        out_specs=pl.BlockSpec((tm, tn), lambda i, j, k: (i, j)),
        scratch_shapes=[pltpu.VMEM((tm, tn), jnp.float32)],
        compiler_params=pltpu.CompilerParams(
            dimension_semantics=("parallel", "parallel", "arbitrary"),
            vmem_limit_bytes=_VMEM_LIMIT),
    )(*args)


# ---------------------------------------------------------------------------
# LayerNorm only (embeddings) — no dummy residual tensor
# ---------------------------------------------------------------------------

def _ln_kernel(x_ref, g_ref, b_ref, o_ref, *, eps):
    h = x_ref[...].astype(jnp.float32)
    mu = jnp.mean(h, axis=-1, keepdims=True)
    var = jnp.mean(jnp.square(h - mu), axis=-1, keepdims=True)
    o_ref[...] = ((h - mu) * jax.lax.rsqrt(var + eps)
                  * g_ref[...] + b_ref[...]).astype(o_ref.dtype)


def pallas_layernorm(x, gamma, beta, eps=1e-12, out_dtype=jnp.bfloat16, tm_target=512):
    M, H = x.shape
    tm = _pick_tile(M, tm_target, 8)
    return pl.pallas_call(
        functools.partial(_ln_kernel, eps=eps),
        out_shape=jax.ShapeDtypeStruct((M, H), out_dtype),
        grid=(M // tm,),
        in_specs=[pl.BlockSpec((tm, H), lambda i: (i, 0)),
                  pl.BlockSpec((1, H), lambda i: (0, 0)),
                  pl.BlockSpec((1, H), lambda i: (0, 0))],
        out_specs=pl.BlockSpec((tm, H), lambda i: (i, 0)),
        compiler_params=pltpu.CompilerParams(
            dimension_semantics=("parallel",),
            vmem_limit_bytes=_VMEM_LIMIT),
    )(x, gamma.reshape(1, H), beta.reshape(1, H))


# ---------------------------------------------------------------------------
# Flash-style attention: heads split/merged inside the kernel (lane-dense [.., H] I/O)
# ---------------------------------------------------------------------------

def _flash_attn_kernel(q_ref, k_ref, v_ref, mask_ref, o_ref, m_sc, l_sc, acc_sc,
                       *, n_heads, dh, scale):
    ki = pl.program_id(2)

    @pl.when(ki == 0)
    def _():
        m_sc[...] = jnp.full(m_sc.shape, -jnp.inf, m_sc.dtype)
        l_sc[...] = jnp.zeros(l_sc.shape, l_sc.dtype)
        acc_sc[...] = jnp.zeros(acc_sc.shape, acc_sc.dtype)

    q = q_ref[0]          # [tq,  H]   bf16
    k = k_ref[0]          # [tkv, H]   bf16
    v = v_ref[0]          # [tkv, H]   bf16
    amask = mask_ref[0]   # [1,  tkv]  f32 additive (0 / -1e9)

    for h in range(n_heads):
        sl = slice(h * dh, (h + 1) * dh)
        s = jax.lax.dot_general(q[:, sl], k[:, sl], (((1,), (1,)), ((), ())),
                                preferred_element_type=jnp.float32) * scale + amask
        m_prev = m_sc[h]                                        # [tq, 1]
        m_new = jnp.maximum(m_prev, jnp.max(s, axis=-1, keepdims=True))
        alpha = jnp.exp(m_prev - m_new)
        p = jnp.exp(s - m_new)                                  # [tq, tkv] f32
        l_sc[h] = alpha * l_sc[h] + jnp.sum(p, axis=-1, keepdims=True)
        acc_sc[:, sl] = alpha * acc_sc[:, sl] + jnp.dot(
            p.astype(v.dtype), v[:, sl], preferred_element_type=jnp.float32)
        m_sc[h] = m_new

    @pl.when(ki == pl.num_programs(2) - 1)
    def _():
        for h in range(n_heads):
            sl = slice(h * dh, (h + 1) * dh)
            acc_sc[:, sl] = acc_sc[:, sl] * pl.reciprocal(l_sc[h], approx=True)
        o_ref[0] = acc_sc[...].astype(o_ref.dtype)   # single lane-dense [tq, H] store


def pallas_flash_attention(q, k, v, add_mask, *, n_heads, scale,
                           tq_target=256, tkv_target=512):
    # q, k, v: [B, S, H] with head-major columns; add_mask: [B, 1, S] additive fp32.
    B, S, H = q.shape
    dh = H // n_heads
    tq = _pick_tile(S, tq_target, 8)
    tkv = _pick_tile(S, tkv_target, 128)
    grid = (B, S // tq, S // tkv)

    kernel = functools.partial(_flash_attn_kernel, n_heads=n_heads, dh=dh, scale=scale)
    return pl.pallas_call(
        kernel,
        out_shape=jax.ShapeDtypeStruct((B, S, H), q.dtype),
        grid=grid,
        in_specs=[
            pl.BlockSpec((1, tq, H), lambda b, qi, ki: (b, qi, 0)),
            pl.BlockSpec((1, tkv, H), lambda b, qi, ki: (b, ki, 0)),
            pl.BlockSpec((1, tkv, H), lambda b, qi, ki: (b, ki, 0)),
            pl.BlockSpec((1, 1, tkv), lambda b, qi, ki: (b, 0, ki)),
        ],
        out_specs=pl.BlockSpec((1, tq, H), lambda b, qi, ki: (b, qi, 0)),
        scratch_shapes=[
            pltpu.VMEM((n_heads, tq, 1), jnp.float32),   # running max per head
            pltpu.VMEM((n_heads, tq, 1), jnp.float32),   # running denom per head
            pltpu.VMEM((tq, H), jnp.float32),            # lane-dense accumulator
        ],
        compiler_params=pltpu.CompilerParams(
            dimension_semantics=("parallel", "parallel", "arbitrary"),
            vmem_limit_bytes=_VMEM_LIMIT),
    )(q, k, v, add_mask)


# ---------------------------------------------------------------------------
# Fused pooler(tanh) + cls linear (tiny; batch padded to 8 sublanes)
# ---------------------------------------------------------------------------

def _pooler_cls_kernel(x_ref, pw_ref, pb_ref, cw_ref, cb_ref, o_ref):
    pooled = jnp.tanh(jnp.dot(x_ref[...], pw_ref[...], preferred_element_type=jnp.float32)
                      + pb_ref[...].astype(jnp.float32))
    logits = (jnp.dot(pooled.astype(cw_ref.dtype), cw_ref[...],
                      preferred_element_type=jnp.float32)
              + cb_ref[...].astype(jnp.float32))
    o_ref[...] = logits.astype(o_ref.dtype)


def pallas_pooler_cls(cls_tok, pool_w, pool_b, cls_w, cls_b, out_dtype=jnp.float32):
    B, H = cls_tok.shape
    L = cls_w.shape[1]
    Bp = max(8, ((B + 7) // 8) * 8)
    x = jnp.zeros((Bp, H), cls_tok.dtype).at[:B].set(cls_tok)
    out = pl.pallas_call(
        _pooler_cls_kernel,
        out_shape=jax.ShapeDtypeStruct((Bp, L), out_dtype),
        grid=(1,),
        in_specs=[pl.BlockSpec((Bp, H), lambda i: (0, 0)),
                  pl.BlockSpec((H, H), lambda i: (0, 0)),
                  pl.BlockSpec((1, H), lambda i: (0, 0)),
                  pl.BlockSpec((H, L), lambda i: (0, 0)),
                  pl.BlockSpec((1, L), lambda i: (0, 0))],
        out_specs=pl.BlockSpec((Bp, L), lambda i: (0, 0)),
        compiler_params=pltpu.CompilerParams(
            dimension_semantics=("arbitrary",),
            vmem_limit_bytes=_VMEM_LIMIT),
    )(x, pool_w, pool_b.reshape(1, H), cls_w, cls_b.reshape(1, L))
    return out[:B]


# ---------------------------------------------------------------------------
# Deterministic parameter initialization (synthetic "BERT" encoder + heads)
# ---------------------------------------------------------------------------

def init_params(key, *, vocab, max_pos, hidden, n_layers, inter, labels):
    def dense(k, shape):
        # matrices in bf16 (MXU-native inputs); vector params stay fp32
        return (0.02 * jax.random.normal(k, shape, jnp.float32)).astype(jnp.bfloat16)

    keys = iter(jax.random.split(key, 8 + 8 * n_layers))
    params = {
        "word_emb": 0.02 * jax.random.normal(next(keys), (vocab, hidden), jnp.float32),
        "pos_emb": 0.02 * jax.random.normal(next(keys), (max_pos, hidden), jnp.float32),
        "type_emb": 0.02 * jax.random.normal(next(keys), (2, hidden), jnp.float32),
        "emb_ln_g": jnp.ones((hidden,), jnp.float32),
        "emb_ln_b": jnp.zeros((hidden,), jnp.float32),
        "layers": [],
        "pool_w": dense(next(keys), (hidden, hidden)),
        "pool_b": jnp.zeros((hidden,), jnp.float32),
        "cls_w": dense(next(keys), (hidden, labels)),
        "cls_b": jnp.zeros((labels,), jnp.float32),
    }
    for _ in range(n_layers):
        wq = dense(next(keys), (hidden, hidden))
        wk = dense(next(keys), (hidden, hidden))
        wv = dense(next(keys), (hidden, hidden))
        params["layers"].append({
            # fused QKV projection weight [H, 3H] -> single matmul, x read once
            "wqkv": jnp.concatenate([wq, wk, wv], axis=1),
            "bqkv": jnp.zeros((3 * hidden,), jnp.float32),
            "wo": dense(next(keys), (hidden, hidden)), "bo": jnp.zeros((hidden,), jnp.float32),
            "ln1_g": jnp.ones((hidden,), jnp.float32), "ln1_b": jnp.zeros((hidden,), jnp.float32),
            "wi": dense(next(keys), (hidden, inter)), "bi": jnp.zeros((inter,), jnp.float32),
            "wf": dense(next(keys), (inter, hidden)), "bf": jnp.zeros((hidden,), jnp.float32),
            "ln2_g": jnp.ones((hidden,), jnp.float32), "ln2_b": jnp.zeros((hidden,), jnp.float32),
        })
    return params


# ---------------------------------------------------------------------------
# Forward pass (mirrors SentencePairClassifier.forward at inference)
# ---------------------------------------------------------------------------

def sentence_pair_classifier_forward(params, input_ids, attn_masks, token_type_ids, *, n_heads):
    B, S = input_ids.shape
    H = params["word_emb"].shape[1]
    dh = H // n_heads
    scale = 1.0 / (dh ** 0.5)

    # --- embeddings (gathers are glue) + LN-only Pallas kernel ---
    emb = (jnp.take(params["word_emb"], input_ids, axis=0)
           + params["pos_emb"][None, :S, :]
           + jnp.take(params["type_emb"], token_type_ids, axis=0))
    x = pallas_layernorm(emb.reshape(B * S, H), params["emb_ln_g"], params["emb_ln_b"])

    # additive attention mask: 0 for real tokens, -1e9 for padding -> [B, 1, S]
    add_mask = ((1.0 - attn_masks.astype(jnp.float32)) * -1e9).reshape(B, 1, S)

    for lyr in params["layers"]:
        # fused QKV projection
        qkv = pallas_linear(x, lyr["wqkv"], lyr["bqkv"])            # [B*S, 3H] bf16
        q = qkv[:, :H].reshape(B, S, H)
        k = qkv[:, H:2 * H].reshape(B, S, H)
        v = qkv[:, 2 * H:].reshape(B, S, H)

        # flash attention, heads handled inside the kernel (no wrapper transposes)
        ctx = pallas_flash_attention(q, k, v, add_mask, n_heads=n_heads, scale=scale)

        # attention output projection with fused bias + residual + LayerNorm epilogue
        x = pallas_linear(ctx.reshape(B * S, H), lyr["wo"], lyr["bo"],
                          residual=x, ln_gamma=lyr["ln1_g"], ln_beta=lyr["ln1_b"])

        # FFN: up-projection + gelu, then down-projection with fused residual + LayerNorm
        h = pallas_linear(x, lyr["wi"], lyr["bi"], activation="gelu")
        x = pallas_linear(h, lyr["wf"], lyr["bf"],
                          residual=x, ln_gamma=lyr["ln2_g"], ln_beta=lyr["ln2_b"])

    # pooler_output = tanh(Linear(hidden_states[:, 0, :])); dropout(p=0.1) is identity at eval
    cls_tok = x.reshape(B, S, H)[:, 0, :]
    logits = pallas_pooler_cls(cls_tok, params["pool_w"], params["pool_b"],
                               params["cls_w"], params["cls_b"])
    return logits


# ---------------------------------------------------------------------------
# Main
# ---------------------------------------------------------------------------

if __name__ == "__main__":
    B, S = 2, 8
    HIDDEN, N_HEADS, INTER = 32, 4, 128
    VOCAB, MAX_POS, N_LAYERS, LABELS = 50, 16, 2, 1

    root = jax.random.PRNGKey(0)
    k_params, k_ids, k_types = jax.random.split(root, 3)

    params = init_params(k_params, vocab=VOCAB, max_pos=MAX_POS, hidden=HIDDEN,
                         n_layers=N_LAYERS, inter=INTER, labels=LABELS)

    input_ids = jax.random.randint(k_ids, (B, S), 0, VOCAB, dtype=jnp.int32)
    token_type_ids = jax.random.randint(k_types, (B, S), 0, 2, dtype=jnp.int32)
    # mask out the last two tokens of the second example to exercise the attention mask
    attn_masks = jnp.ones((B, S), dtype=jnp.int32).at[1, -2:].set(0)

    forward = jax.jit(functools.partial(sentence_pair_classifier_forward, n_heads=N_HEADS))
    logits = forward(params, input_ids, attn_masks, token_type_ids)
    logits = jax.block_until_ready(logits)

    assert logits.shape == (B, LABELS)
    assert bool(jnp.all(jnp.isfinite(logits)))
    print("KERNEL_OK")
</pallas_src>

<mosaic_0001>
module attributes {stable_mosaic.version = 11 : i64} {
  func.func @_ln_kernel(%arg0: i32, %arg1: memref<16x32xf32, #tpu.memory_space<vmem>>, %arg2: memref<1x32xf32, #tpu.memory_space<vmem>>, %arg3: memref<1x32xf32, #tpu.memory_space<vmem>>, %arg4: memref<16x32xbf16, #tpu.memory_space<vmem>>) attributes {dimension_semantics = [#tpu.dimension_semantics<parallel>], iteration_bounds = array<i64: 1>, scalar_prefetch = 0 : i64, scratch_operands = 0 : i64, tpu.core_type = #tpu.core_type<tc>, window_params = [{transform_indices = @transform_0, window_bounds = array<i64: 16, 32>}, {pipeline_mode = #tpu.pipeline_mode<synchronous>, transform_indices = @transform_1, window_bounds = array<i64: 1, 32>}, {pipeline_mode = #tpu.pipeline_mode<synchronous>, transform_indices = @transform_2, window_bounds = array<i64: 1, 32>}, {transform_indices = @transform_3, window_bounds = array<i64: 16, 32>}]} {
    %c0 = arith.constant 0 : index
    %c0_0 = arith.constant 0 : index
    %0 = vector.load %arg1[%c0, %c0_0] : memref<16x32xf32, #tpu.memory_space<vmem>>, vector<16x32xf32>
    %cst = arith.constant dense<0.000000e+00> : vector<16xf32>
    %1 = vector.multi_reduction <add>, %0, %cst [1] : vector<16x32xf32> to vector<16xf32>
    %2 = vector.shape_cast %1 : vector<16xf32> to vector<16x1xf32>
    %cst_1 = arith.constant 3.200000e+01 : f32
    %3 = vector.broadcast %cst_1 : f32 to vector<16x1xf32>
    %4 = arith.divf %2, %3 : vector<16x1xf32>
    %5 = vector.broadcast %4 : vector<16x1xf32> to vector<16x32xf32>
    %6 = arith.subf %0, %5 : vector<16x32xf32>
    %7 = arith.mulf %6, %6 : vector<16x32xf32>
    %cst_2 = arith.constant dense<0.000000e+00> : vector<16xf32>
    %8 = vector.multi_reduction <add>, %7, %cst_2 [1] : vector<16x32xf32> to vector<16xf32>
    %9 = vector.shape_cast %8 : vector<16xf32> to vector<16x1xf32>
    %cst_3 = arith.constant 3.200000e+01 : f32
    %10 = vector.broadcast %cst_3 : f32 to vector<16x1xf32>
    %11 = arith.divf %9, %10 : vector<16x1xf32>
    %12 = vector.broadcast %4 : vector<16x1xf32> to vector<16x32xf32>
    %13 = arith.subf %0, %12 : vector<16x32xf32>
    %cst_4 = arith.constant 9.99999996E-13 : f32
    %14 = vector.broadcast %cst_4 : f32 to vector<16x1xf32>
    %15 = arith.addf %11, %14 : vector<16x1xf32>
    %16 = math.rsqrt %15 : vector<16x1xf32>
    %17 = vector.broadcast %16 : vector<16x1xf32> to vector<16x32xf32>
    %18 = arith.mulf %13, %17 : vector<16x32xf32>
    %c0_5 = arith.constant 0 : index
    %c0_6 = arith.constant 0 : index
    %19 = vector.load %arg2[%c0_5, %c0_6] : memref<1x32xf32, #tpu.memory_space<vmem>>, vector<1x32xf32>
    %20 = vector.broadcast %19 : vector<1x32xf32> to vector<16x32xf32>
    %21 = arith.mulf %18, %20 : vector<16x32xf32>
    %c0_7 = arith.constant 0 : index
    %c0_8 = arith.constant 0 : index
    %22 = vector.load %arg3[%c0_7, %c0_8] : memref<1x32xf32, #tpu.memory_space<vmem>>, vector<1x32xf32>
    %23 = vector.broadcast %22 : vector<1x32xf32> to vector<16x32xf32>
    %24 = arith.addf %21, %23 : vector<16x32xf32>
    %25 = arith.truncf %24 : vector<16x32xf32> to vector<16x32xbf16>
    %c0_9 = arith.constant 0 : index
    %c0_10 = arith.constant 0 : index
    %26 = vector.load %arg4[%c0_9, %c0_10] : memref<16x32xbf16, #tpu.memory_space<vmem>>, vector<16x32xbf16>
    tpu.vector_store %arg4[%c0_9, %c0_10], %25 {strides = array<i32>} : memref<16x32xbf16, #tpu.memory_space<vmem>>, vector<16x32xbf16>,
    return
  }
  func.func @transform_0(%arg0: i32) -> (i32, i32) {
    %c0_i32 = arith.constant 0 : i32
    %c0_i32_0 = arith.constant 0 : i32
    return %arg0, %c0_i32 : i32, i32
  }
  func.func @transform_1(%arg0: i32) -> (i32, i32) {
    %c0_i32 = arith.constant 0 : i32
    %c0_i32_0 = arith.constant 0 : i32
    %c0_i32_1 = arith.constant 0 : i32
    return %c0_i32, %c0_i32_0 : i32, i32
  }
  func.func @transform_2(%arg0: i32) -> (i32, i32) {
    %c0_i32 = arith.constant 0 : i32
    %c0_i32_0 = arith.constant 0 : i32
    %c0_i32_1 = arith.constant 0 : i32
    return %c0_i32, %c0_i32_0 : i32, i32
  }
  func.func @transform_3(%arg0: i32) -> (i32, i32) {
    %c0_i32 = arith.constant 0 : i32
    %c0_i32_0 = arith.constant 0 : i32
    return %arg0, %c0_i32 : i32, i32
  }
}

module attributes {stable_mosaic.version = 11 : i64} {
  func.func @_linear_kernel(%arg0: i32, %arg1: i32, %arg2: i32, %arg3: memref<16x32xbf16, #tpu.memory_space<vmem>>, %arg4: memref<32x96xbf16, #tpu.memory_space<vmem>>, %arg5: memref<1x96xf32, #tpu.memory_space<vmem>>, %arg6: memref<16x96xbf16, #tpu.memory_space<vmem>>, %arg7: memref<16x96xf32, #tpu.memory_space<vmem>>) attributes {dimension_semantics = [#tpu.dimension_semantics<parallel>, #tpu.dimension_semantics<parallel>, #tpu.dimension_semantics<arbitrary>], iteration_bounds = array<i64: 1, 1, 1>, scalar_prefetch = 0 : i64, scratch_operands = 1 : i64, tpu.core_type = #tpu.core_type<tc>, window_params = [{transform_indices = @transform_0, window_bounds = array<i64: 16, 32>}, {transform_indices = @transform_1, window_bounds = array<i64: 32, 96>}, {transform_indices = @transform_2, window_bounds = array<i64: 1, 96>}, {transform_indices = @transform_3, window_bounds = array<i64: 16, 96>}]} {
    %c0_i32 = arith.constant 0 : i32
    %0 = arith.cmpi eq, %arg2, %c0_i32 : i32
    %1 = arith.extui %0 : i1 to i32
    %c0_i32_0 = arith.constant 0 : i32
    %2 = arith.cmpi ne, %1, %c0_i32_0 : i32
    scf.if %2 {
      %cst_10 = arith.constant 0.000000e+00 : f32
      %12 = vector.broadcast %cst_10 : f32 to vector<16x96xf32>
      %c0_11 = arith.constant 0 : index
      %c0_12 = arith.constant 0 : index
      %13 = vector.load %arg7[%c0_11, %c0_12] : memref<16x96xf32, #tpu.memory_space<vmem>>, vector<16x96xf32>
      tpu.vector_store %arg7[%c0_11, %c0_12], %12 {strides = array<i32>} : memref<16x96xf32, #tpu.memory_space<vmem>>, vector<16x96xf32>,
    } else {
    }
    %c0 = arith.constant 0 : index
    %c0_1 = arith.constant 0 : index
    %3 = vector.load %arg7[%c0, %c0_1] : memref<16x96xf32, #tpu.memory_space<vmem>>, vector<16x96xf32>
    %c0_2 = arith.constant 0 : index
    %c0_3 = arith.constant 0 : index
    %4 = vector.load %arg3[%c0_2, %c0_3] : memref<16x32xbf16, #tpu.memory_space<vmem>>, vector<16x32xbf16>
    %c0_4 = arith.constant 0 : index
    %c0_5 = arith.constant 0 : index
    %5 = vector.load %arg4[%c0_4, %c0_5] : memref<32x96xbf16, #tpu.memory_space<vmem>>, vector<32x96xbf16>
    %cst = arith.constant dense<0.000000e+00> : vector<16x96xf32>
    %6 = tpu.matmul %4, %5, %cst {dimension_numbers = #tpu.dot_dimension_numbers<[1], [0], [0], [1], [0, 0, 1, 1], [], []>} : vector<16x32xbf16>, vector<32x96xbf16>, vector<16x96xf32> -> vector<16x96xf32>
    %7 = arith.addf %3, %6 : vector<16x96xf32>
    %c0_6 = arith.constant 0 : index
    %c0_7 = arith.constant 0 : index
    %8 = vector.load %arg7[%c0_6, %c0_7] : memref<16x96xf32, #tpu.memory_space<vmem>>, vector<16x96xf32>
    tpu.vector_store %arg7[%c0_6, %c0_7], %7 {strides = array<i32>} : memref<16x96xf32, #tpu.memory_space<vmem>>, vector<16x96xf32>,
    %c0_i32_8 = arith.constant 0 : i32
    %9 = arith.cmpi eq, %arg2, %c0_i32_8 : i32
    %10 = arith.extui %9 : i1 to i32
    %c0_i32_9 = arith.constant 0 : i32
    %11 = arith.cmpi ne, %10, %c0_i32_9 : i32
    scf.if %11 {
      %c0_10 = arith.constant 0 : index
      %c0_11 = arith.constant 0 : index
      %12 = vector.load %arg7[%c0_10, %c0_11] : memref<16x96xf32, #tpu.memory_space<vmem>>, vector<16x96xf32>
      %c0_12 = arith.constant 0 : index
      %c0_13 = arith.constant 0 : index
      %13 = vector.load %arg5[%c0_12, %c0_13] : memref<1x96xf32, #tpu.memory_space<vmem>>, vector<1x96xf32>
      %14 = vector.broadcast %13 : vector<1x96xf32> to vector<16x96xf32>
      %15 = arith.addf %12, %14 : vector<16x96xf32>
      %16 = arith.truncf %15 : vector<16x96xf32> to vector<16x96xbf16>
      %c0_14 = arith.constant 0 : index
      %c0_15 = arith.constant 0 : index
      %17 = vector.load %arg6[%c0_14, %c0_15] : memref<16x96xbf16, #tpu.memory_space<vmem>>, vector<16x96xbf16>
      tpu.vector_store %arg6[%c0_14, %c0_15], %16 {strides = array<i32>} : memref<16x96xbf16, #tpu.memory_space<vmem>>, vector<16x96xbf16>,
    } else {
    }
    return
  }
  func.func @transform_0(%arg0: i32, %arg1: i32, %arg2: i32) -> (i32, i32) {
    %c0_i32 = arith.constant 0 : i32
    return %arg0, %arg2 : i32, i32
  }
  func.func @transform_1(%arg0: i32, %arg1: i32, %arg2: i32) -> (i32, i32) {
    %c0_i32 = arith.constant 0 : i32
    return %arg2, %arg1 : i32, i32
  }
  func.func @transform_2(%arg0: i32, %arg1: i32, %arg2: i32) -> (i32, i32) {
    %c0_i32 = arith.constant 0 : i32
    %c0_i32_0 = arith.constant 0 : i32
    return %c0_i32, %arg1 : i32, i32
  }
  func.func @transform_3(%arg0: i32, %arg1: i32, %arg2: i32) -> (i32, i32) {
    %c0_i32 = arith.constant 0 : i32
    return %arg0, %arg1 : i32, i32
  }
}

module attributes {stable_mosaic.version = 11 : i64} {
  func.func @_linear_kernel(%arg0: i32, %arg1: i32, %arg2: i32, %arg3: memref<16x32xbf16, #tpu.memory_space<vmem>>, %arg4: memref<32x32xbf16, #tpu.memory_space<vmem>>, %arg5: memref<1x32xf32, #tpu.memory_space<vmem>>, %arg6: memref<16x32xbf16, #tpu.memory_space<vmem>>, %arg7: memref<1x32xf32, #tpu.memory_space<vmem>>, %arg8: memref<1x32xf32, #tpu.memory_space<vmem>>, %arg9: memref<16x32xbf16, #tpu.memory_space<vmem>>, %arg10: memref<16x32xf32, #tpu.memory_space<vmem>>) attributes {dimension_semantics = [#tpu.dimension_semantics<parallel>, #tpu.dimension_semantics<parallel>, #tpu.dimension_semantics<arbitrary>], iteration_bounds = array<i64: 1, 1, 1>, scalar_prefetch = 0 : i64, scratch_operands = 1 : i64, tpu.core_type = #tpu.core_type<tc>, window_params = [{transform_indices = @transform_0, window_bounds = array<i64: 16, 32>}, {transform_indices = @transform_1, window_bounds = array<i64: 32, 32>}, {transform_indices = @transform_2, window_bounds = array<i64: 1, 32>}, {transform_indices = @transform_3, window_bounds = array<i64: 16, 32>}, {transform_indices = @transform_4, window_bounds = array<i64: 1, 32>}, {transform_indices = @transform_5, window_bounds = array<i64: 1, 32>}, {transform_indices = @transform_6, window_bounds = array<i64: 16, 32>}]} {
    %c0_i32 = arith.constant 0 : i32
    %0 = arith.cmpi eq, %arg2, %c0_i32 : i32
    %1 = arith.extui %0 : i1 to i32
    %c0_i32_0 = arith.constant 0 : i32
    %2 = arith.cmpi ne, %1, %c0_i32_0 : i32
    scf.if %2 {
      %cst_10 = arith.constant 0.000000e+00 : f32
      %12 = vector.broadcast %cst_10 : f32 to vector<16x32xf32>
      %c0_11 = arith.constant 0 : index
      %c0_12 = arith.constant 0 : index
      %13 = vector.load %arg10[%c0_11, %c0_12] : memref<16x32xf32, #tpu.memory_space<vmem>>, vector<16x32xf32>
      tpu.vector_store %arg10[%c0_11, %c0_12], %12 {strides = array<i32>} : memref<16x32xf32, #tpu.memory_space<vmem>>, vector<16x32xf32>,
    } else {
    }
    %c0 = arith.constant 0 : index
    %c0_1 = arith.constant 0 : index
    %3 = vector.load %arg10[%c0, %c0_1] : memref<16x32xf32, #tpu.memory_space<vmem>>, vector<16x32xf32>
    %c0_2 = arith.constant 0 : index
    %c0_3 = arith.constant 0 : index
    %4 = vector.load %arg3[%c0_2, %c0_3] : memref<16x32xbf16, #tpu.memory_space<vmem>>, vector<16x32xbf16>
    %c0_4 = arith.constant 0 : index
    %c0_5 = arith.constant 0 : index
    %5 = vector.load %arg4[%c0_4, %c0_5] : memref<32x32xbf16, #tpu.memory_space<vmem>>, vector<32x32xbf16>
    %cst = arith.constant dense<0.000000e+00> : vector<16x32xf32>
    %6 = tpu.matmul %4, %5, %cst {dimension_numbers = #tpu.dot_dimension_numbers<[1], [0], [0], [1], [0, 0, 1, 1], [], []>} : vector<16x32xbf16>, vector<32x32xbf16>, vector<16x32xf32> -> vector<16x32xf32>
    %7 = arith.addf %3, %6 : vector<16x32xf32>
    %c0_6 = arith.constant 0 : index
    %c0_7 = arith.constant 0 : index
    %8 = vector.load %arg10[%c0_6, %c0_7] : memref<16x32xf32, #tpu.memory_space<vmem>>, vector<16x32xf32>
    tpu.vector_store %arg10[%c0_6, %c0_7], %7 {strides = array<i32>} : memref<16x32xf32, #tpu.memory_space<vmem>>, vector<16x32xf32>,
    %c0_i32_8 = arith.constant 0 : i32
    %9 = arith.cmpi eq, %arg2, %c0_i32_8 : i32
    %10 = arith.extui %9 : i1 to i32
    %c0_i32_9 = arith.constant 0 : i32
    %11 = arith.cmpi ne, %10, %c0_i32_9 : i32
    scf.if %11 {
      %c0_10 = arith.constant 0 : index
      %c0_11 = arith.constant 0 : index
      %12 = vector.load %arg10[%c0_10, %c0_11] : memref<16x32xf32, #tpu.memory_space<vmem>>, vector<16x32xf32>
      %c0_12 = arith.constant 0 : index
      %c0_13 = arith.constant 0 : index
      %13 = vector.load %arg5[%c0_12, %c0_13] : memref<1x32xf32, #tpu.memory_space<vmem>>, vector<1x32xf32>
      %14 = vector.broadcast %13 : vector<1x32xf32> to vector<16x32xf32>
      %15 = arith.addf %12, %14 : vector<16x32xf32>
      %c0_14 = arith.constant 0 : index
      %c0_15 = arith.constant 0 : index
      %16 = vector.load %arg6[%c0_14, %c0_15] : memref<16x32xbf16, #tpu.memory_space<vmem>>, vector<16x32xbf16>
      %17 = arith.extf %16 : vector<16x32xbf16> to vector<16x32xf32>
      %18 = arith.addf %15, %17 : vector<16x32xf32>
      %cst_16 = arith.constant dense<0.000000e+00> : vector<16xf32>
      %19 = vector.multi_reduction <add>, %18, %cst_16 [1] : vector<16x32xf32> to vector<16xf32>
      %20 = vector.shape_cast %19 : vector<16xf32> to vector<16x1xf32>
      %cst_17 = arith.constant 3.200000e+01 : f32
      %21 = vector.broadcast %cst_17 : f32 to vector<16x1xf32>
      %22 = arith.divf %20, %21 : vector<16x1xf32>
      %23 = vector.broadcast %22 : vector<16x1xf32> to vector<16x32xf32>
      %24 = arith.subf %18, %23 : vector<16x32xf32>
      %25 = arith.mulf %24, %24 : vector<16x32xf32>
      %cst_18 = arith.constant dense<0.000000e+00> : vector<16xf32>
      %26 = vector.multi_reduction <add>, %25, %cst_18 [1] : vector<16x32xf32> to vector<16xf32>
      %27 = vector.shape_cast %26 : vector<16xf32> to vector<16x1xf32>
      %cst_19 = arith.constant 3.200000e+01 : f32
      %28 = vector.broadcast %cst_19 : f32 to vector<16x1xf32>
      %29 = arith.divf %27, %28 : vector<16x1xf32>
      %30 = vector.broadcast %22 : vector<16x1xf32> to vector<16x32xf32>
      %31 = arith.subf %18, %30 : vector<16x32xf32>
      %cst_20 = arith.constant 9.99999996E-13 : f32
      %32 = vector.broadcast %cst_20 : f32 to vector<16x1xf32>
      %33 = arith.addf %29, %32 : vector<16x1xf32>
      %34 = math.rsqrt %33 : vector<16x1xf32>
      %35 = vector.broadcast %34 : vector<16x1xf32> to vector<16x32xf32>
      %36 = arith.mulf %31, %35 : vector<16x32xf32>
      %c0_21 = arith.constant 0 : index
      %c0_22 = arith.constant 0 : index
      %37 = vector.load %arg7[%c0_21, %c0_22] : memref<1x32xf32, #tpu.memory_space<vmem>>, vector<1x32xf32>
      %38 = vector.broadcast %37 : vector<1x32xf32> to vector<16x32xf32>
      %39 = arith.mulf %36, %38 : vector<16x32xf32>
      %c0_23 = arith.constant 0 : index
      %c0_24 = arith.constant 0 : index
      %40 = vector.load %arg8[%c0_23, %c0_24] : memref<1x32xf32, #tpu.memory_space<vmem>>, vector<1x32xf32>
      %41 = vector.broadcast %40 : vector<1x32xf32> to vector<16x32xf32>
      %42 = arith.addf %39, %41 : vector<16x32xf32>
      %43 = arith.truncf %42 : vector<16x32xf32> to vector<16x32xbf16>
      %c0_25 = arith.constant 0 : index
      %c0_26 = arith.constant 0 : index
      %44 = vector.load %arg9[%c0_25, %c0_26] : memref<16x32xbf16, #tpu.memory_space<vmem>>, vector<16x32xbf16>
      tpu.vector_store %arg9[%c0_25, %c0_26], %43 {strides = array<i32>} : memref<16x32xbf16, #tpu.memory_space<vmem>>, vector<16x32xbf16>,
    } else {
    }
    return
  }
  func.func @transform_0(%arg0: i32, %arg1: i32, %arg2: i32) -> (i32, i32) {
    %c0_i32 = arith.constant 0 : i32
    return %arg0, %arg2 : i32, i32
  }
  func.func @transform_1(%arg0: i32, %arg1: i32, %arg2: i32) -> (i32, i32) {
    %c0_i32 = arith.constant 0 : i32
    return %arg2, %arg1 : i32, i32
  }
  func.func @transform_2(%arg0: i32, %arg1: i32, %arg2: i32) -> (i32, i32) {
    %c0_i32 = arith.constant 0 : i32
    %c0_i32_0 = arith.constant 0 : i32
    return %c0_i32, %arg1 : i32, i32
  }
  func.func @transform_3(%arg0: i32, %arg1: i32, %arg2: i32) -> (i32, i32) {
    %c0_i32 = arith.constant 0 : i32
    return %arg0, %arg1 : i32, i32
  }
  func.func @transform_4(%arg0: i32, %arg1: i32, %arg2: i32) -> (i32, i32) {
    %c0_i32 = arith.constant 0 : i32
    %c0_i32_0 = arith.constant 0 : i32
    return %c0_i32, %arg1 : i32, i32
  }
  func.func @transform_5(%arg0: i32, %arg1: i32, %arg2: i32) -> (i32, i32) {
    %c0_i32 = arith.constant 0 : i32
    %c0_i32_0 = arith.constant 0 : i32
    return %c0_i32, %arg1 : i32, i32
  }
  func.func @transform_6(%arg0: i32, %arg1: i32, %arg2: i32) -> (i32, i32) {
    %c0_i32 = arith.constant 0 : i32
    return %arg0, %arg1 : i32, i32
  }
}

module attributes {stable_mosaic.version = 11 : i64} {
  func.func @_flash_attn_kernel(%arg0: i32, %arg1: i32, %arg2: i32, %arg3: memref<1x8x32xbf16, #tpu.memory_space<vmem>>, %arg4: memref<1x8x32xbf16, #tpu.memory_space<vmem>>, %arg5: memref<1x8x32xbf16, #tpu.memory_space<vmem>>, %arg6: memref<1x1x8xf32, #tpu.memory_space<vmem>>, %arg7: memref<1x8x32xbf16, #tpu.memory_space<vmem>>, %arg8: memref<4x8x1xf32, #tpu.memory_space<vmem>>, %arg9: memref<4x8x1xf32, #tpu.memory_space<vmem>>, %arg10: memref<8x32xf32, #tpu.memory_space<vmem>>) attributes {dimension_semantics = [#tpu.dimension_semantics<parallel>, #tpu.dimension_semantics<parallel>, #tpu.dimension_semantics<arbitrary>], iteration_bounds = array<i64: 2, 1, 1>, scalar_prefetch = 0 : i64, scratch_operands = 3 : i64, tpu.core_type = #tpu.core_type<tc>, window_params = [{transform_indices = @transform_0, window_bounds = array<i64: 1, 8, 32>}, {transform_indices = @transform_1, window_bounds = array<i64: 1, 8, 32>}, {transform_indices = @transform_2, window_bounds = array<i64: 1, 8, 32>}, {transform_indices = @transform_3, window_bounds = array<i64: 1, 1, 8>}, {transform_indices = @transform_4, window_bounds = array<i64: 1, 8, 32>}]} {
    %c0_i32 = arith.constant 0 : i32
    %0 = arith.cmpi eq, %arg2, %c0_i32 : i32
    %1 = arith.extui %0 : i1 to i32
    %c0_i32_0 = arith.constant 0 : i32
    %2 = arith.cmpi ne, %1, %c0_i32_0 : i32
    scf.if %2 {
      %cst_91 = arith.constant 0xFF800000 : f32
      %162 = vector.broadcast %cst_91 : f32 to vector<4x8x1xf32>
      %c0_92 = arith.constant 0 : index
      %c0_93 = arith.constant 0 : index
      %c0_94 = arith.constant 0 : index
      %163 = vector.load %arg8[%c0_92, %c0_93, %c0_94] : memref<4x8x1xf32, #tpu.memory_space<vmem>>, vector<4x8x1xf32>
      tpu.vector_store %arg8[%c0_92, %c0_93, %c0_94], %162 {strides = array<i32>} : memref<4x8x1xf32, #tpu.memory_space<vmem>>, vector<4x8x1xf32>,
      %cst_95 = arith.constant 0.000000e+00 : f32
      %164 = vector.broadcast %cst_95 : f32 to vector<4x8x1xf32>
      %c0_96 = arith.constant 0 : index
      %c0_97 = arith.constant 0 : index
      %c0_98 = arith.constant 0 : index
      %165 = vector.load %arg9[%c0_96, %c0_97, %c0_98] : memref<4x8x1xf32, #tpu.memory_space<vmem>>, vector<4x8x1xf32>
      tpu.vector_store %arg9[%c0_96, %c0_97, %c0_98], %164 {strides = array<i32>} : memref<4x8x1xf32, #tpu.memory_space<vmem>>, vector<4x8x1xf32>,
      %cst_99 = arith.constant 0.000000e+00 : f32
      %166 = vector.broadcast %cst_99 : f32 to vector<8x32xf32>
      %c0_100 = arith.constant 0 : index
      %c0_101 = arith.constant 0 : index
      %167 = vector.load %arg10[%c0_100, %c0_101] : memref<8x32xf32, #tpu.memory_space<vmem>>, vector<8x32xf32>
      tpu.vector_store %arg10[%c0_100, %c0_101], %166 {strides = array<i32>} : memref<8x32xf32, #tpu.memory_space<vmem>>, vector<8x32xf32>,
    } else {
    }
    %c0 = arith.constant 0 : index
    %c0_1 = arith.constant 0 : index
    %c0_2 = arith.constant 0 : index
    %3 = vector.load %arg3[%c0, %c0_1, %c0_2] : memref<1x8x32xbf16, #tpu.memory_space<vmem>>, vector<1x8x32xbf16>
    %4 = vector.shape_cast %3 : vector<1x8x32xbf16> to vector<8x32xbf16>
    %c0_3 = arith.constant 0 : index
    %c0_4 = arith.constant 0 : index
    %c0_5 = arith.constant 0 : index
    %5 = vector.load %arg4[%c0_3, %c0_4, %c0_5] : memref<1x8x32xbf16, #tpu.memory_space<vmem>>, vector<1x8x32xbf16>
    %6 = vector.shape_cast %5 : vector<1x8x32xbf16> to vector<8x32xbf16>
    %c0_6 = arith.constant 0 : index
    %c0_7 = arith.constant 0 : index
    %c0_8 = arith.constant 0 : index
    %7 = vector.load %arg5[%c0_6, %c0_7, %c0_8] : memref<1x8x32xbf16, #tpu.memory_space<vmem>>, vector<1x8x32xbf16>
    %8 = vector.shape_cast %7 : vector<1x8x32xbf16> to vector<8x32xbf16>
    %c0_9 = arith.constant 0 : index
    %c0_10 = arith.constant 0 : index
    %c0_11 = arith.constant 0 : index
    %9 = vector.load %arg6[%c0_9, %c0_10, %c0_11] : memref<1x1x8xf32, #tpu.memory_space<vmem>>, vector<1x1x8xf32>
    %10 = vector.shape_cast %9 : vector<1x1x8xf32> to vector<1x8xf32>
    %11 = vector.extract_strided_slice %4 {offsets = [0, 0], sizes = [8, 8], strides = [1, 1]} : vector<8x32xbf16> to vector<8x8xbf16>
    %12 = vector.extract_strided_slice %6 {offsets = [0, 0], sizes = [8, 8], strides = [1, 1]} : vector<8x32xbf16> to vector<8x8xbf16>
    %cst = arith.constant dense<0.000000e+00> : vector<8x8xf32>
    %13 = tpu.matmul %11, %12, %cst {dimension_numbers = #tpu.dot_dimension_numbers<[1], [1], [0], [0], [0, 0, 1, 0], [], []>} : vector<8x8xbf16>, vector<8x8xbf16>, vector<8x8xf32> -> vector<8x8xf32>
    %cst_12 = arith.constant 0.353553385 : f32
    %14 = vector.broadcast %cst_12 : f32 to vector<8x8xf32>
    %15 = arith.mulf %13, %14 : vector<8x8xf32>
    %16 = vector.broadcast %10 : vector<1x8xf32> to vector<8x8xf32>
    %17 = arith.addf %15, %16 : vector<8x8xf32>
    %c0_13 = arith.constant 0 : index
    %c0_14 = arith.constant 0 : index
    %c0_15 = arith.constant 0 : index
    %18 = vector.load %arg8[%c0_13, %c0_14, %c0_15] : memref<4x8x1xf32, #tpu.memory_space<vmem>>, vector<1x8x1xf32>
    %19 = vector.shape_cast %18 : vector<1x8x1xf32> to vector<8x1xf32>
    %cst_16 = arith.constant dense<0xFF800000> : vector<8xf32>
    %20 = vector.multi_reduction <maximumf>, %17, %cst_16 [1] : vector<8x8xf32> to vector<8xf32>
    %21 = vector.shape_cast %20 : vector<8xf32> to vector<8x1xf32>
    %22 = arith.maximumf %19, %21 : vector<8x1xf32>
    %23 = arith.subf %19, %22 : vector<8x1xf32>
    %24 = math.exp %23 : vector<8x1xf32>
    %25 = vector.broadcast %22 : vector<8x1xf32> to vector<8x8xf32>
    %26 = arith.subf %17, %25 : vector<8x8xf32>
    %27 = math.exp %26 : vector<8x8xf32>
    %c0_17 = arith.constant 0 : index
    %c0_18 = arith.constant 0 : index
    %c0_19 = arith.constant 0 : index
    %28 = vector.load %arg9[%c0_17, %c0_18, %c0_19] : memref<4x8x1xf32, #tpu.memory_space<vmem>>, vector<1x8x1xf32>
    %29 = vector.shape_cast %28 : vector<1x8x1xf32> to vector<8x1xf32>
    %30 = arith.mulf %24, %29 : vector<8x1xf32>
    %cst_20 = arith.constant dense<0.000000e+00> : vector<8xf32>
    %31 = vector.multi_reduction <add>, %27, %cst_20 [1] : vector<8x8xf32> to vector<8xf32>
    %32 = vector.shape_cast %31 : vector<8xf32> to vector<8x1xf32>
    %33 = arith.addf %30, %32 : vector<8x1xf32>
    %c0_21 = arith.constant 0 : index
    %c0_22 = arith.constant 0 : index
    %c0_23 = arith.constant 0 : index
    %34 = vector.load %arg9[%c0_21, %c0_22, %c0_23] : memref<4x8x1xf32, #tpu.memory_space<vmem>>, vector<1x8x1xf32>
    %35 = vector.shape_cast %34 : vector<1x8x1xf32> to vector<8x1xf32>
    %36 = vector.shape_cast %33 : vector<8x1xf32> to vector<1x8x1xf32>
    tpu.vector_store %arg9[%c0_21, %c0_22, %c0_23], %36 {strides = array<i32>} : memref<4x8x1xf32, #tpu.memory_space<vmem>>, vector<1x8x1xf32>,
    %c0_24 = arith.constant 0 : index
    %c0_25 = arith.constant 0 : index
    %37 = vector.load %arg10[%c0_24, %c0_25] : memref<8x32xf32, #tpu.memory_space<vmem>>, vector<8x8xf32>
    %38 = vector.broadcast %24 : vector<8x1xf32> to vector<8x8xf32>
    %39 = arith.mulf %38, %37 : vector<8x8xf32>
    %40 = arith.truncf %27 : vector<8x8xf32> to vector<8x8xbf16>
    %41 = vector.extract_strided_slice %8 {offsets = [0, 0], sizes = [8, 8], strides = [1, 1]} : vector<8x32xbf16> to vector<8x8xbf16>
    %cst_26 = arith.constant dense<0.000000e+00> : vector<8x8xf32>
    %42 = tpu.matmul %40, %41, %cst_26 {dimension_numbers = #tpu.dot_dimension_numbers<[1], [0], [0], [1], [0, 0, 1, 1], [], []>} : vector<8x8xbf16>, vector<8x8xbf16>, vector<8x8xf32> -> vector<8x8xf32>
    %43 = arith.addf %39, %42 : vector<8x8xf32>
    %c0_27 = arith.constant 0 : index
    %c0_28 = arith.constant 0 : index
    %44 = vector.load %arg10[%c0_27, %c0_28] : memref<8x32xf32, #tpu.memory_space<vmem>>, vector<8x8xf32>
    tpu.vector_store %arg10[%c0_27, %c0_28], %43 {strides = array<i32>} : memref<8x32xf32, #tpu.memory_space<vmem>>, vector<8x8xf32>,
    %c0_29 = arith.constant 0 : index
    %c0_30 = arith.constant 0 : index
    %c0_31 = arith.constant 0 : index
    %45 = vector.load %arg8[%c0_29, %c0_30, %c0_31] : memref<4x8x1xf32, #tpu.memory_space<vmem>>, vector<1x8x1xf32>
    %46 = vector.shape_cast %45 : vector<1x8x1xf32> to vector<8x1xf32>
    %47 = vector.shape_cast %22 : vector<8x1xf32> to vector<1x8x1xf32>
    tpu.vector_store %arg8[%c0_29, %c0_30, %c0_31], %47 {strides = array<i32>} : memref<4x8x1xf32, #tpu.memory_space<vmem>>, vector<1x8x1xf32>,
    %48 = vector.extract_strided_slice %4 {offsets = [0, 8], sizes = [8, 8], strides = [1, 1]} : vector<8x32xbf16> to vector<8x8xbf16>
    %49 = vector.extract_strided_slice %6 {offsets = [0, 8], sizes = [8, 8], strides = [1, 1]} : vector<8x32xbf16> to vector<8x8xbf16>
    %cst_32 = arith.constant dense<0.000000e+00> : vector<8x8xf32>
    %50 = tpu.matmul %48, %49, %cst_32 {dimension_numbers = #tpu.dot_dimension_numbers<[1], [1], [0], [0], [0, 0, 1, 0], [], []>} : vector<8x8xbf16>, vector<8x8xbf16>, vector<8x8xf32> -> vector<8x8xf32>
    %cst_33 = arith.constant 0.353553385 : f32
    %51 = vector.broadcast %cst_33 : f32 to vector<8x8xf32>
    %52 = arith.mulf %50, %51 : vector<8x8xf32>
    %53 = vector.broadcast %10 : vector<1x8xf32> to vector<8x8xf32>
    %54 = arith.addf %52, %53 : vector<8x8xf32>
    %c1 = arith.constant 1 : index
    %c0_34 = arith.constant 0 : index
    %c0_35 = arith.constant 0 : index
    %55 = vector.load %arg8[%c1, %c0_34, %c0_35] : memref<4x8x1xf32, #tpu.memory_space<vmem>>, vector<1x8x1xf32>
    %56 = vector.shape_cast %55 : vector<1x8x1xf32> to vector<8x1xf32>
    %cst_36 = arith.constant dense<0xFF800000> : vector<8xf32>
    %57 = vector.multi_reduction <maximumf>, %54, %cst_36 [1] : vector<8x8xf32> to vector<8xf32>
    %58 = vector.shape_cast %57 : vector<8xf32> to vector<8x1xf32>
    %59 = arith.maximumf %56, %58 : vector<8x1xf32>
    %60 = arith.subf %56, %59 : vector<8x1xf32>
    %61 = math.exp %60 : vector<8x1xf32>
    %62 = vector.broadcast %59 : vector<8x1xf32> to vector<8x8xf32>
    %63 = arith.subf %54, %62 : vector<8x8xf32>
    %64 = math.exp %63 : vector<8x8xf32>
    %c1_37 = arith.constant 1 : index
    %c0_38 = arith.constant 0 : index
    %c0_39 = arith.constant 0 : index
    %65 = vector.load %arg9[%c1_37, %c0_38, %c0_39] : memref<4x8x1xf32, #tpu.memory_space<vmem>>, vector<1x8x1xf32>
    %66 = vector.shape_cast %65 : vector<1x8x1xf32> to vector<8x1xf32>
    %67 = arith.mulf %61, %66 : vector<8x1xf32>
    %cst_40 = arith.constant dense<0.000000e+00> : vector<8xf32>
    %68 = vector.multi_reduction <add>, %64, %cst_40 [1] : vector<8x8xf32> to vector<8xf32>
    %69 = vector.shape_cast %68 : vector<8xf32> to vector<8x1xf32>
    %70 = arith.addf %67, %69 : vector<8x1xf32>
    %c1_41 = arith.constant 1 : index
    %c0_42 = arith.constant 0 : index
    %c0_43 = arith.constant 0 : index
    %71 = vector.load %arg9[%c1_41, %c0_42, %c0_43] : memref<4x8x1xf32, #tpu.memory_space<vmem>>, vector<1x8x1xf32>
    %72 = vector.shape_cast %71 : vector<1x8x1xf32> to vector<8x1xf32>
    %73 = vector.shape_cast %70 : vector<8x1xf32> to vector<1x8x1xf32>
    tpu.vector_store %arg9[%c1_41, %c0_42, %c0_43], %73 {strides = array<i32>} : memref<4x8x1xf32, #tpu.memory_space<vmem>>, vector<1x8x1xf32>,
    %c0_44 = arith.constant 0 : index
    %c8 = arith.constant 8 : index
    %74 = vector.load %arg10[%c0_44, %c8] : memref<8x32xf32, #tpu.memory_space<vmem>>, vector<8x8xf32>
    %75 = vector.broadcast %61 : vector<8x1xf32> to vector<8x8xf32>
    %76 = arith.mulf %75, %74 : vector<8x8xf32>
    %77 = arith.truncf %64 : vector<8x8xf32> to vector<8x8xbf16>
    %78 = vector.extract_strided_slice %8 {offsets = [0, 8], sizes = [8, 8], strides = [1, 1]} : vector<8x32xbf16> to vector<8x8xbf16>
    %cst_45 = arith.constant dense<0.000000e+00> : vector<8x8xf32>
    %79 = tpu.matmul %77, %78, %cst_45 {dimension_numbers = #tpu.dot_dimension_numbers<[1], [0], [0], [1], [0, 0, 1, 1], [], []>} : vector<8x8xbf16>, vector<8x8xbf16>, vector<8x8xf32> -> vector<8x8xf32>
    %80 = arith.addf %76, %79 : vector<8x8xf32>
    %c0_46 = arith.constant 0 : index
    %c8_47 = arith.constant 8 : index
    %81 = vector.load %arg10[%c0_46, %c8_47] : memref<8x32xf32, #tpu.memory_space<vmem>>, vector<8x8xf32>
    tpu.vector_store %arg10[%c0_46, %c8_47], %80 {strides = array<i32>} : memref<8x32xf32, #tpu.memory_space<vmem>>, vector<8x8xf32>,
    %c1_48 = arith.constant 1 : index
    %c0_49 = arith.constant 0 : index
    %c0_50 = arith.constant 0 : index
    %82 = vector.load %arg8[%c1_48, %c0_49, %c0_50] : memref<4x8x1xf32, #tpu.memory_space<vmem>>, vector<1x8x1xf32>
    %83 = vector.shape_cast %82 : vector<1x8x1xf32> to vector<8x1xf32>
    %84 = vector.shape_cast %59 : vector<8x1xf32> to vector<1x8x1xf32>
    tpu.vector_store %arg8[%c1_48, %c0_49, %c0_50], %84 {strides = array<i32>} : memref<4x8x1xf32, #tpu.memory_space<vmem>>, vector<1x8x1xf32>,
    %85 = vector.extract_strided_slice %4 {offsets = [0, 16], sizes = [8, 8], strides = [1, 1]} : vector<8x32xbf16> to vector<8x8xbf16>
    %86 = vector.extract_strided_slice %6 {offsets = [0, 16], sizes = [8, 8], strides = [1, 1]} : vector<8x32xbf16> to vector<8x8xbf16>
    %cst_51 = arith.constant dense<0.000000e+00> : vector<8x8xf32>
    %87 = tpu.matmul %85, %86, %cst_51 {dimension_numbers = #tpu.dot_dimension_numbers<[1], [1], [0], [0], [0, 0, 1, 0], [], []>} : vector<8x8xbf16>, vector<8x8xbf16>, vector<8x8xf32> -> vector<8x8xf32>
    %cst_52 = arith.constant 0.353553385 : f32
    %88 = vector.broadcast %cst_52 : f32 to vector<8x8xf32>
    %89 = arith.mulf %87, %88 : vector<8x8xf32>
    %90 = vector.broadcast %10 : vector<1x8xf32> to vector<8x8xf32>
    %91 = arith.addf %89, %90 : vector<8x8xf32>
    %c2 = arith.constant 2 : index
    %c0_53 = arith.constant 0 : index
    %c0_54 = arith.constant 0 : index
    %92 = vector.load %arg8[%c2, %c0_53, %c0_54] : memref<4x8x1xf32, #tpu.memory_space<vmem>>, vector<1x8x1xf32>
    %93 = vector.shape_cast %92 : vector<1x8x1xf32> to vector<8x1xf32>
    %cst_55 = arith.constant dense<0xFF800000> : vector<8xf32>
    %94 = vector.multi_reduction <maximumf>, %91, %cst_55 [1] : vector<8x8xf32> to vector<8xf32>
    %95 = vector.shape_cast %94 : vector<8xf32> to vector<8x1xf32>
    %96 = arith.maximumf %93, %95 : vector<8x1xf32>
    %97 = arith.subf %93, %96 : vector<8x1xf32>
    %98 = math.exp %97 : vector<8x1xf32>
    %99 = vector.broadcast %96 : vector<8x1xf32> to vector<8x8xf32>
    %100 = arith.subf %91, %99 : vector<8x8xf32>
    %101 = math.exp %100 : vector<8x8xf32>
    %c2_56 = arith.constant 2 : index
    %c0_57 = arith.constant 0 : index
    %c0_58 = arith.constant 0 : index
    %102 = vector.load %arg9[%c2_56, %c0_57, %c0_58] : memref<4x8x1xf32, #tpu.memory_space<vmem>>, vector<1x8x1xf32>
    %103 = vector.shape_cast %102 : vector<1x8x1xf32> to vector<8x1xf32>
    %104 = arith.mulf %98, %103 : vector<8x1xf32>
    %cst_59 = arith.constant dense<0.000000e+00> : vector<8xf32>
    %105 = vector.multi_reduction <add>, %101, %cst_59 [1] : vector<8x8xf32> to vector<8xf32>
    %106 = vector.shape_cast %105 : vector<8xf32> to vector<8x1xf32>
    %107 = arith.addf %104, %106 : vector<8x1xf32>
    %c2_60 = arith.constant 2 : index
    %c0_61 = arith.constant 0 : index
    %c0_62 = arith.constant 0 : index
    %108 = vector.load %arg9[%c2_60, %c0_61, %c0_62] : memref<4x8x1xf32, #tpu.memory_space<vmem>>, vector<1x8x1xf32>
    %109 = vector.shape_cast %108 : vector<1x8x1xf32> to vector<8x1xf32>
    %110 = vector.shape_cast %107 : vector<8x1xf32> to vector<1x8x1xf32>
    tpu.vector_store %arg9[%c2_60, %c0_61, %c0_62], %110 {strides = array<i32>} : memref<4x8x1xf32, #tpu.memory_space<vmem>>, vector<1x8x1xf32>,
    %c0_63 = arith.constant 0 : index
    %c16 = arith.constant 16 : index
    %111 = vector.load %arg10[%c0_63, %c16] : memref<8x32xf32, #tpu.memory_space<vmem>>, vector<8x8xf32>
    %112 = vector.broadcast %98 : vector<8x1xf32> to vector<8x8xf32>
    %113 = arith.mulf %112, %111 : vector<8x8xf32>
    %114 = arith.truncf %101 : vector<8x8xf32> to vector<8x8xbf16>
    %115 = vector.extract_strided_slice %8 {offsets = [0, 16], sizes = [8, 8], strides = [1, 1]} : vector<8x32xbf16> to vector<8x8xbf16>
    %cst_64 = arith.constant dense<0.000000e+00> : vector<8x8xf32>
    %116 = tpu.matmul %114, %115, %cst_64 {dimension_numbers = #tpu.dot_dimension_numbers<[1], [0], [0], [1], [0, 0, 1, 1], [], []>} : vector<8x8xbf16>, vector<8x8xbf16>, vector<8x8xf32> -> vector<8x8xf32>
    %117 = arith.addf %113, %116 : vector<8x8xf32>
    %c0_65 = arith.constant 0 : index
    %c16_66 = arith.constant 16 : index
    %118 = vector.load %arg10[%c0_65, %c16_66] : memref<8x32xf32, #tpu.memory_space<vmem>>, vector<8x8xf32>
    tpu.vector_store %arg10[%c0_65, %c16_66], %117 {strides = array<i32>} : memref<8x32xf32, #tpu.memory_space<vmem>>, vector<8x8xf32>,
    %c2_67 = arith.constant 2 : index
    %c0_68 = arith.constant 0 : index
    %c0_69 = arith.constant 0 : index
    %119 = vector.load %arg8[%c2_67, %c0_68, %c0_69] : memref<4x8x1xf32, #tpu.memory_space<vmem>>, vector<1x8x1xf32>
    %120 = vector.shape_cast %119 : vector<1x8x1xf32> to vector<8x1xf32>
    %121 = vector.shape_cast %96 : vector<8x1xf32> to vector<1x8x1xf32>
    tpu.vector_store %arg8[%c2_67, %c0_68, %c0_69], %121 {strides = array<i32>} : memref<4x8x1xf32, #tpu.memory_space<vmem>>, vector<1x8x1xf32>,
    %122 = vector.extract_strided_slice %4 {offsets = [0, 24], sizes = [8, 8], strides = [1, 1]} : vector<8x32xbf16> to vector<8x8xbf16>
    %123 = vector.extract_strided_slice %6 {offsets = [0, 24], sizes = [8, 8], strides = [1, 1]} : vector<8x32xbf16> to vector<8x8xbf16>
    %cst_70 = arith.constant dense<0.000000e+00> : vector<8x8xf32>
    %124 = tpu.matmul %122, %123, %cst_70 {dimension_numbers = #tpu.dot_dimension_numbers<[1], [1], [0], [0], [0, 0, 1, 0], [], []>} : vector<8x8xbf16>, vector<8x8xbf16>, vector<8x8xf32> -> vector<8x8xf32>
    %cst_71 = arith.constant 0.353553385 : f32
    %125 = vector.broadcast %cst_71 : f32 to vector<8x8xf32>
    %126 = arith.mulf %124, %125 : vector<8x8xf32>
    %127 = vector.broadcast %10 : vector<1x8xf32> to vector<8x8xf32>
    %128 = arith.addf %126, %127 : vector<8x8xf32>
    %c3 = arith.constant 3 : index
    %c0_72 = arith.constant 0 : index
    %c0_73 = arith.constant 0 : index
    %129 = vector.load %arg8[%c3, %c0_72, %c0_73] : memref<4x8x1xf32, #tpu.memory_space<vmem>>, vector<1x8x1xf32>
    %130 = vector.shape_cast %129 : vector<1x8x1xf32> to vector<8x1xf32>
    %cst_74 = arith.constant dense<0xFF800000> : vector<8xf32>
    %131 = vector.multi_reduction <maximumf>, %128, %cst_74 [1] : vector<8x8xf32> to vector<8xf32>
    %132 = vector.shape_cast %131 : vector<8xf32> to vector<8x1xf32>
    %133 = arith.maximumf %130, %132 : vector<8x1xf32>
    %134 = arith.subf %130, %133 : vector<8x1xf32>
    %135 = math.exp %134 : vector<8x1xf32>
    %136 = vector.broadcast %133 : vector<8x1xf32> to vector<8x8xf32>
    %137 = arith.subf %128, %136 : vector<8x8xf32>
    %138 = math.exp %137 : vector<8x8xf32>
    %c3_75 = arith.constant 3 : index
    %c0_76 = arith.constant 0 : index
    %c0_77 = arith.constant 0 : index
    %139 = vector.load %arg9[%c3_75, %c0_76, %c0_77] : memref<4x8x1xf32, #tpu.memory_space<vmem>>, vector<1x8x1xf32>
    %140 = vector.shape_cast %139 : vector<1x8x1xf32> to vector<8x1xf32>
    %141 = arith.mulf %135, %140 : vector<8x1xf32>
    %cst_78 = arith.constant dense<0.000000e+00> : vector<8xf32>
    %142 = vector.multi_reduction <add>, %138, %cst_78 [1] : vector<8x8xf32> to vector<8xf32>
    %143 = vector.shape_cast %142 : vector<8xf32> to vector<8x1xf32>
    %144 = arith.addf %141, %143 : vector<8x1xf32>
    %c3_79 = arith.constant 3 : index
    %c0_80 = arith.constant 0 : index
    %c0_81 = arith.constant 0 : index
    %145 = vector.load %arg9[%c3_79, %c0_80, %c0_81] : memref<4x8x1xf32, #tpu.memory_space<vmem>>, vector<1x8x1xf32>
    %146 = vector.shape_cast %145 : vector<1x8x1xf32> to vector<8x1xf32>
    %147 = vector.shape_cast %144 : vector<8x1xf32> to vector<1x8x1xf32>
    tpu.vector_store %arg9[%c3_79, %c0_80, %c0_81], %147 {strides = array<i32>} : memref<4x8x1xf32, #tpu.memory_space<vmem>>, vector<1x8x1xf32>,
    %c0_82 = arith.constant 0 : index
    %c24 = arith.constant 24 : index
    %148 = vector.load %arg10[%c0_82, %c24] : memref<8x32xf32, #tpu.memory_space<vmem>>, vector<8x8xf32>
    %149 = vector.broadcast %135 : vector<8x1xf32> to vector<8x8xf32>
    %150 = arith.mulf %149, %148 : vector<8x8xf32>
    %151 = arith.truncf %138 : vector<8x8xf32> to vector<8x8xbf16>
    %152 = vector.extract_strided_slice %8 {offsets = [0, 24], sizes = [8, 8], strides = [1, 1]} : vector<8x32xbf16> to vector<8x8xbf16>
    %cst_83 = arith.constant dense<0.000000e+00> : vector<8x8xf32>
    %153 = tpu.matmul %151, %152, %cst_83 {dimension_numbers = #tpu.dot_dimension_numbers<[1], [0], [0], [1], [0, 0, 1, 1], [], []>} : vector<8x8xbf16>, vector<8x8xbf16>, vector<8x8xf32> -> vector<8x8xf32>
    %154 = arith.addf %150, %153 : vector<8x8xf32>
    %c0_84 = arith.constant 0 : index
    %c24_85 = arith.constant 24 : index
    %155 = vector.load %arg10[%c0_84, %c24_85] : memref<8x32xf32, #tpu.memory_space<vmem>>, vector<8x8xf32>
    tpu.vector_store %arg10[%c0_84, %c24_85], %154 {strides = array<i32>} : memref<8x32xf32, #tpu.memory_space<vmem>>, vector<8x8xf32>,
    %c3_86 = arith.constant 3 : index
    %c0_87 = arith.constant 0 : index
    %c0_88 = arith.constant 0 : index
    %156 = vector.load %arg8[%c3_86, %c0_87, %c0_88] : memref<4x8x1xf32, #tpu.memory_space<vmem>>, vector<1x8x1xf32>
    %157 = vector.shape_cast %156 : vector<1x8x1xf32> to vector<8x1xf32>
    %158 = vector.shape_cast %133 : vector<8x1xf32> to vector<1x8x1xf32>
    tpu.vector_store %arg8[%c3_86, %c0_87, %c0_88], %158 {strides = array<i32>} : memref<4x8x1xf32, #tpu.memory_space<vmem>>, vector<1x8x1xf32>,
    %c0_i32_89 = arith.constant 0 : i32
    %159 = arith.cmpi eq, %arg2, %c0_i32_89 : i32
    %160 = arith.extui %159 : i1 to i32
    %c0_i32_90 = arith.constant 0 : i32
    %161 = arith.cmpi ne, %160, %c0_i32_90 : i32
    scf.if %161 {
      %c0_91 = arith.constant 0 : index
      %c0_92 = arith.constant 0 : index
      %162 = vector.load %arg10[%c0_91, %c0_92] : memref<8x32xf32, #tpu.memory_space<vmem>>, vector<8x8xf32>
      %c0_93 = arith.constant 0 : index
      %c0_94 = arith.constant 0 : index
      %c0_95 = arith.constant 0 : index
      %163 = vector.load %arg9[%c0_93, %c0_94, %c0_95] : memref<4x8x1xf32, #tpu.memory_space<vmem>>, vector<1x8x1xf32>
      %164 = vector.shape_cast %163 : vector<1x8x1xf32> to vector<8x1xf32>
      %165 = tpu.reciprocal %164 {approx = true} : vector<8x1xf32> -> vector<8x1xf32>
      %166 = vector.broadcast %165 : vector<8x1xf32> to vector<8x8xf32>
      %167 = arith.mulf %162, %166 : vector<8x8xf32>
      %c0_96 = arith.constant 0 : index
      %c0_97 = arith.constant 0 : index
      %168 = vector.load %arg10[%c0_96, %c0_97] : memref<8x32xf32, #tpu.memory_space<vmem>>, vector<8x8xf32>
      tpu.vector_store %arg10[%c0_96, %c0_97], %167 {strides = array<i32>} : memref<8x32xf32, #tpu.memory_space<vmem>>, vector<8x8xf32>,
      %c0_98 = arith.constant 0 : index
      %c8_99 = arith.constant 8 : index
      %169 = vector.load %arg10[%c0_98, %c8_99] : memref<8x32xf32, #tpu.memory_space<vmem>>, vector<8x8xf32>
      %c1_100 = arith.constant 1 : index
      %c0_101 = arith.constant 0 : index
      %c0_102 = arith.constant 0 : index
      %170 = vector.load %arg9[%c1_100, %c0_101, %c0_102] : memref<4x8x1xf32, #tpu.memory_space<vmem>>, vector<1x8x1xf32>
      %171 = vector.shape_cast %170 : vector<1x8x1xf32> to vector<8x1xf32>
      %172 = tpu.reciprocal %171 {approx = true} : vector<8x1xf32> -> vector<8x1xf32>
      %173 = vector.broadcast %172 : vector<8x1xf32> to vector<8x8xf32>
      %174 = arith.mulf %169, %173 : vector<8x8xf32>
      %c0_103 = arith.constant 0 : index
      %c8_104 = arith.constant 8 : index
      %175 = vector.load %arg10[%c0_103, %c8_104] : memref<8x32xf32, #tpu.memory_space<vmem>>, vector<8x8xf32>
      tpu.vector_store %arg10[%c0_103, %c8_104], %174 {strides = array<i32>} : memref<8x32xf32, #tpu.memory_space<vmem>>, vector<8x8xf32>,
      %c0_105 = arith.constant 0 : index
      %c16_106 = arith.constant 16 : index
      %176 = vector.load %arg10[%c0_105, %c16_106] : memref<8x32xf32, #tpu.memory_space<vmem>>, vector<8x8xf32>
      %c2_107 = arith.constant 2 : index
      %c0_108 = arith.constant 0 : index
      %c0_109 = arith.constant 0 : index
      %177 = vector.load %arg9[%c2_107, %c0_108, %c0_109] : memref<4x8x1xf32, #tpu.memory_space<vmem>>, vector<1x8x1xf32>
      %178 = vector.shape_cast %177 : vector<1x8x1xf32> to vector<8x1xf32>
      %179 = tpu.reciprocal %178 {approx = true} : vector<8x1xf32> -> vector<8x1xf32>
      %180 = vector.broadcast %179 : vector<8x1xf32> to vector<8x8xf32>
      %181 = arith.mulf %176, %180 : vector<8x8xf32>
      %c0_110 = arith.constant 0 : index
      %c16_111 = arith.constant 16 : index
      %182 = vector.load %arg10[%c0_110, %c16_111] : memref<8x32xf32, #tpu.memory_space<vmem>>, vector<8x8xf32>
      tpu.vector_store %arg10[%c0_110, %c16_111], %181 {strides = array<i32>} : memref<8x32xf32, #tpu.memory_space<vmem>>, vector<8x8xf32>,
      %c0_112 = arith.constant 0 : index
      %c24_113 = arith.constant 24 : index
      %183 = vector.load %arg10[%c0_112, %c24_113] : memref<8x32xf32, #tpu.memory_space<vmem>>, vector<8x8xf32>
      %c3_114 = arith.constant 3 : index
      %c0_115 = arith.constant 0 : index
      %c0_116 = arith.constant 0 : index
      %184 = vector.load %arg9[%c3_114, %c0_115, %c0_116] : memref<4x8x1xf32, #tpu.memory_space<vmem>>, vector<1x8x1xf32>
      %185 = vector.shape_cast %184 : vector<1x8x1xf32> to vector<8x1xf32>
      %186 = tpu.reciprocal %185 {approx = true} : vector<8x1xf32> -> vector<8x1xf32>
      %187 = vector.broadcast %186 : vector<8x1xf32> to vector<8x8xf32>
      %188 = arith.mulf %183, %187 : vector<8x8xf32>
      %c0_117 = arith.constant 0 : index
      %c24_118 = arith.constant 24 : index
      %189 = vector.load %arg10[%c0_117, %c24_118] : memref<8x32xf32, #tpu.memory_space<vmem>>, vector<8x8xf32>
      tpu.vector_store %arg10[%c0_117, %c24_118], %188 {strides = array<i32>} : memref<8x32xf32, #tpu.memory_space<vmem>>, vector<8x8xf32>,
      %c0_119 = arith.constant 0 : index
      %c0_120 = arith.constant 0 : index
      %190 = vector.load %arg10[%c0_119, %c0_120] : memref<8x32xf32, #tpu.memory_space<vmem>>, vector<8x32xf32>
      %191 = arith.truncf %190 : vector<8x32xf32> to vector<8x32xbf16>
      %c0_121 = arith.constant 0 : index
      %c0_122 = arith.constant 0 : index
      %c0_123 = arith.constant 0 : index
      %192 = vector.load %arg7[%c0_121, %c0_122, %c0_123] : memref<1x8x32xbf16, #tpu.memory_space<vmem>>, vector<1x8x32xbf16>
      %193 = vector.shape_cast %192 : vector<1x8x32xbf16> to vector<8x32xbf16>
      %194 = vector.shape_cast %191 : vector<8x32xbf16> to vector<1x8x32xbf16>
      tpu.vector_store %arg7[%c0_121, %c0_122, %c0_123], %194 {strides = array<i32>} : memref<1x8x32xbf16, #tpu.memory_space<vmem>>, vector<1x8x32xbf16>,
    } else {
    }
    return
  }
  func.func @transform_0(%arg0: i32, %arg1: i32, %arg2: i32) -> (i32, i32, i32) {
    %c0_i32 = arith.constant 0 : i32
    %c0_i32_0 = arith.constant 0 : i32
    return %arg0, %arg1, %c0_i32 : i32, i32, i32
  }
  func.func @transform_1(%arg0: i32, %arg1: i32, %arg2: i32) -> (i32, i32, i32) {
    %c0_i32 = arith.constant 0 : i32
    %c0_i32_0 = arith.constant 0 : i32
    return %arg0, %arg2, %c0_i32 : i32, i32, i32
  }
  func.func @transform_2(%arg0: i32, %arg1: i32, %arg2: i32) -> (i32, i32, i32) {
    %c0_i32 = arith.constant 0 : i32
    %c0_i32_0 = arith.constant 0 : i32
    return %arg0, %arg2, %c0_i32 : i32, i32, i32
  }
  func.func @transform_3(%arg0: i32, %arg1: i32, %arg2: i32) -> (i32, i32, i32) {
    %c0_i32 = arith.constant 0 : i32
    %c0_i32_0 = arith.constant 0 : i32
    return %arg0, %c0_i32, %arg2 : i32, i32, i32
  }
  func.func @transform_4(%arg0: i32, %arg1: i32, %arg2: i32) -> (i32, i32, i32) {
    %c0_i32 = arith.constant 0 : i32
    %c0_i32_0 = arith.constant 0 : i32
    return %arg0, %arg1, %c0_i32 : i32, i32, i32
  }
}

module attributes {stable_mosaic.version = 11 : i64} {
  func.func @_linear_kernel(%arg0: i32, %arg1: i32, %arg2: i32, %arg3: memref<16x32xbf16, #tpu.memory_space<vmem>>, %arg4: memref<32x128xbf16, #tpu.memory_space<vmem>>, %arg5: memref<1x128xf32, #tpu.memory_space<vmem>>, %arg6: memref<16x128xbf16, #tpu.memory_space<vmem>>, %arg7: memref<16x128xf32, #tpu.memory_space<vmem>>) attributes {dimension_semantics = [#tpu.dimension_semantics<parallel>, #tpu.dimension_semantics<parallel>, #tpu.dimension_semantics<arbitrary>], iteration_bounds = array<i64: 1, 1, 1>, scalar_prefetch = 0 : i64, scratch_operands = 1 : i64, tpu.core_type = #tpu.core_type<tc>, window_params = [{transform_indices = @transform_0, window_bounds = array<i64: 16, 32>}, {transform_indices = @transform_1, window_bounds = array<i64: 32, 128>}, {transform_indices = @transform_2, window_bounds = array<i64: 1, 128>}, {transform_indices = @transform_3, window_bounds = array<i64: 16, 128>}]} {
    %c0_i32 = arith.constant 0 : i32
    %0 = arith.cmpi eq, %arg2, %c0_i32 : i32
    %1 = arith.extui %0 : i1 to i32
    %c0_i32_0 = arith.constant 0 : i32
    %2 = arith.cmpi ne, %1, %c0_i32_0 : i32
    scf.if %2 {
      %cst_10 = arith.constant 0.000000e+00 : f32
      %12 = vector.broadcast %cst_10 : f32 to vector<16x128xf32>
      %c0_11 = arith.constant 0 : index
      %c0_12 = arith.constant 0 : index
      %13 = vector.load %arg7[%c0_11, %c0_12] : memref<16x128xf32, #tpu.memory_space<vmem>>, vector<16x128xf32>
      tpu.vector_store %arg7[%c0_11, %c0_12], %12 {strides = array<i32>} : memref<16x128xf32, #tpu.memory_space<vmem>>, vector<16x128xf32>,
    } else {
    }
    %c0 = arith.constant 0 : index
    %c0_1 = arith.constant 0 : index
    %3 = vector.load %arg7[%c0, %c0_1] : memref<16x128xf32, #tpu.memory_space<vmem>>, vector<16x128xf32>
    %c0_2 = arith.constant 0 : index
    %c0_3 = arith.constant 0 : index
    %4 = vector.load %arg3[%c0_2, %c0_3] : memref<16x32xbf16, #tpu.memory_space<vmem>>, vector<16x32xbf16>
    %c0_4 = arith.constant 0 : index
    %c0_5 = arith.constant 0 : index
    %5 = vector.load %arg4[%c0_4, %c0_5] : memref<32x128xbf16, #tpu.memory_space<vmem>>, vector<32x128xbf16>
    %cst = arith.constant dense<0.000000e+00> : vector<16x128xf32>
    %6 = tpu.matmul %4, %5, %cst {dimension_numbers = #tpu.dot_dimension_numbers<[1], [0], [0], [1], [0, 0, 1, 1], [], []>} : vector<16x32xbf16>, vector<32x128xbf16>, vector<16x128xf32> -> vector<16x128xf32>
    %7 = arith.addf %3, %6 : vector<16x128xf32>
    %c0_6 = arith.constant 0 : index
    %c0_7 = arith.constant 0 : index
    %8 = vector.load %arg7[%c0_6, %c0_7] : memref<16x128xf32, #tpu.memory_space<vmem>>, vector<16x128xf32>
    tpu.vector_store %arg7[%c0_6, %c0_7], %7 {strides = array<i32>} : memref<16x128xf32, #tpu.memory_space<vmem>>, vector<16x128xf32>,
    %c0_i32_8 = arith.constant 0 : i32
    %9 = arith.cmpi eq, %arg2, %c0_i32_8 : i32
    %10 = arith.extui %9 : i1 to i32
    %c0_i32_9 = arith.constant 0 : i32
    %11 = arith.cmpi ne, %10, %c0_i32_9 : i32
    scf.if %11 {
      %c0_10 = arith.constant 0 : index
      %c0_11 = arith.constant 0 : index
      %12 = vector.load %arg7[%c0_10, %c0_11] : memref<16x128xf32, #tpu.memory_space<vmem>>, vector<16x128xf32>
      %c0_12 = arith.constant 0 : index
      %c0_13 = arith.constant 0 : index
      %13 = vector.load %arg5[%c0_12, %c0_13] : memref<1x128xf32, #tpu.memory_space<vmem>>, vector<1x128xf32>
      %14 = vector.broadcast %13 : vector<1x128xf32> to vector<16x128xf32>
      %15 = arith.addf %12, %14 : vector<16x128xf32>
      %16 = arith.mulf %15, %15 : vector<16x128xf32>
      %17 = arith.mulf %15, %16 : vector<16x128xf32>
      %cst_14 = arith.constant 4.471500e-02 : f32
      %18 = vector.broadcast %cst_14 : f32 to vector<16x128xf32>
      %19 = arith.mulf %18, %17 : vector<16x128xf32>
      %20 = arith.addf %15, %19 : vector<16x128xf32>
      %cst_15 = arith.constant 0.797884583 : f32
      %21 = vector.broadcast %cst_15 : f32 to vector<16x128xf32>
      %22 = arith.mulf %21, %20 : vector<16x128xf32>
      %23 = math.tanh %22 : vector<16x128xf32>
      %cst_16 = arith.constant 1.000000e+00 : f32
      %24 = vector.broadcast %cst_16 : f32 to vector<16x128xf32>
      %25 = arith.addf %24, %23 : vector<16x128xf32>
      %cst_17 = arith.constant 5.000000e-01 : f32
      %26 = vector.broadcast %cst_17 : f32 to vector<16x128xf32>
      %27 = arith.mulf %26, %25 : vector<16x128xf32>
      %28 = arith.mulf %15, %27 : vector<16x128xf32>
      %29 = arith.truncf %28 : vector<16x128xf32> to vector<16x128xbf16>
      %c0_18 = arith.constant 0 : index
      %c0_19 = arith.constant 0 : index
      %30 = vector.load %arg6[%c0_18, %c0_19] : memref<16x128xbf16, #tpu.memory_space<vmem>>, vector<16x128xbf16>
      tpu.vector_store %arg6[%c0_18, %c0_19], %29 {strides = array<i32>} : memref<16x128xbf16, #tpu.memory_space<vmem>>, vector<16x128xbf16>,
    } else {
    }
    return
  }
  func.func @transform_0(%arg0: i32, %arg1: i32, %arg2: i32) -> (i32, i32) {
    %c0_i32 = arith.constant 0 : i32
    return %arg0, %arg2 : i32, i32
  }
  func.func @transform_1(%arg0: i32, %arg1: i32, %arg2: i32) -> (i32, i32) {
    %c0_i32 = arith.constant 0 : i32
    return %arg2, %arg1 : i32, i32
  }
  func.func @transform_2(%arg0: i32, %arg1: i32, %arg2: i32) -> (i32, i32) {
    %c0_i32 = arith.constant 0 : i32
    %c0_i32_0 = arith.constant 0 : i32
    return %c0_i32, %arg1 : i32, i32
  }
  func.func @transform_3(%arg0: i32, %arg1: i32, %arg2: i32) -> (i32, i32) {
    %c0_i32 = arith.constant 0 : i32
    return %arg0, %arg1 : i32, i32
  }
}

module attributes {stable_mosaic.version = 11 : i64} {
  func.func @_linear_kernel(%arg0: i32, %arg1: i32, %arg2: i32, %arg3: memref<16x128xbf16, #tpu.memory_space<vmem>>, %arg4: memref<128x32xbf16, #tpu.memory_space<vmem>>, %arg5: memref<1x32xf32, #tpu.memory_space<vmem>>, %arg6: memref<16x32xbf16, #tpu.memory_space<vmem>>, %arg7: memref<1x32xf32, #tpu.memory_space<vmem>>, %arg8: memref<1x32xf32, #tpu.memory_space<vmem>>, %arg9: memref<16x32xbf16, #tpu.memory_space<vmem>>, %arg10: memref<16x32xf32, #tpu.memory_space<vmem>>) attributes {dimension_semantics = [#tpu.dimension_semantics<parallel>, #tpu.dimension_semantics<parallel>, #tpu.dimension_semantics<arbitrary>], iteration_bounds = array<i64: 1, 1, 1>, scalar_prefetch = 0 : i64, scratch_operands = 1 : i64, tpu.core_type = #tpu.core_type<tc>, window_params = [{transform_indices = @transform_0, window_bounds = array<i64: 16, 128>}, {transform_indices = @transform_1, window_bounds = array<i64: 128, 32>}, {transform_indices = @transform_2, window_bounds = array<i64: 1, 32>}, {transform_indices = @transform_3, window_bounds = array<i64: 16, 32>}, {transform_indices = @transform_4, window_bounds = array<i64: 1, 32>}, {transform_indices = @transform_5, window_bounds = array<i64: 1, 32>}, {transform_indices = @transform_6, window_bounds = array<i64: 16, 32>}]} {
    %c0_i32 = arith.constant 0 : i32
    %0 = arith.cmpi eq, %arg2, %c0_i32 : i32
    %1 = arith.extui %0 : i1 to i32
    %c0_i32_0 = arith.constant 0 : i32
    %2 = arith.cmpi ne, %1, %c0_i32_0 : i32
    scf.if %2 {
      %cst_10 = arith.constant 0.000000e+00 : f32
      %12 = vector.broadcast %cst_10 : f32 to vector<16x32xf32>
      %c0_11 = arith.constant 0 : index
      %c0_12 = arith.constant 0 : index
      %13 = vector.load %arg10[%c0_11, %c0_12] : memref<16x32xf32, #tpu.memory_space<vmem>>, vector<16x32xf32>
      tpu.vector_store %arg10[%c0_11, %c0_12], %12 {strides = array<i32>} : memref<16x32xf32, #tpu.memory_space<vmem>>, vector<16x32xf32>,
    } else {
    }
    %c0 = arith.constant 0 : index
    %c0_1 = arith.constant 0 : index
    %3 = vector.load %arg10[%c0, %c0_1] : memref<16x32xf32, #tpu.memory_space<vmem>>, vector<16x32xf32>
    %c0_2 = arith.constant 0 : index
    %c0_3 = arith.constant 0 : index
    %4 = vector.load %arg3[%c0_2, %c0_3] : memref<16x128xbf16, #tpu.memory_space<vmem>>, vector<16x128xbf16>
    %c0_4 = arith.constant 0 : index
    %c0_5 = arith.constant 0 : index
    %5 = vector.load %arg4[%c0_4, %c0_5] : memref<128x32xbf16, #tpu.memory_space<vmem>>, vector<128x32xbf16>
    %cst = arith.constant dense<0.000000e+00> : vector<16x32xf32>
    %6 = tpu.matmul %4, %5, %cst {dimension_numbers = #tpu.dot_dimension_numbers<[1], [0], [0], [1], [0, 0, 1, 1], [], []>} : vector<16x128xbf16>, vector<128x32xbf16>, vector<16x32xf32> -> vector<16x32xf32>
    %7 = arith.addf %3, %6 : vector<16x32xf32>
    %c0_6 = arith.constant 0 : index
    %c0_7 = arith.constant 0 : index
    %8 = vector.load %arg10[%c0_6, %c0_7] : memref<16x32xf32, #tpu.memory_space<vmem>>, vector<16x32xf32>
    tpu.vector_store %arg10[%c0_6, %c0_7], %7 {strides = array<i32>} : memref<16x32xf32, #tpu.memory_space<vmem>>, vector<16x32xf32>,
    %c0_i32_8 = arith.constant 0 : i32
    %9 = arith.cmpi eq, %arg2, %c0_i32_8 : i32
    %10 = arith.extui %9 : i1 to i32
    %c0_i32_9 = arith.constant 0 : i32
    %11 = arith.cmpi ne, %10, %c0_i32_9 : i32
    scf.if %11 {
      %c0_10 = arith.constant 0 : index
      %c0_11 = arith.constant 0 : index
      %12 = vector.load %arg10[%c0_10, %c0_11] : memref<16x32xf32, #tpu.memory_space<vmem>>, vector<16x32xf32>
      %c0_12 = arith.constant 0 : index
      %c0_13 = arith.constant 0 : index
      %13 = vector.load %arg5[%c0_12, %c0_13] : memref<1x32xf32, #tpu.memory_space<vmem>>, vector<1x32xf32>
      %14 = vector.broadcast %13 : vector<1x32xf32> to vector<16x32xf32>
      %15 = arith.addf %12, %14 : vector<16x32xf32>
      %c0_14 = arith.constant 0 : index
      %c0_15 = arith.constant 0 : index
      %16 = vector.load %arg6[%c0_14, %c0_15] : memref<16x32xbf16, #tpu.memory_space<vmem>>, vector<16x32xbf16>
      %17 = arith.extf %16 : vector<16x32xbf16> to vector<16x32xf32>
      %18 = arith.addf %15, %17 : vector<16x32xf32>
      %cst_16 = arith.constant dense<0.000000e+00> : vector<16xf32>
      %19 = vector.multi_reduction <add>, %18, %cst_16 [1] : vector<16x32xf32> to vector<16xf32>
      %20 = vector.shape_cast %19 : vector<16xf32> to vector<16x1xf32>
      %cst_17 = arith.constant 3.200000e+01 : f32
      %21 = vector.broadcast %cst_17 : f32 to vector<16x1xf32>
      %22 = arith.divf %20, %21 : vector<16x1xf32>
      %23 = vector.broadcast %22 : vector<16x1xf32> to vector<16x32xf32>
      %24 = arith.subf %18, %23 : vector<16x32xf32>
      %25 = arith.mulf %24, %24 : vector<16x32xf32>
      %cst_18 = arith.constant dense<0.000000e+00> : vector<16xf32>
      %26 = vector.multi_reduction <add>, %25, %cst_18 [1] : vector<16x32xf32> to vector<16xf32>
      %27 = vector.shape_cast %26 : vector<16xf32> to vector<16x1xf32>
      %cst_19 = arith.constant 3.200000e+01 : f32
      %28 = vector.broadcast %cst_19 : f32 to vector<16x1xf32>
      %29 = arith.divf %27, %28 : vector<16x1xf32>
      %30 = vector.broadcast %22 : vector<16x1xf32> to vector<16x32xf32>
      %31 = arith.subf %18, %30 : vector<16x32xf32>
      %cst_20 = arith.constant 9.99999996E-13 : f32
      %32 = vector.broadcast %cst_20 : f32 to vector<16x1xf32>
      %33 = arith.addf %29, %32 : vector<16x1xf32>
      %34 = math.rsqrt %33 : vector<16x1xf32>
      %35 = vector.broadcast %34 : vector<16x1xf32> to vector<16x32xf32>
      %36 = arith.mulf %31, %35 : vector<16x32xf32>
      %c0_21 = arith.constant 0 : index
      %c0_22 = arith.constant 0 : index
      %37 = vector.load %arg7[%c0_21, %c0_22] : memref<1x32xf32, #tpu.memory_space<vmem>>, vector<1x32xf32>
      %38 = vector.broadcast %37 : vector<1x32xf32> to vector<16x32xf32>
      %39 = arith.mulf %36, %38 : vector<16x32xf32>
      %c0_23 = arith.constant 0 : index
      %c0_24 = arith.constant 0 : index
      %40 = vector.load %arg8[%c0_23, %c0_24] : memref<1x32xf32, #tpu.memory_space<vmem>>, vector<1x32xf32>
      %41 = vector.broadcast %40 : vector<1x32xf32> to vector<16x32xf32>
      %42 = arith.addf %39, %41 : vector<16x32xf32>
      %43 = arith.truncf %42 : vector<16x32xf32> to vector<16x32xbf16>
      %c0_25 = arith.constant 0 : index
      %c0_26 = arith.constant 0 : index
      %44 = vector.load %arg9[%c0_25, %c0_26] : memref<16x32xbf16, #tpu.memory_space<vmem>>, vector<16x32xbf16>
      tpu.vector_store %arg9[%c0_25, %c0_26], %43 {strides = array<i32>} : memref<16x32xbf16, #tpu.memory_space<vmem>>, vector<16x32xbf16>,
    } else {
    }
    return
  }
  func.func @transform_0(%arg0: i32, %arg1: i32, %arg2: i32) -> (i32, i32) {
    %c0_i32 = arith.constant 0 : i32
    return %arg0, %arg2 : i32, i32
  }
  func.func @transform_1(%arg0: i32, %arg1: i32, %arg2: i32) -> (i32, i32) {
    %c0_i32 = arith.constant 0 : i32
    return %arg2, %arg1 : i32, i32
  }
  func.func @transform_2(%arg0: i32, %arg1: i32, %arg2: i32) -> (i32, i32) {
    %c0_i32 = arith.constant 0 : i32
    %c0_i32_0 = arith.constant 0 : i32
    return %c0_i32, %arg1 : i32, i32
  }
  func.func @transform_3(%arg0: i32, %arg1: i32, %arg2: i32) -> (i32, i32) {
    %c0_i32 = arith.constant 0 : i32
    return %arg0, %arg1 : i32, i32
  }
  func.func @transform_4(%arg0: i32, %arg1: i32, %arg2: i32) -> (i32, i32) {
    %c0_i32 = arith.constant 0 : i32
    %c0_i32_0 = arith.constant 0 : i32
    return %c0_i32, %arg1 : i32, i32
  }
  func.func @transform_5(%arg0: i32, %arg1: i32, %arg2: i32) -> (i32, i32) {
    %c0_i32 = arith.constant 0 : i32
    %c0_i32_0 = arith.constant 0 : i32
    return %c0_i32, %arg1 : i32, i32
  }
  func.func @transform_6(%arg0: i32, %arg1: i32, %arg2: i32) -> (i32, i32) {
    %c0_i32 = arith.constant 0 : i32
    return %arg0, %arg1 : i32, i32
  }
}

module attributes {stable_mosaic.version = 11 : i64} {
  func.func @_pooler_cls_kernel(%arg0: i32, %arg1: memref<8x32xbf16, #tpu.memory_space<vmem>>, %arg2: memref<32x32xbf16, #tpu.memory_space<vmem>>, %arg3: memref<1x32xf32, #tpu.memory_space<vmem>>, %arg4: memref<32x1xbf16, #tpu.memory_space<vmem>>, %arg5: memref<1x1xf32, #tpu.memory_space<vmem>>, %arg6: memref<8x1xf32, #tpu.memory_space<vmem>>) attributes {dimension_semantics = [#tpu.dimension_semantics<arbitrary>], iteration_bounds = array<i64: 1>, scalar_prefetch = 0 : i64, scratch_operands = 0 : i64, tpu.core_type = #tpu.core_type<tc>, window_params = [{pipeline_mode = #tpu.pipeline_mode<synchronous>, transform_indices = @transform_0, window_bounds = array<i64: 8, 32>}, {pipeline_mode = #tpu.pipeline_mode<synchronous>, transform_indices = @transform_1, window_bounds = array<i64: 32, 32>}, {pipeline_mode = #tpu.pipeline_mode<synchronous>, transform_indices = @transform_2, window_bounds = array<i64: 1, 32>}, {pipeline_mode = #tpu.pipeline_mode<synchronous>, transform_indices = @transform_3, window_bounds = array<i64: 32, 1>}, {pipeline_mode = #tpu.pipeline_mode<synchronous>, transform_indices = @transform_4, window_bounds = array<i64: 1, 1>}, {pipeline_mode = #tpu.pipeline_mode<synchronous>, transform_indices = @transform_5, window_bounds = array<i64: 8, 1>}]} {
    %c0 = arith.constant 0 : index
    %c0_0 = arith.constant 0 : index
    %0 = vector.load %arg1[%c0, %c0_0] : memref<8x32xbf16, #tpu.memory_space<vmem>>, vector<8x32xbf16>
    %c0_1 = arith.constant 0 : index
    %c0_2 = arith.constant 0 : index
    %1 = vector.load %arg2[%c0_1, %c0_2] : memref<32x32xbf16, #tpu.memory_space<vmem>>, vector<32x32xbf16>
    %cst = arith.constant dense<0.000000e+00> : vector<8x32xf32>
    %2 = tpu.matmul %0, %1, %cst {dimension_numbers = #tpu.dot_dimension_numbers<[1], [0], [0], [1], [0, 0, 1, 1], [], []>} : vector<8x32xbf16>, vector<32x32xbf16>, vector<8x32xf32> -> vector<8x32xf32>
    %c0_3 = arith.constant 0 : index
    %c0_4 = arith.constant 0 : index
    %3 = vector.load %arg3[%c0_3, %c0_4] : memref<1x32xf32, #tpu.memory_space<vmem>>, vector<1x32xf32>
    %4 = vector.broadcast %3 : vector<1x32xf32> to vector<8x32xf32>
    %5 = arith.addf %2, %4 : vector<8x32xf32>
    %6 = math.tanh %5 : vector<8x32xf32>
    %7 = arith.truncf %6 : vector<8x32xf32> to vector<8x32xbf16>
    %c0_5 = arith.constant 0 : index
    %c0_6 = arith.constant 0 : index
    %8 = vector.load %arg4[%c0_5, %c0_6] : memref<32x1xbf16, #tpu.memory_space<vmem>>, vector<32x1xbf16>
    %cst_7 = arith.constant dense<0.000000e+00> : vector<8x1xf32>
    %9 = tpu.matmul %7, %8, %cst_7 {dimension_numbers = #tpu.dot_dimension_numbers<[1], [0], [0], [1], [0, 0, 1, 1], [], []>} : vector<8x32xbf16>, vector<32x1xbf16>, vector<8x1xf32> -> vector<8x1xf32>
    %c0_8 = arith.constant 0 : index
    %c0_9 = arith.constant 0 : index
    %10 = vector.load %arg5[%c0_8, %c0_9] : memref<1x1xf32, #tpu.memory_space<vmem>>, vector<1x1xf32>
    %11 = vector.broadcast %10 : vector<1x1xf32> to vector<8x1xf32>
    %12 = arith.addf %9, %11 : vector<8x1xf32>
    %c0_10 = arith.constant 0 : index
    %c0_11 = arith.constant 0 : index
    %13 = vector.load %arg6[%c0_10, %c0_11] : memref<8x1xf32, #tpu.memory_space<vmem>>, vector<8x1xf32>
    tpu.vector_store %arg6[%c0_10, %c0_11], %12 {strides = array<i32>} : memref<8x1xf32, #tpu.memory_space<vmem>>, vector<8x1xf32>,
    return
  }
  func.func @transform_0(%arg0: i32) -> (i32, i32) {
    %c0_i32 = arith.constant 0 : i32
    %c0_i32_0 = arith.constant 0 : i32
    %c0_i32_1 = arith.constant 0 : i32
    return %c0_i32, %c0_i32_0 : i32, i32
  }
  func.func @transform_1(%arg0: i32) -> (i32, i32) {
    %c0_i32 = arith.constant 0 : i32
    %c0_i32_0 = arith.constant 0 : i32
    %c0_i32_1 = arith.constant 0 : i32
    return %c0_i32, %c0_i32_0 : i32, i32
  }
  func.func @transform_2(%arg0: i32) -> (i32, i32) {
    %c0_i32 = arith.constant 0 : i32
    %c0_i32_0 = arith.constant 0 : i32
    %c0_i32_1 = arith.constant 0 : i32
    return %c0_i32, %c0_i32_0 : i32, i32
  }
  func.func @transform_3(%arg0: i32) -> (i32, i32) {
    %c0_i32 = arith.constant 0 : i32
    %c0_i32_0 = arith.constant 0 : i32
    %c0_i32_1 = arith.constant 0 : i32
    return %c0_i32, %c0_i32_0 : i32, i32
  }
  func.func @transform_4(%arg0: i32) -> (i32, i32) {
    %c0_i32 = arith.constant 0 : i32
    %c0_i32_0 = arith.constant 0 : i32
    %c0_i32_1 = arith.constant 0 : i32
    return %c0_i32, %c0_i32_0 : i32, i32
  }
  func.func @transform_5(%arg0: i32) -> (i32, i32) {
    %c0_i32 = arith.constant 0 : i32
    %c0_i32_0 = arith.constant 0 : i32
    %c0_i32_1 = arith.constant 0 : i32
    return %c0_i32, %c0_i32_0 : i32, i32
  }
}

</mosaic_0001>

<llo_original>
// kernel: sentence_pair_classifier_forward.12
$region0: #{sentence_pair_classifier_forward.12}
  #allocation0 [shape = 'u32[]', space=smem, size = 0x4, offset = 0x4, fixed_abs, tag = 'smem constant byte address 0x4 - core index']
  #allocation1 [shape = 'u32[144,128]{1,0:T(1,128)}', space=vmem, size = 0x12000, scoped, tag = 'internal scratch']
  %s0 = inlined_call_operand.vmem [shape: f32[16,32], index: 0, kind: input, shape index: {}]
  %s1 = inlined_call_operand.vmem [shape: f32[1,32], index: 1, kind: input, shape index: {}]
  %s2 = inlined_call_operand.vmem [shape: f32[1,32], index: 2, kind: input, shape index: {}]
  %s3 = inlined_call_operand.vmem [shape: bf16[16,32], index: 3, kind: output, shape index: {}]
  %s4 = sld [smem:[#allocation0]]
  $region22: #{sentence_pair_classifier_forward.12} parent=0
    _
  %s6 = ssub.s32 1, %s4
  %s7 = scalar_select 0, %s6, %s4
  // Predicated region
  $region2: #{sentence_pair_classifier_forward.12} parent=0 // pred_check
    _
  $region3: #{sentence_pair_classifier_forward.12} parent=0 // pred_check_branch
    %9 = sbr.rel (0) target = $region5
  $region4: #{sentence_pair_classifier_forward.12} parent=0 // pred_region
    _
  $region5: #{sentence_pair_classifier_forward.12} parent=0 // pred_fallthru
    _
  // Predicated region
  $region6: #{sentence_pair_classifier_forward.12} parent=0 // pred_check
    _
  $region7: #{sentence_pair_classifier_forward.12} parent=0 // pred_check_branch
    %11 = sbr.rel (0) target = $region9
  $region8: #{sentence_pair_classifier_forward.12} parent=0 // pred_region
    _
  $region9: #{sentence_pair_classifier_forward.12} parent=0 // pred_fallthru
    _
  // Predicated region
  $region10: #{sentence_pair_classifier_forward.12} parent=0 // pred_check
    _
  $region11: #{sentence_pair_classifier_forward.12} parent=0 // pred_check_branch
    %13 = sbr.rel (0) target = $region13
  $region12: #{sentence_pair_classifier_forward.12} parent=0 // pred_region
    _
  $region13: #{sentence_pair_classifier_forward.12} parent=0 // pred_fallthru
    _
  %v14 = vld [vmem:[%s0] sm:$0xff]
  %v15 = vld [vmem:[%s0 + $0x8] sm:$0xff]
  %vm16 = vcmask 261120
  %v17 = vsel %vm16, %v14, 0.0
  %18 = vadd.xlane.f32.xlu0 %v17
  %v19 = vpop.xlane.xlu0 %18
  %v20 = vsel %vm16, %v15, 0.0
  %21 = vadd.xlane.f32.xlu0 %v20
  %v22 = vpop.xlane.xlu0 %21
  %v23 = vrcp.pop 32.0
  %v24 = vmul.f32 %v19, %v23
  %v25 = vmul.f32 %v22, %v23
  %v26 = vsub.f32 %v14, %v24
  %v27 = vsub.f32 %v15, %v25
  %v28 = vmul.f32 %v26, %v26
  %v29 = vmul.f32 %v27, %v27
  %v30 = vsel %vm16, %v28, 0.0
  %31 = vadd.xlane.f32.xlu0 %v30
  %v32 = vpop.xlane.xlu0 %31
  %v33 = vsel %vm16, %v29, 0.0
  %34 = vadd.xlane.f32.xlu0 %v33
  %v35 = vpop.xlane.xlu0 %34
  %v36 = vmul.f32 %v32, %v23
  %v37 = vmul.f32 %v35, %v23
  %v38 = vadd.f32 %v36, 1e-12
  %v39 = vadd.f32 %v37, 1e-12
  %v40 = vrsqrt.pop %v38
  %v41 = vrsqrt.pop %v39
  %v42 = vmul.f32 %v26, %v40
  %v43 = vmul.f32 %v27, %v41
  %v44 = vld [vmem:[%s1] sm:$0x1]
  %v46 = vlaneseq
  %v47 = vshrl.u32 %v46, 7
  %v48 = vsub.s32 0, %v47
  %v49 = vrot.slane %v44, %v48
  %v51 = vmul.f32 %v42, %v49
  %v52 = vmul.f32 %v43, %v49
  %v53 = vld [vmem:[%s2] sm:$0x1]
  %v55 = vlaneseq
  %v56 = vshrl.u32 %v55, 7
  %v57 = vsub.s32 0, %v56
  %v58 = vrot.slane %v53, %v57
  %v60 = vadd.f32 %v51, %v58
  %v61 = vadd.f32 %v52, %v58
  %v62 = vpack.c.bf16 %v61, %v60
  %v64 = vunpack.c.l.b16 %v62
  %v65 = vunpack.c.h.b16 %v62
  %v66 = vpack.c.b16 %v64, %v64
  %v67 = vpack.c.b16 %v65, %v65
  %vm70 = vcmask 257024
  %71 = vst.msk [vmem:[%s3] sm:$0xf] %vm70, %v66
  %72 = vst.msk [vmem:[%s3 + $0x4] sm:$0xf] %vm70, %v67
  // Predicated region
  $region14: #{sentence_pair_classifier_forward.12} parent=0 // pred_check
    _
  $region15: #{sentence_pair_classifier_forward.12} parent=0 // pred_check_branch
    %74 = sbr.rel (0) target = $region17
  $region16: #{sentence_pair_classifier_forward.12} parent=0 // pred_region
    _
  $region17: #{sentence_pair_classifier_forward.12} parent=0 // pred_fallthru
    _
  // Predicated region
  $region18: #{sentence_pair_classifier_forward.12} parent=0 // pred_check
    _
  $region19: #{sentence_pair_classifier_forward.12} parent=0 // pred_check_branch
    %76 = sbr.rel (0) target = $region21
  $region20: #{sentence_pair_classifier_forward.12} parent=0 // pred_region
    _
  $region21: #{sentence_pair_classifier_forward.12} parent=0 // pred_fallthru
    _

// kernel: sentence_pair_classifier_forward.13
$region0: #{sentence_pair_classifier_forward.13}
  #allocation0 [shape = 'u32[]', space=smem, size = 0x4, offset = 0x4, fixed_abs, tag = 'smem constant byte address 0x4 - core index']
  #allocation1 [shape = 'u32[144,128]{1,0:T(1,128)}', space=vmem, size = 0x12000, scoped, tag = 'internal scratch']
  #allocation2 [shape = 'f32[16,96]{1,0:T(8,128)}', space=vmem, size = 0x2000, scoped, tag = 'scratch operand']
  %s0 = inlined_call_operand.vmem [shape: bf16[16,32], index: 0, kind: input, shape index: {}]
  %s1 = inlined_call_operand.vmem [shape: bf16[32,96], index: 1, kind: input, shape index: {}]
  %s2 = inlined_call_operand.vmem [shape: f32[1,96], index: 2, kind: input, shape index: {}]
  %s3 = inlined_call_operand.vmem [shape: bf16[16,96], index: 3, kind: output, shape index: {}]
  %s4 = sld [smem:[#allocation0]]
  $region30: #{sentence_pair_classifier_forward.13} parent=0
    _
  %s6 = ssub.s32 1, %s4
  %s7 = scalar_select 0, %s6, %s4
  // Predicated region
  $region2: #{sentence_pair_classifier_forward.13} parent=0 // pred_check
    _
  $region3: #{sentence_pair_classifier_forward.13} parent=0 // pred_check_branch
    %9 = sbr.rel (0) target = $region5
  $region4: #{sentence_pair_classifier_forward.13} parent=0 // pred_region
    _
  $region5: #{sentence_pair_classifier_forward.13} parent=0 // pred_fallthru
    _
  // Predicated region
  $region6: #{sentence_pair_classifier_forward.13} parent=0 // pred_check
    _
  $region7: #{sentence_pair_classifier_forward.13} parent=0 // pred_check_branch
    %11 = sbr.rel (0) target = $region9
  $region8: #{sentence_pair_classifier_forward.13} parent=0 // pred_region
    _
  $region9: #{sentence_pair_classifier_forward.13} parent=0 // pred_fallthru
    _
  // Predicated region
  $region10: #{sentence_pair_classifier_forward.13} parent=0 // pred_check
    _
  $region11: #{sentence_pair_classifier_forward.13} parent=0 // pred_check_branch
    %13 = sbr.rel (0) target = $region13
  $region12: #{sentence_pair_classifier_forward.13} parent=0 // pred_region
    _
  $region13: #{sentence_pair_classifier_forward.13} parent=0 // pred_fallthru
    _
  %p15 = scmp.eq.s32.totalorder 0, 0
  // Predicated region
  $region14: #{sentence_pair_classifier_forward.13} parent=0 // pred_check
    %p16 = pneg %p15
  $region15: #{sentence_pair_classifier_forward.13} parent=0 // pred_check_branch
    %18 = sbr.rel (%p16) target = $region17
  $region16: #{sentence_pair_classifier_forward.13} parent=0 // pred_region
    %vm19 = vcmask 785408
    %20 = vst.msk [vmem:[#allocation2] sm:$0xff] %vm19, 0.0
    %21 = vst.msk [vmem:[#allocation2 + $0x8] sm:$0xff] %vm19, 0.0
  $region17: #{sentence_pair_classifier_forward.13} parent=0 // pred_fallthru
    _
  %v22 = vld [vmem:[#allocation2] sm:$0xff]
  %v23 = vld [vmem:[#allocation2 + $0x8] sm:$0xff]
  %v24 = vld [vmem:[%s0] sm:$0xf]
  %v25 = vld [vmem:[%s0 + $0x4] sm:$0xf]
  %v26 = vld [vmem:[%s1] sm:$0xf]
  %v27 = vld [vmem:[%s1 + $0x4] sm:$0xf]
  %v28 = vld [vmem:[%s1 + $0x8] sm:$0xf]
  %v29 = vld [vmem:[%s1 + $0xc] sm:$0xf]
  %v32 = vunpack.c.l.b16 %v24
  %v33 = vunpack.c.l.b16 %v25
  %v34 = vpack.c.b16 %v33, %v32
  %v39 = vunpack.c.l.b16 %v26
  %v40 = vunpack.c.l.b16 %v27
  %v41 = vunpack.c.l.b16 %v28
  %v42 = vunpack.c.l.b16 %v29
  %v43 = vpack.c.b16 %v40, %v39
  %v44 = vpack.c.b16 %v42, %v41
  %vm47 = vcmask 261120
  %v49 = vsel %vm47, %v34, 0
  %51 = vmatprep.subr.bf16.mxu0 0
  %52 = vmatpush1.bf16.msra.mxu0 %v43
  %53 = vmatprep.subr.bf16.mxu0 0
  %54 = vmatpush1.bf16.msra.mxu0 %v44
  %55 = vmatprep.subr.bf16.mxu0 0
  %56 = vmatpush1.bf16.msra.mxu0 0
  %57 = vmatprep.subr.bf16.mxu0 0
  %58 = vmatpush1.bf16.msra.mxu0 0
  %59 = vmatprep.subr.bf16.mxu0 0
  %60 = vmatpush1.bf16.msra.mxu0 0
  %61 = vmatprep.subr.bf16.mxu0 0
  %62 = vmatpush1.bf16.msra.mxu0 0
  %63 = vmatprep.subr.bf16.mxu0 0
  %64 = vmatpush1.bf16.msra.mxu0 0
  %65 = vmatprep.subr.bf16.mxu0 0
  %66 = vmatpush1.bf16.msra.mxu0 0
  %67 = vmatprep.subr.bf16.mxu0 0
  %68 = vmatpush1.bf16.msra.mxu0 0
  %69 = vmatprep.subr.bf16.mxu0 0
  %70 = vmatpush1.bf16.msra.mxu0 0
  %71 = vmatprep.subr.bf16.mxu0 0
  %72 = vmatpush1.bf16.msra.mxu0 0
  %73 = vmatprep.subr.bf16.mxu0 0
  %74 = vmatpush1.bf16.msra.mxu0 0
  %75 = vmatprep.subr.bf16.mxu0 0
  %76 = vmatpush1.bf16.msra.mxu0 0
  %77 = vmatprep.subr.bf16.mxu0 0
  %78 = vmatpush1.bf16.msra.mxu0 0
  %79 = vmatprep.subr.bf16.mxu0 0
  %80 = vmatpush1.bf16.msra.mxu0 0
  %81 = vmatprep.subr.bf16.mxu0 0
  %82 = vmatpush1.bf16.msra.mxu0 0
  %83 = vmatprep.mubr.bf16.mxu0 0
  %84 = vmatmul.mubr.bf16.gmra.mrb[0].mxu0 %v49
  %v85 = vpop.f32.mrb[0].mxu0
  %v86 = vadd.f32 0.0, %v85
  %v87 = vpop.f32.mrb[0].mxu0
  %v88 = vpop.f32.mrb[0].mxu0
  %v89 = vadd.f32 0.0, %v88
  %v90 = vpop.f32.mrb[0].mxu0
  %91 = vdwg.mxu0
  %v92 = vadd.f32 %v22, %v86
  %v93 = vadd.f32 %v23, %v89
  %vm94 = vcmask 785408
  %95 = vst.msk [vmem:[#allocation2] sm:$0xff] %vm94, %v92
  %96 = vst.msk [vmem:[#allocation2 + $0x8] sm:$0xff] %vm94, %v93
  // Predicated region
  $region18: #{sentence_pair_classifier_forward.13} parent=0 // pred_check
    %p97 = pneg %p15
  $region19: #{sentence_pair_classifier_forward.13} parent=0 // pred_check_branch
    %99 = sbr.rel (%p97) target = $region21
  $region20: #{sentence_pair_classifier_forward.13} parent=0 // pred_region
    %v100 = vld [vmem:[#allocation2] sm:$0xff]
    %v101 = vld [vmem:[#allocation2 + $0x8] sm:$0xff]
    %v102 = vld [vmem:[%s2] sm:$0x1]
    %v104 = vlaneseq
    %v105 = vshrl.u32 %v104, 7
    %v106 = vsub.s32 0, %v105
    %v107 = vrot.slane %v102, %v106
    %v109 = vadd.f32 %v100, %v107
    %v110 = vadd.f32 %v101, %v107
    %v111 = vpack.c.bf16 %v110, %v109
    %v113 = vunpack.c.l.b16 %v111
    %v114 = vunpack.c.h.b16 %v111
    %v115 = vpack.c.b16 %v113, %v113
    %v116 = vpack.c.b16 %v114, %v114
    %vm119 = vcmask 781312
    %120 = vst.msk [vmem:[%s3] sm:$0xf] %vm119, %v115
    %121 = vst.msk [vmem:[%s3 + $0x4] sm:$0xf] %vm119, %v116
  $region21: #{sentence_pair_classifier_forward.13} parent=0 // pred_fallthru
    _
  // Predicated region
  $region22: #{sentence_pair_classifier_forward.13} parent=0 // pred_check
    _
  $region23: #{sentence_pair_classifier_forward.13} parent=0 // pred_check_branch
    %123 = sbr.rel (0) target = $region25
  $region24: #{sentence_pair_classifier_forward.13} parent=0 // pred_region
    _
  $region25: #{sentence_pair_classifier_forward.13} parent=0 // pred_fallthru
    _
  // Predicated region
  $region26: #{sentence_pair_classifier_forward.13} parent=0 // pred_check
    _
  $region27: #{sentence_pair_classifier_forward.13} parent=0 // pred_check_branch
    %125 = sbr.rel (0) target = $region29
  $region28: #{sentence_pair_classifier_forward.13} parent=0 // pred_region
    _
  $region29: #{sentence_pair_classifier_forward.13} parent=0 // pred_fallthru
    _

// kernel: sentence_pair_classifier_forward.15
$region0: #{sentence_pair_classifier_forward.15}
  #allocation0 [shape = 'u32[]', space=smem, size = 0x4, offset = 0x4, fixed_abs, tag = 'smem constant byte address 0x4 - core index']
  #allocation1 [shape = 'u32[144,128]{1,0:T(1,128)}', space=vmem, size = 0x12000, scoped, tag = 'internal scratch']
  #allocation2 [shape = 'f32[16,32]{1,0:T(8,128)}', space=vmem, size = 0x2000, scoped, tag = 'scratch operand']
  %s0 = inlined_call_operand.vmem [shape: bf16[16,32], index: 0, kind: input, shape index: {}]
  %s1 = inlined_call_operand.vmem [shape: bf16[32,32], index: 1, kind: input, shape index: {}]
  %s2 = inlined_call_operand.vmem [shape: f32[1,32], index: 2, kind: input, shape index: {}]
  %s3 = inlined_call_operand.vmem [shape: bf16[16,32], index: 3, kind: input, shape index: {}]
  %s4 = inlined_call_operand.vmem [shape: f32[1,32], index: 4, kind: input, shape index: {}]
  %s5 = inlined_call_operand.vmem [shape: f32[1,32], index: 5, kind: input, shape index: {}]
  %s6 = inlined_call_operand.vmem [shape: bf16[16,32], index: 6, kind: output, shape index: {}]
  %s7 = sld [smem:[#allocation0]]
  $region42: #{sentence_pair_classifier_forward.15} parent=0
    _
  %s9 = ssub.s32 1, %s7
  %s10 = scalar_select 0, %s9, %s7
  // Predicated region
  $region2: #{sentence_pair_classifier_forward.15} parent=0 // pred_check
    _
  $region3: #{sentence_pair_classifier_forward.15} parent=0 // pred_check_branch
    %12 = sbr.rel (0) target = $region5
  $region4: #{sentence_pair_classifier_forward.15} parent=0 // pred_region
    _
  $region5: #{sentence_pair_classifier_forward.15} parent=0 // pred_fallthru
    _
  // Predicated region
  $region6: #{sentence_pair_classifier_forward.15} parent=0 // pred_check
    _
  $region7: #{sentence_pair_classifier_forward.15} parent=0 // pred_check_branch
    %14 = sbr.rel (0) target = $region9
  $region8: #{sentence_pair_classifier_forward.15} parent=0 // pred_region
    _
  $region9: #{sentence_pair_classifier_forward.15} parent=0 // pred_fallthru
    _
  // Predicated region
  $region10: #{sentence_pair_classifier_forward.15} parent=0 // pred_check
    _
  $region11: #{sentence_pair_classifier_forward.15} parent=0 // pred_check_branch
    %16 = sbr.rel (0) target = $region13
  $region12: #{sentence_pair_classifier_forward.15} parent=0 // pred_region
    _
  $region13: #{sentence_pair_classifier_forward.15} parent=0 // pred_fallthru
    _
  // Predicated region
  $region14: #{sentence_pair_classifier_forward.15} parent=0 // pred_check
    _
  $region15: #{sentence_pair_classifier_forward.15} parent=0 // pred_check_branch
    %18 = sbr.rel (0) target = $region17
  $region16: #{sentence_pair_classifier_forward.15} parent=0 // pred_region
    _
  $region17: #{sentence_pair_classifier_forward.15} parent=0 // pred_fallthru
    _
  // Predicated region
  $region18: #{sentence_pair_classifier_forward.15} parent=0 // pred_check
    _
  $region19: #{sentence_pair_classifier_forward.15} parent=0 // pred_check_branch
    %20 = sbr.rel (0) target = $region21
  $region20: #{sentence_pair_classifier_forward.15} parent=0 // pred_region
    _
  $region21: #{sentence_pair_classifier_forward.15} parent=0 // pred_fallthru
    _
  // Predicated region
  $region22: #{sentence_pair_classifier_forward.15} parent=0 // pred_check
    _
  $region23: #{sentence_pair_classifier_forward.15} parent=0 // pred_check_branch
    %22 = sbr.rel (0) target = $region25
  $region24: #{sentence_pair_classifier_forward.15} parent=0 // pred_region
    _
  $region25: #{sentence_pair_classifier_forward.15} parent=0 // pred_fallthru
    _
  %p24 = scmp.eq.s32.totalorder 0, 0
  // Predicated region
  $region26: #{sentence_pair_classifier_forward.15} parent=0 // pred_check
    %p25 = pneg %p24
  $region27: #{sentence_pair_classifier_forward.15} parent=0 // pred_check_branch
    %27 = sbr.rel (%p25) target = $region29
  $region28: #{sentence_pair_classifier_forward.15} parent=0 // pred_region
    %vm28 = vcmask 261120
    %29 = vst.msk [vmem:[#allocation2] sm:$0xff] %vm28, 0.0
    %30 = vst.msk [vmem:[#allocation2 + $0x8] sm:$0xff] %vm28, 0.0
  $region29: #{sentence_pair_classifier_forward.15} parent=0 // pred_fallthru
    _
  %v31 = vld [vmem:[#allocation2] sm:$0xff]
  %v32 = vld [vmem:[#allocation2 + $0x8] sm:$0xff]
  %v33 = vld [vmem:[%s0] sm:$0xf]
  %v34 = vld [vmem:[%s0 + $0x4] sm:$0xf]
  %v35 = vld [vmem:[%s1] sm:$0xf]
  %v36 = vld [vmem:[%s1 + $0x4] sm:$0xf]
  %v37 = vld [vmem:[%s1 + $0x8] sm:$0xf]
  %v38 = vld [vmem:[%s1 + $0xc] sm:$0xf]
  %v41 = vunpack.c.l.b16 %v33
  %v42 = vunpack.c.l.b16 %v34
  %v43 = vpack.c.b16 %v42, %v41
  %v48 = vunpack.c.l.b16 %v35
  %v49 = vunpack.c.l.b16 %v36
  %v50 = vunpack.c.l.b16 %v37
  %v51 = vunpack.c.l.b16 %v38
  %v52 = vpack.c.b16 %v49, %v48
  %v53 = vpack.c.b16 %v51, %v50
  %vm56 = vcmask 261120
  %v58 = vsel %vm56, %v43, 0
  %60 = vmatprep.subr.bf16.mxu0 0
  %61 = vmatpush1.bf16.msra.mxu0 %v52
  %62 = vmatprep.subr.bf16.mxu0 0
  %63 = vmatpush1.bf16.msra.mxu0 %v53
  %64 = vmatprep.subr.bf16.mxu0 0
  %65 = vmatpush1.bf16.msra.mxu0 0
  %66 = vmatprep.subr.bf16.mxu0 0
  %67 = vmatpush1.bf16.msra.mxu0 0
  %68 = vmatprep.subr.bf16.mxu0 0
  %69 = vmatpush1.bf16.msra.mxu0 0
  %70 = vmatprep.subr.bf16.mxu0 0
  %71 = vmatpush1.bf16.msra.mxu0 0
  %72 = vmatprep.subr.bf16.mxu0 0
  %73 = vmatpush1.bf16.msra.mxu0 0
  %74 = vmatprep.subr.bf16.mxu0 0
  %75 = vmatpush1.bf16.msra.mxu0 0
  %76 = vmatprep.subr.bf16.mxu0 0
  %77 = vmatpush1.bf16.msra.mxu0 0
  %78 = vmatprep.subr.bf16.mxu0 0
  %79 = vmatpush1.bf16.msra.mxu0 0
  %80 = vmatprep.subr.bf16.mxu0 0
  %81 = vmatpush1.bf16.msra.mxu0 0
  %82 = vmatprep.subr.bf16.mxu0 0
  %83 = vmatpush1.bf16.msra.mxu0 0
  %84 = vmatprep.subr.bf16.mxu0 0
  %85 = vmatpush1.bf16.msra.mxu0 0
  %86 = vmatprep.subr.bf16.mxu0 0
  %87 = vmatpush1.bf16.msra.mxu0 0
  %88 = vmatprep.subr.bf16.mxu0 0
  %89 = vmatpush1.bf16.msra.mxu0 0
  %90 = vmatprep.subr.bf16.mxu0 0
  %91 = vmatpush1.bf16.msra.mxu0 0
  %92 = vmatprep.mubr.bf16.mxu0 0
  %93 = vmatmul.mubr.bf16.gmra.mrb[0].mxu0 %v58
  %v94 = vpop.f32.mrb[0].mxu0
  %v95 = vadd.f32 0.0, %v94
  %v96 = vpop.f32.mrb[0].mxu0
  %v97 = vpop.f32.mrb[0].mxu0
  %v98 = vadd.f32 0.0, %v97
  %v99 = vpop.f32.mrb[0].mxu0
  %100 = vdwg.mxu0
  %v101 = vadd.f32 %v31, %v95
  %v102 = vadd.f32 %v32, %v98
  %103 = vst.msk [vmem:[#allocation2] sm:$0xff] %vm56, %v101
  %104 = vst.msk [vmem:[#allocation2 + $0x8] sm:$0xff] %vm56, %v102
  // Predicated region
  $region30: #{sentence_pair_classifier_forward.15} parent=0 // pred_check
    %p105 = pneg %p24
  $region31: #{sentence_pair_classifier_forward.15} parent=0 // pred_check_branch
    %107 = sbr.rel (%p105) target = $region33
  $region32: #{sentence_pair_classifier_forward.15} parent=0 // pred_region
    %v108 = vld [vmem:[#allocation2] sm:$0xff]
    %v109 = vld [vmem:[#allocation2 + $0x8] sm:$0xff]
    %v110 = vld [vmem:[%s2] sm:$0x1]
    %v112 = vlaneseq
    %v113 = vshrl.u32 %v112, 7
    %v114 = vsub.s32 0, %v113
    %v115 = vrot.slane %v110, %v114
    %v117 = vadd.f32 %v108, %v115
    %v118 = vadd.f32 %v109, %v115
    %v119 = vld [vmem:[%s3] sm:$0xf]
    %v120 = vld [vmem:[%s3 + $0x4] sm:$0xf]
    %v121 = vunpack.c.l.bf16 %v119
    %v122 = vunpack.c.l.bf16 %v120
    %v123 = vadd.f32 %v117, %v121
    %v124 = vadd.f32 %v118, %v122
    %v125 = vsel %vm56, %v123, 0.0
    %126 = vadd.xlane.f32.xlu0 %v125
    %v127 = vpop.xlane.xlu0 %126
    %v128 = vsel %vm56, %v124, 0.0
    %129 = vadd.xlane.f32.xlu0 %v128
    %v130 = vpop.xlane.xlu0 %129
    %v131 = vrcp.pop 32.0
    %v132 = vmul.f32 %v127, %v131
    %v133 = vmul.f32 %v130, %v131
    %v134 = vsub.f32 %v123, %v132
    %v135 = vsub.f32 %v124, %v133
    %v136 = vmul.f32 %v134, %v134
    %v137 = vmul.f32 %v135, %v135
    %v138 = vsel %vm56, %v136, 0.0
    %139 = vadd.xlane.f32.xlu0 %v138
    %v140 = vpop.xlane.xlu0 %139
    %v141 = vsel %vm56, %v137, 0.0
    %142 = vadd.xlane.f32.xlu0 %v141
    %v143 = vpop.xlane.xlu0 %142
    %v144 = vmul.f32 %v140, %v131
    %v145 = vmul.f32 %v143, %v131
    %v146 = vadd.f32 %v144, 1e-12
    %v147 = vadd.f32 %v145, 1e-12
    %v148 = vrsqrt.pop %v146
    %v149 = vrsqrt.pop %v147
    %v150 = vmul.f32 %v134, %v148
    %v151 = vmul.f32 %v135, %v149
    %v152 = vld [vmem:[%s4] sm:$0x1]
    %v154 = vlaneseq
    %v155 = vshrl.u32 %v154, 7
    %v156 = vsub.s32 0, %v155
    %v157 = vrot.slane %v152, %v156
    %v159 = vmul.f32 %v150, %v157
    %v160 = vmul.f32 %v151, %v157
    %v161 = vld [vmem:[%s5] sm:$0x1]
    %v163 = vlaneseq
    %v164 = vshrl.u32 %v163, 7
    %v165 = vsub.s32 0, %v164
    %v166 = vrot.slane %v161, %v165
    %v168 = vadd.f32 %v159, %v166
    %v169 = vadd.f32 %v160, %v166
    %v170 = vpack.c.bf16 %v169, %v168
    %v172 = vunpack.c.l.b16 %v170
    %v173 = vunpack.c.h.b16 %v170
    %v174 = vpack.c.b16 %v172, %v172
    %v175 = vpack.c.b16 %v173, %v173
    %vm178 = vcmask 257024
    %179 = vst.msk [vmem:[%s6] sm:$0xf] %vm178, %v174
    %180 = vst.msk [vmem:[%s6 + $0x4] sm:$0xf] %vm178, %v175
  $region33: #{sentence_pair_classifier_forward.15} parent=0 // pred_fallthru
    _
  // Predicated region
  $region34: #{sentence_pair_classifier_forward.15} parent=0 // pred_check
    _
  $region35: #{sentence_pair_classifier_forward.15} parent=0 // pred_check_branch
    %182 = sbr.rel (0) target = $region37
  $region36: #{sentence_pair_classifier_forward.15} parent=0 // pred_region
    _
  $region37: #{sentence_pair_classifier_forward.15} parent=0 // pred_fallthru
    _
  // Predicated region
  $region38: #{sentence_pair_classifier_forward.15} parent=0 // pred_check
    _
  $region39: #{sentence_pair_classifier_forward.15} parent=0 // pred_check_branch
    %184 = sbr.rel (0) target = $region41
  $region40: #{sentence_pair_classifier_forward.15} parent=0 // pred_region
    _
  $region41: #{sentence_pair_classifier_forward.15} parent=0 // pred_fallthru
    _

// kernel: sentence_pair_classifier_forward.16
$region0: #{sentence_pair_classifier_forward.16}
  #allocation0 [shape = 'u32[]', space=smem, size = 0x4, offset = 0x4, fixed_abs, tag = 'smem constant byte address 0x4 - core index']
  #allocation1 [shape = 'u32[144,128]{1,0:T(1,128)}', space=vmem, size = 0x12000, scoped, tag = 'internal scratch']
  #allocation2 [shape = 'f32[16,128]{1,0:T(8,128)}', space=vmem, size = 0x2000, scoped, tag = 'scratch operand']
  %s0 = inlined_call_operand.vmem [shape: bf16[16,32], index: 0, kind: input, shape index: {}]
  %s1 = inlined_call_operand.vmem [shape: bf16[32,128], index: 1, kind: input, shape index: {}]
  %s2 = inlined_call_operand.vmem [shape: f32[1,128], index: 2, kind: input, shape index: {}]
  %s3 = inlined_call_operand.vmem [shape: bf16[16,128], index: 3, kind: output, shape index: {}]
  %s4 = sld [smem:[#allocation0]]
  $region30: #{sentence_pair_classifier_forward.16} parent=0
    _
  %s6 = ssub.s32 1, %s4
  %s7 = scalar_select 0, %s6, %s4
  // Predicated region
  $region2: #{sentence_pair_classifier_forward.16} parent=0 // pred_check
    _
  $region3: #{sentence_pair_classifier_forward.16} parent=0 // pred_check_branch
    %9 = sbr.rel (0) target = $region5
  $region4: #{sentence_pair_classifier_forward.16} parent=0 // pred_region
    _
  $region5: #{sentence_pair_classifier_forward.16} parent=0 // pred_fallthru
    _
  // Predicated region
  $region6: #{sentence_pair_classifier_forward.16} parent=0 // pred_check
    _
  $region7: #{sentence_pair_classifier_forward.16} parent=0 // pred_check_branch
    %11 = sbr.rel (0) target = $region9
  $region8: #{sentence_pair_classifier_forward.16} parent=0 // pred_region
    _
  $region9: #{sentence_pair_classifier_forward.16} parent=0 // pred_fallthru
    _
  // Predicated region
  $region10: #{sentence_pair_classifier_forward.16} parent=0 // pred_check
    _
  $region11: #{sentence_pair_classifier_forward.16} parent=0 // pred_check_branch
    %13 = sbr.rel (0) target = $region13
  $region12: #{sentence_pair_classifier_forward.16} parent=0 // pred_region
    _
  $region13: #{sentence_pair_classifier_forward.16} parent=0 // pred_fallthru
    _
  %p15 = scmp.eq.s32.totalorder 0, 0
  // Predicated region
  $region14: #{sentence_pair_classifier_forward.16} parent=0 // pred_check
    %p16 = pneg %p15
  $region15: #{sentence_pair_classifier_forward.16} parent=0 // pred_check_branch
    %18 = sbr.rel (%p16) target = $region17
  $region16: #{sentence_pair_classifier_forward.16} parent=0 // pred_region
    %19 = vst [vmem:[#allocation2] sm:$0xff] 0.0
    %20 = vst [vmem:[#allocation2 + $0x8] sm:$0xff] 0.0
  $region17: #{sentence_pair_classifier_forward.16} parent=0 // pred_fallthru
    _
  %v21 = vld [vmem:[#allocation2] sm:$0xff]
  %v22 = vld [vmem:[#allocation2 + $0x8] sm:$0xff]
  %v23 = vld [vmem:[%s0] sm:$0xf]
  %v24 = vld [vmem:[%s0 + $0x4] sm:$0xf]
  %v25 = vld [vmem:[%s1] sm:$0xf]
  %v26 = vld [vmem:[%s1 + $0x4] sm:$0xf]
  %v27 = vld [vmem:[%s1 + $0x8] sm:$0xf]
  %v28 = vld [vmem:[%s1 + $0xc] sm:$0xf]
  %v31 = vunpack.c.l.b16 %v23
  %v32 = vunpack.c.l.b16 %v24
  %v33 = vpack.c.b16 %v32, %v31
  %v38 = vunpack.c.l.b16 %v25
  %v39 = vunpack.c.l.b16 %v26
  %v40 = vunpack.c.l.b16 %v27
  %v41 = vunpack.c.l.b16 %v28
  %v42 = vpack.c.b16 %v39, %v38
  %v43 = vpack.c.b16 %v41, %v40
  %vm46 = vcmask 261120
  %v48 = vsel %vm46, %v33, 0
  %50 = vmatprep.subr.bf16.mxu0 0
  %51 = vmatpush1.bf16.msra.mxu0 %v42
  %52 = vmatprep.subr.bf16.mxu0 0
  %53 = vmatpush1.bf16.msra.mxu0 %v43
  %54 = vmatprep.subr.bf16.mxu0 0
  %55 = vmatpush1.bf16.msra.mxu0 0
  %56 = vmatprep.subr.bf16.mxu0 0
  %57 = vmatpush1.bf16.msra.mxu0 0
  %58 = vmatprep.subr.bf16.mxu0 0
  %59 = vmatpush1.bf16.msra.mxu0 0
  %60 = vmatprep.subr.bf16.mxu0 0
  %61 = vmatpush1.bf16.msra.mxu0 0
  %62 = vmatprep.subr.bf16.mxu0 0
  %63 = vmatpush1.bf16.msra.mxu0 0
  %64 = vmatprep.subr.bf16.mxu0 0
  %65 = vmatpush1.bf16.msra.mxu0 0
  %66 = vmatprep.subr.bf16.mxu0 0
  %67 = vmatpush1.bf16.msra.mxu0 0
  %68 = vmatprep.subr.bf16.mxu0 0
  %69 = vmatpush1.bf16.msra.mxu0 0
  %70 = vmatprep.subr.bf16.mxu0 0
  %71 = vmatpush1.bf16.msra.mxu0 0
  %72 = vmatprep.subr.bf16.mxu0 0
  %73 = vmatpush1.bf16.msra.mxu0 0
  %74 = vmatprep.subr.bf16.mxu0 0
  %75 = vmatpush1.bf16.msra.mxu0 0
  %76 = vmatprep.subr.bf16.mxu0 0
  %77 = vmatpush1.bf16.msra.mxu0 0
  %78 = vmatprep.subr.bf16.mxu0 0
  %79 = vmatpush1.bf16.msra.mxu0 0
  %80 = vmatprep.subr.bf16.mxu0 0
  %81 = vmatpush1.bf16.msra.mxu0 0
  %82 = vmatprep.mubr.bf16.mxu0 0
  %83 = vmatmul.mubr.bf16.gmra.mrb[0].mxu0 %v48
  %v84 = vpop.f32.mrb[0].mxu0
  %v85 = vadd.f32 0.0, %v84
  %v86 = vpop.f32.mrb[0].mxu0
  %v87 = vpop.f32.mrb[0].mxu0
  %v88 = vadd.f32 0.0, %v87
  %v89 = vpop.f32.mrb[0].mxu0
  %90 = vdwg.mxu0
  %v91 = vadd.f32 %v21, %v85
  %v92 = vadd.f32 %v22, %v88
  %93 = vst [vmem:[#allocation2] sm:$0xff] %v91
  %94 = vst [vmem:[#allocation2 + $0x8] sm:$0xff] %v92
  // Predicated region
  $region18: #{sentence_pair_classifier_forward.16} parent=0 // pred_check
    %p95 = pneg %p15
  $region19: #{sentence_pair_classifier_forward.16} parent=0 // pred_check_branch
    %97 = sbr.rel (%p95) target = $region21
  $region20: #{sentence_pair_classifier_forward.16} parent=0 // pred_region
    %v98 = vld [vmem:[#allocation2] sm:$0xff]
    %v99 = vld [vmem:[#allocation2 + $0x8] sm:$0xff]
    %v100 = vld [vmem:[%s2] sm:$0x1]
    %v102 = vlaneseq
    %v103 = vshrl.u32 %v102, 7
    %v104 = vsub.s32 0, %v103
    %v105 = vrot.slane %v100, %v104
    %v107 = vadd.f32 %v98, %v105
    %v108 = vadd.f32 %v99, %v105
    %v109 = vmul.f32 %v107, %v107
    %v110 = vmul.f32 %v108, %v108
    %v111 = vmul.f32 %v107, %v109
    %v112 = vmul.f32 %v108, %v110
    %v113 = vmul.f32 %v111, 0.044715
    %v114 = vmul.f32 %v112, 0.044715
    %v115 = vadd.f32 %v107, %v113
    %v116 = vadd.f32 %v108, %v114
    %v117 = vmul.f32 %v115, 0.7978846
    %v118 = vmul.f32 %v116, 0.7978846
    %v119 = vtanh.pop %v117
    %v120 = vtanh.pop %v118
    %v121 = vadd.f32 %v119, 1.0
    %v122 = vadd.f32 %v120, 1.0
    %v123 = vmul.f32 %v121, 0.5
    %v124 = vmul.f32 %v122, 0.5
    %v125 = vmul.f32 %v107, %v123
    %v126 = vmul.f32 %v108, %v124
    %v127 = vpack.c.bf16 %v126, %v125
    %v129 = vunpack.c.l.b16 %v127
    %v130 = vunpack.c.h.b16 %v127
    %v131 = vpack.c.b16 %v129, %v129
    %v132 = vpack.c.b16 %v130, %v130
    %135 = vst [vmem:[%s3] sm:$0xf] %v131
    %136 = vst [vmem:[%s3 + $0x4] sm:$0xf] %v132
  $region21: #{sentence_pair_classifier_forward.16} parent=0 // pred_fallthru
    _
  // Predicated region
  $region22: #{sentence_pair_classifier_forward.16} parent=0 // pred_check
    _
  $region23: #{sentence_pair_classifier_forward.16} parent=0 // pred_check_branch
    %138 = sbr.rel (0) target = $region25
  $region24: #{sentence_pair_classifier_forward.16} parent=0 // pred_region
    _
  $region25: #{sentence_pair_classifier_forward.16} parent=0 // pred_fallthru
    _
  // Predicated region
  $region26: #{sentence_pair_classifier_forward.16} parent=0 // pred_check
    _
  $region27: #{sentence_pair_classifier_forward.16} parent=0 // pred_check_branch
    %140 = sbr.rel (0) target = $region29
  $region28: #{sentence_pair_classifier_forward.16} parent=0 // pred_region
    _
  $region29: #{sentence_pair_classifier_forward.16} parent=0 // pred_fallthru
    _

// kernel: sentence_pair_classifier_forward.14
$region0: #{sentence_pair_classifier_forward.14}
  #allocation0 [shape = 'u32[]', space=smem, size = 0x4, offset = 0x4, fixed_abs, tag = 'smem constant byte address 0x4 - core index']
  #allocation1 [shape = 'u32[144,128]{1,0:T(1,128)}', space=vmem, size = 0x12000, scoped, tag = 'internal scratch']
  #allocation2 [shape = 'f32[4,8,1]{2,1,0:T(8,128)}', space=vmem, size = 0x4000, scoped, tag = 'scratch operand']
  #allocation3 [shape = 'f32[4,8,1]{2,1,0:T(8,128)}', space=vmem, size = 0x4000, scoped, tag = 'scratch operand']
  #allocation4 [shape = 'f32[8,32]{1,0:T(8,128)}', space=vmem, size = 0x1000, scoped, tag = 'scratch operand']
  %s0 = inlined_call_operand.vmem [shape: bf16[2,8,32], index: 0, kind: input, shape index: {}]
  %s1 = inlined_call_operand.vmem [shape: bf16[2,8,32], index: 1, kind: input, shape index: {}]
  %s2 = inlined_call_operand.vmem [shape: bf16[2,8,32], index: 2, kind: input, shape index: {}]
  %s3 = inlined_call_operand.vmem [shape: f32[2,1,8], index: 3, kind: input, shape index: {}]
  %s4 = inlined_call_operand.vmem [shape: bf16[2,8,32], index: 4, kind: output, shape index: {}]
  %s5 = sld [smem:[#allocation0]]
  $region57: #{sentence_pair_classifier_forward.14} parent=0
    _
  %s7 = ssub.s32 1, %s5
  %s8 = scalar_select 0, %s7, %s5
  loop: start=0, step=1, limit=4
  $region2: #{sentence_pair_classifier_forward.14} parent=0 // loop_pre_header
    _
  $region3: #{sentence_pair_classifier_forward.14} parent=0 // loop_header
    %s10 = sphi 0, %s14
    %p11 = scmp.ge.s32.totalorder %s10, 4
    %s17 = sphi 0, %s36
    %s18 = sphi 0, %s32
    %s19 = sphi 0, %s28
    %s20 = sphi 0, %s17
    %s21 = sphi 0, %s18
    %s22 = sphi 0, %s19
    %s23 = sphi 0, %s20
    %s24 = sphi 0, %s21
    %s25 = sphi 0, %s22
    %s41 = sphi 0, %s43
    %s44 = sphi 0, %s41
    %s45 = sphi 0, %s44
    %s61 = sphi 0, %s45
    %s69 = sphi 0, %s71
    %s72 = sphi 0, %s69
    %s73 = sphi 0, %s72
    %s89 = sphi 0, %s73
    %s97 = sphi 0, %s99
    %s100 = sphi 0, %s97
    %s101 = sphi 0, %s100
    %s117 = sphi 0, %s101
    %s125 = sphi 0, %s127
    %s128 = sphi 0, %s125
    %s129 = sphi 0, %s128
    %s145 = sphi 0, %s129
    %s153 = sphi 0, %s155
    %s156 = sphi 0, %s153
    %s157 = sphi 0, %s156
    %s173 = sphi 0, %s157
  $region4: #{sentence_pair_classifier_forward.14} parent=0 // loop_header_branch
    %13 = sbr.rel (%p11) target = $region8
  $region5: #{sentence_pair_classifier_forward.14} parent=0 // loop_body
    %s15 = ssub.s32 %s10, 1
    %s16 = ssub.s32 %s10, 2
    %s26 = sadd.s32 1, %s19
    %p27 = scmp.ge.s32.totalorder %s26, 1
    %s28 = scalar_select %p27, 0, %s26
    %s29 = sadd.s32 1, %s18
    %s30 = scalar_select %p27, %s29, %s18
    %p31 = scmp.ge.s32.totalorder %s30, 1
    %s32 = scalar_select %p31, 0, %s30
    %s33 = sadd.s32 1, %s17
    %s34 = scalar_select %p31, %s33, %s17
    %p35 = scmp.ge.s32.totalorder %s34, 2
    %s36 = scalar_select %p35, 0, %s34
    %s37 = ssub.s32 %s17, %s36
    %s38 = ssub.s32 %s18, %s32
    %s39 = sor.u32 %s37, %s38
    %p40 = scmp.eq.s32.totalorder %s39, 0
    %s42 = sadd.s32 %s41, 1
    %s43 = scalar_select %p40, %s41, %s42
    %p46 = pneg %p40
    %p47 = scmp.eq.s32.totalorder %s10, 1
    %p48 = por %p46, %p47
    %p49 = scmp.ne.s32.totalorder %s41, %s44
    %p50 = scmp.eq.s32.totalorder %s10, 0
    %p51 = por %p49, %p50
    %p52 = scmp.ne.s32.totalorder %s41, %s44
    %p53 = scmp.eq.s32.totalorder %s15, 1
    %p54 = por %p52, %p53
    %p55 = scmp.ne.s32.totalorder %s44, %s45
    %p56 = scmp.eq.s32.totalorder %s15, 0
    %p57 = por %p55, %p56
    %p58 = scmp.ne.s32.totalorder %s44, %s45
    %p59 = scmp.eq.s32.totalorder %s16, 1
    %p60 = por %p58, %p59
    %p62 = scmp.ne.s32.totalorder %s45, %s61
    %p63 = scmp.eq.s32.totalorder %s16, 0
    %p64 = por %p62, %p63
    %s65 = ssub.s32 %s17, %s36
    %s66 = ssub.s32 %s19, %s28
    %s67 = sor.u32 %s65, %s66
    %p68 = scmp.eq.s32.totalorder %s67, 0
    %s70 = sadd.s32 %s69, 1
    %s71 = scalar_select %p68, %s69, %s70
    %p74 = pneg %p68
    %p75 = scmp.eq.s32.totalorder %s10, 1
    %p76 = por %p74, %p75
    %p77 = scmp.ne.s32.totalorder %s69, %s72
    %p78 = scmp.eq.s32.totalorder %s10, 0
    %p79 = por %p77, %p78
    %p80 = scmp.ne.s32.totalorder %s69, %s72
    %p81 = scmp.eq.s32.totalorder %s15, 1
    %p82 = por %p80, %p81
    %p83 = scmp.ne.s32.totalorder %s72, %s73
    %p84 = scmp.eq.s32.totalorder %s15, 0
    %p85 = por %p83, %p84
    %p86 = scmp.ne.s32.totalorder %s72, %s73
    %p87 = scmp.eq.s32.totalorder %s16, 1
    %p88 = por %p86, %p87
    %p90 = scmp.ne.s32.totalorder %s73, %s89
    %p91 = scmp.eq.s32.totalorder %s16, 0
    %p92 = por %p90, %p91
    %s93 = ssub.s32 %s17, %s36
    %s94 = ssub.s32 %s19, %s28
    %s95 = sor.u32 %s93, %s94
    %p96 = scmp.eq.s32.totalorder %s95, 0
    %s98 = sadd.s32 %s97, 1
    %s99 = scalar_select %p96, %s97, %s98
    %p102 = pneg %p96
    %p103 = scmp.eq.s32.totalorder %s10, 1
    %p104 = por %p102, %p103
    %p105 = scmp.ne.s32.totalorder %s97, %s100
    %p106 = scmp.eq.s32.totalorder %s10, 0
    %p107 = por %p105, %p106
    %p108 = scmp.ne.s32.totalorder %s97, %s100
    %p109 = scmp.eq.s32.totalorder %s15, 1
    %p110 = por %p108, %p109
    %p111 = scmp.ne.s32.totalorder %s100, %s101
    %p112 = scmp.eq.s32.totalorder %s15, 0
    %p113 = por %p111, %p112
    %p114 = scmp.ne.s32.totalorder %s100, %s101
    %p115 = scmp.eq.s32.totalorder %s16, 1
    %p116 = por %p114, %p115
    %p118 = scmp.ne.s32.totalorder %s101, %s117
    %p119 = scmp.eq.s32.totalorder %s16, 0
    %p120 = por %p118, %p119
    %s121 = ssub.s32 %s17, %s36
    %s122 = ssub.s32 %s19, %s28
    %s123 = sor.u32 %s121, %s122
    %p124 = scmp.eq.s32.totalorder %s123, 0
    %s126 = sadd.s32 %s125, 1
    %s127 = scalar_select %p124, %s125, %s126
    %p130 = pneg %p124
    %p131 = scmp.eq.s32.totalorder %s10, 1
    %p132 = por %p130, %p131
    %p133 = scmp.ne.s32.totalorder %s125, %s128
    %p134 = scmp.eq.s32.totalorder %s10, 0
    %p135 = por %p133, %p134
    %p136 = scmp.ne.s32.totalorder %s125, %s128
    %p137 = scmp.eq.s32.totalorder %s15, 1
    %p138 = por %p136, %p137
    %p139 = scmp.ne.s32.totalorder %s128, %s129
    %p140 = scmp.eq.s32.totalorder %s15, 0
    %p141 = por %p139, %p140
    %p142 = scmp.ne.s32.totalorder %s128, %s129
    %p143 = scmp.eq.s32.totalorder %s16, 1
    %p144 = por %p142, %p143
    %p146 = scmp.ne.s32.totalorder %s129, %s145
    %p147 = scmp.eq.s32.totalorder %s16, 0
    %p148 = por %p146, %p147
    %s149 = ssub.s32 %s17, %s36
    %s150 = ssub.s32 %s18, %s32
    %s151 = sor.u32 %s149, %s150
    %p152 = scmp.eq.s32.totalorder %s151, 0
    %s154 = sadd.s32 %s153, 1
    %s155 = scalar_select %p152, %s153, %s154
    %p158 = pneg %p152
    %p159 = scmp.eq.s32.totalorder %s10, 1
    %p160 = por %p158, %p159
    %p161 = scmp.ne.s32.totalorder %s153, %s156
    %p162 = scmp.eq.s32.totalorder %s10, 0
    %p163 = por %p161, %p162
    %p164 = scmp.ne.s32.totalorder %s153, %s156
    %p165 = scmp.eq.s32.totalorder %s15, 1
    %p166 = por %p164, %p165
    %p167 = scmp.ne.s32.totalorder %s156, %s157
    %p168 = scmp.eq.s32.totalorder %s15, 0
    %p169 = por %p167, %p168
    %p170 = scmp.ne.s32.totalorder %s156, %s157
    %p171 = scmp.eq.s32.totalorder %s16, 1
    %p172 = por %p170, %p171
    %p174 = scmp.ne.s32.totalorder %s157, %s173
    %p175 = scmp.eq.s32.totalorder %s16, 0
    %p176 = por %p174, %p175
    %p177 = scmp.le.s32.totalorder 1, %s10
    %p178 = scmp.lt.s32.totalorder %s10, 3
    %p179 = pnand %p177, %p178
    %p180 = pneg %p179
    // Predicated region
    $region9: #{sentence_pair_classifier_forward.14} parent=5 // pred_check
      _
    $region10: #{sentence_pair_classifier_forward.14} parent=5 // pred_check_branch
      %182 = sbr.rel (%p179) target = $region12
    $region11: #{sentence_pair_classifier_forward.14} parent=5 // pred_region
      %s183 = ssub.s32 %s10, 1
    $region12: #{sentence_pair_classifier_forward.14} parent=5 // pred_fallthru
      _
    %p184 = scmp.lt.s32.totalorder %s10, 2
    // Predicated region
    $region13: #{sentence_pair_classifier_forward.14} parent=5 // pred_check
      %p185 = pneg %p184
    $region14: #{sentence_pair_classifier_forward.14} parent=5 // pred_check_branch
      %187 = sbr.rel (%p185) target = $region16
    $region15: #{sentence_pair_classifier_forward.14} parent=5 // pred_region
      // Predicated region
      $region17: #{sentence_pair_classifier_forward.14} parent=15 // pred_check
        %p188 = pneg %p51
      $region18: #{sentence_pair_classifier_forward.14} parent=15 // pred_check_branch
        %190 = sbr.rel (%p188) target = $region20
      $region19: #{sentence_pair_classifier_forward.14} parent=15 // pred_region
        %p191 = scmp.lt.s32.totalorder %s17, 1
        %s192 = scalar_select %p191, %s17, 1
        %p193 = scmp.lt.s32.totalorder %s18, 0
        %s194 = scalar_select %p193, %s18, 0
        %s195 = sadd.s32 %s194, %s192
        %s196 = smul.addr %s195, 4
        %s197 = scalar_lea.vmem %s0, %s196
      $region20: #{sentence_pair_classifier_forward.14} parent=15 // pred_fallthru
        _
      // Predicated region
      $region21: #{sentence_pair_classifier_forward.14} parent=15 // pred_check
        %p198 = pneg %p79
      $region22: #{sentence_pair_classifier_forward.14} parent=15 // pred_check_branch
        %200 = sbr.rel (%p198) target = $region24
      $region23: #{sentence_pair_classifier_forward.14} parent=15 // pred_region
        %p201 = scmp.lt.s32.totalorder %s17, 1
        %s202 = scalar_select %p201, %s17, 1
        %p203 = scmp.lt.s32.totalorder %s19, 0
        %s204 = scalar_select %p203, %s19, 0
        %s205 = sadd.s32 %s204, %s202
        %s206 = smul.addr %s205, 4
        %s207 = scalar_lea.vmem %s1, %s206
      $region24: #{sentence_pair_classifier_forward.14} parent=15 // pred_fallthru
        _
      // Predicated region
      $region25: #{sentence_pair_classifier_forward.14} parent=15 // pred_check
        %p208 = pneg %p107
      $region26: #{sentence_pair_classifier_forward.14} parent=15 // pred_check_branch
        %210 = sbr.rel (%p208) target = $region28
      $region27: #{sentence_pair_classifier_forward.14} parent=15 // pred_region
        %p211 = scmp.lt.s32.totalorder %s17, 1
        %s212 = scalar_select %p211, %s17, 1
        %p213 = scmp.lt.s32.totalorder %s19, 0
        %s214 = scalar_select %p213, %s19, 0
        %s215 = sadd.s32 %s214, %s212
        %s216 = smul.addr %s215, 4
        %s217 = scalar_lea.vmem %s2, %s216
      $region28: #{sentence_pair_classifier_forward.14} parent=15 // pred_fallthru
        _
      // Predicated region
      $region29: #{sentence_pair_classifier_forward.14} parent=15 // pred_check
        %p218 = pneg %p135
      $region30: #{sentence_pair_classifier_forward.14} parent=15 // pred_check_branch
        %220 = sbr.rel (%p218) target = $region32
      $region31: #{sentence_pair_classifier_forward.14} parent=15 // pred_region
        %p221 = scmp.lt.s32.totalorder %s17, 1
        %s222 = scalar_select %p221, %s17, 1
        %p223 = scmp.lt.s32.totalorder %s19, 0
        %s224 = scalar_select %p223, %s19, 0
        %s225 = sadd.s32 %s224, %s222
        %s226 = scalar_lea.vmem %s3, %s225
      $region32: #{sentence_pair_classifier_forward.14} parent=15 // pred_fallthru
        _
    $region16: #{sentence_pair_classifier_forward.14} parent=5 // pred_fallthru
      _
    %p227 = scmp.le.s32.totalorder 1, %s10
    %p228 = scmp.lt.s32.totalorder %s10, 3
    %p229 = pnand %p227, %p228
    %p230 = pneg %p229
    // Predicated region
    $region33: #{sentence_pair_classifier_forward.14} parent=5 // pred_check
      _
    $region34: #{sentence_pair_classifier_forward.14} parent=5 // pred_check_branch
      %232 = sbr.rel (%p229) target = $region36
    $region35: #{sentence_pair_classifier_forward.14} parent=5 // pred_region
      %s233 = ssub.s32 %s10, 1
      %p234 = scmp.lt.s32.totalorder %s20, 1
      %s235 = scalar_select %p234, %s20, 1
      %p236 = scmp.lt.s32.totalorder %s21, 0
      %s237 = scalar_select %p236, %s21, 0
      %s238 = sadd.s32 %s237, %s235
      %s239 = smul.addr %s238, 4
      %s240 = scalar_lea.vmem %s0, %s239
      %p241 = pneg %p57
      %p242 = pneg %p54
      %p243 = scmp.lt.s32.totalorder %s20, 1
      %s244 = scalar_select %p243, %s20, 1
      %p245 = scmp.lt.s32.totalorder %s22, 0
      %s246 = scalar_select %p245, %s22, 0
      %s247 = sadd.s32 %s246, %s244
      %s248 = smul.addr %s247, 4
      %s249 = scalar_lea.vmem %s1, %s248
      %p250 = pneg %p85
      %p251 = pneg %p82
      %p252 = scmp.lt.s32.totalorder %s20, 1
      %s253 = scalar_select %p252, %s20, 1
      %p254 = scmp.lt.s32.totalorder %s22, 0
      %s255 = scalar_select %p254, %s22, 0
      %s256 = sadd.s32 %s255, %s253
      %s257 = smul.addr %s256, 4
      %s258 = scalar_lea.vmem %s2, %s257
      %p259 = pneg %p113
      %p260 = pneg %p110
      %p261 = scmp.lt.s32.totalorder %s20, 1
      %s262 = scalar_select %p261, %s20, 1
      %p263 = scmp.lt.s32.totalorder %s22, 0
      %s264 = scalar_select %p263, %s22, 0
      %s265 = sadd.s32 %s264, %s262
      %s266 = scalar_lea.vmem %s3, %s265
      %p267 = pneg %p141
      %p268 = pneg %p138
      %p269 = pneg %p169
      %p270 = pneg %p166
      %p271 = scmp.lt.s32.totalorder %s20, 1
      %s272 = scalar_select %p271, %s20, 1
      %p273 = scmp.lt.s32.totalorder %s21, 0
      %s274 = scalar_select %p273, %s21, 0
      %s275 = sadd.s32 %s274, %s272
      %s276 = smul.addr %s275, 4
      %s277 = scalar_lea.vmem %s4, %s276
      %p278 = scmp.lt.s32.totalorder %s20, 1
      %s279 = scalar_select %p278, %s20, 1
      %p280 = scmp.lt.s32.totalorder %s21, 0
      %s281 = scalar_select %p280, %s21, 0
      %s282 = sadd.s32 %s281, %s279
      %s283 = smul.addr %s282, 4
      %s284 = scalar_lea.vmem %s0, %s283
      %p285 = scmp.lt.s32.totalorder %s20, 1
      %s286 = scalar_select %p285, %s20, 1
      %p287 = scmp.lt.s32.totalorder %s22, 0
      %s288 = scalar_select %p287, %s22, 0
      %s289 = sadd.s32 %s288, %s286
      %s290 = smul.addr %s289, 4
      %s291 = scalar_lea.vmem %s1, %s290
      %p292 = scmp.lt.s32.totalorder %s20, 1
      %s293 = scalar_select %p292, %s20, 1
      %p294 = scmp.lt.s32.totalorder %s22, 0
      %s295 = scalar_select %p294, %s22, 0
      %s296 = sadd.s32 %s295, %s293
      %s297 = smul.addr %s296, 4
      %s298 = scalar_lea.vmem %s2, %s297
      %p299 = scmp.lt.s32.totalorder %s20, 1
      %s300 = scalar_select %p299, %s20, 1
      %p301 = scmp.lt.s32.totalorder %s22, 0
      %s302 = scalar_select %p301, %s22, 0
      %s303 = sadd.s32 %s302, %s300
      %s304 = scalar_lea.vmem %s3, %s303
      %p305 = scmp.lt.s32.totalorder %s20, 1
      %s306 = scalar_select %p305, %s20, 1
      %p307 = scmp.lt.s32.totalorder %s21, 0
      %s308 = scalar_select %p307, %s21, 0
      %s309 = sadd.s32 %s308, %s306
      %s310 = smul.addr %s309, 4
      %s311 = scalar_lea.vmem %s4, %s310
      %p313 = scmp.eq.s32.totalorder %s22, 0
      // Predicated region
      $region37: #{sentence_pair_classifier_forward.14} parent=35 // pred_check
        %p314 = pneg %p313
      $region38: #{sentence_pair_classifier_forward.14} parent=35 // pred_check_branch
        %316 = sbr.rel (%p314) target = $region40
      $region39: #{sentence_pair_classifier_forward.14} parent=35 // pred_region
        %vm317 = vcmask 7168
        %318 = vst.msk [vmem:[#allocation2] sm:$0xff] %vm317, -inf
        %319 = vst.msk [vmem:[#allocation2 + $0x8] sm:$0xff] %vm317, -inf
        %320 = vst.msk [vmem:[#allocation2 + $0x10] sm:$0xff] %vm317, -inf
        %321 = vst.msk [vmem:[#allocation2 + $0x18] sm:$0xff] %vm317, -inf
        %322 = vst.msk [vmem:[#allocation3] sm:$0xff] %vm317, 0.0
        %323 = vst.msk [vmem:[#allocation3 + $0x8] sm:$0xff] %vm317, 0.0
        %324 = vst.msk [vmem:[#allocation3 + $0x10] sm:$0xff] %vm317, 0.0
        %325 = vst.msk [vmem:[#allocation3 + $0x18] sm:$0xff] %vm317, 0.0
        %vm326 = vcmask 261120
        %327 = vst.msk [vmem:[#allocation4] sm:$0xff] %vm326, 0.0
      $region40: #{sentence_pair_classifier_forward.14} parent=35 // pred_fallthru
        _
      %v328 = vld [vmem:[%s284] sm:$0xf]
      %v329 = vld [vmem:[%s291] sm:$0xf]
      %v330 = vld [vmem:[%s298] sm:$0xf]
      %v331 = vld [vmem:[%s304] sm:$0x1]
      %vm332 = vcmask 64512
      %v334 = vsel %vm332, %v328, 0
      %v337 = vsel %vm332, %v329, 0
      %339 = vmatprep.subr.bf16.mxu0 0
      %340 = vmatpush1.bf16.xpose.msra.mxu0 %v337
      %341 = vmatprep.subr.bf16.mxu0 0
      %342 = vmatpush1.bf16.xpose.msra.mxu0 0
      %343 = vmatprep.subr.bf16.mxu0 0
      %344 = vmatpush1.bf16.xpose.msra.mxu0 0
      %345 = vmatprep.subr.bf16.mxu0 0
      %346 = vmatpush1.bf16.xpose.msra.mxu0 0
      %347 = vmatprep.subr.bf16.mxu0 0
      %348 = vmatpush1.bf16.xpose.msra.mxu0 0
      %349 = vmatprep.subr.bf16.mxu0 0
      %350 = vmatpush1.bf16.xpose.msra.mxu0 0
      %351 = vmatprep.subr.bf16.mxu0 0
      %352 = vmatpush1.bf16.xpose.msra.mxu0 0
      %353 = vmatprep.subr.bf16.mxu0 0
      %354 = vmatpush1.bf16.xpose.msra.mxu0 0
      %355 = vmatprep.subr.bf16.mxu0 0
      %356 = vmatpush1.bf16.xpose.msra.mxu0 0
      %357 = vmatprep.subr.bf16.mxu0 0
      %358 = vmatpush1.bf16.xpose.msra.mxu0 0
      %359 = vmatprep.subr.bf16.mxu0 0
      %360 = vmatpush1.bf16.xpose.msra.mxu0 0
      %361 = vmatprep.subr.bf16.mxu0 0
      %362 = vmatpush1.bf16.xpose.msra.mxu0 0
      %363 = vmatprep.subr.bf16.mxu0 0
      %364 = vmatpush1.bf16.xpose.msra.mxu0 0
      %365 = vmatprep.subr.bf16.mxu0 0
      %366 = vmatpush1.bf16.xpose.msra.mxu0 0
      %367 = vmatprep.subr.bf16.mxu0 0
      %368 = vmatpush1.bf16.xpose.msra.mxu0 0
      %369 = vmatprep.subr.bf16.mxu0 0
      %370 = vmatpush1.bf16.xpose.msra.mxu0 0
      %371 = vmatprep.mubr.bf16.mxu0 0
      %372 = vmatmul.mubr.bf16.gmra.mrb[0].mxu0 %v334
      %v373 = vpop.f32.mrb[0].mxu0
      %v374 = vadd.f32 0.0, %v373
      %v375 = vpop.f32.mrb[0].mxu0
      %v376 = vpop.f32.mrb[0].mxu0
      %v377 = vpop.f32.mrb[0].mxu0
      %378 = vdwg.mxu0
      %v379 = vmul.f32 %v374, 0.35355338
      %v381 = vlaneseq
      %v382 = vshrl.u32 %v381, 7
      %v383 = vsub.s32 0, %v382
      %v384 = vrot.slane %v331, %v383
      %v386 = vadd.f32 %v379, %v384
      %v387 = vld [vmem:[#allocation2] sm:$0xff]
      %v388 = vsel %vm332, %v386, -inf
      %389 = vmax.xlane.f32.xlu0 %v388
      %v390 = vpop.xlane.xlu0 %389
      %v391 = vmax.f32 %v387, %v390
      %v392 = vsub.f32 %v387, %v391
      %v393 = vmul.f32 %v392, 1.442695
      %v394 = vpow.pop %v393
      %396 = vset.pattern.permute.xlu0 0
      %397 = vperm.xlu0 %396, %v391
      %v398 = vpop.permute.xlu0 %397
      %v400 = vsub.f32 %v386, %v398
      %v401 = vmul.f32 %v400, 1.442695
      %v402 = vpow.pop %v401
      %v403 = vld [vmem:[#allocation3] sm:$0xff]
      %v404 = vmul.f32 %v394, %v403
      %v405 = vsel %vm332, %v402, 0.0
      %406 = vadd.xlane.f32.xlu0 %v405
      %v407 = vpop.xlane.xlu0 %406
      %v408 = vadd.f32 %v404, %v407
      %vm409 = vcmask 7168
      %410 = vst.msk [vmem:[#allocation3] sm:$0xff] %vm409, %v408
      %v411 = vld [vmem:[#allocation4] sm:$0xff]
      %413 = vset.pattern.permute.xlu0 0
      %414 = vperm.xlu0 %413, %v394
      %v415 = vpop.permute.xlu0 %414
      %v417 = vmul.f32 %v415, %v411
      %v418 = vpack.c.bf16 %v402, %v402
      %v420 = vsel %vm332, %v418, 0
      %vm422 = vcmask 1043456
      %v424 = vsel %vm422, %v330, 0
      %426 = vmatprep.subr.bf16.mxu0 0
      %427 = vmatpush1.bf16.msra.mxu0 %v424
      %428 = vmatprep.subr.bf16.mxu0 0
      %429 = vmatpush1.bf16.msra.mxu0 0
      %430 = vmatprep.subr.bf16.mxu0 0
      %431 = vmatpush1.bf16.msra.mxu0 0
      %432 = vmatprep.subr.bf16.mxu0 0
      %433 = vmatpush1.bf16.msra.mxu0 0
      %434 = vmatprep.subr.bf16.mxu0 0
      %435 = vmatpush1.bf16.msra.mxu0 0
      %436 = vmatprep.subr.bf16.mxu0 0
      %437 = vmatpush1.bf16.msra.mxu0 0
      %438 = vmatprep.subr.bf16.mxu0 0
      %439 = vmatpush1.bf16.msra.mxu0 0
      %440 = vmatprep.subr.bf16.mxu0 0
      %441 = vmatpush1.bf16.msra.mxu0 0
      %442 = vmatprep.subr.bf16.mxu0 0
      %443 = vmatpush1.bf16.msra.mxu0 0
      %444 = vmatprep.subr.bf16.mxu0 0
      %445 = vmatpush1.bf16.msra.mxu0 0
      %446 = vmatprep.subr.bf16.mxu0 0
      %447 = vmatpush1.bf16.msra.mxu0 0
      %448 = vmatprep.subr.bf16.mxu0 0
      %449 = vmatpush1.bf16.msra.mxu0 0
      %450 = vmatprep.subr.bf16.mxu0 0
      %451 = vmatpush1.bf16.msra.mxu0 0
      %452 = vmatprep.subr.bf16.mxu0 0
      %453 = vmatpush1.bf16.msra.mxu0 0
      %454 = vmatprep.subr.bf16.mxu0 0
      %455 = vmatpush1.bf16.msra.mxu0 0
      %456 = vmatprep.subr.bf16.mxu0 0
      %457 = vmatpush1.bf16.msra.mxu0 0
      %458 = vmatprep.mubr.bf16.mxu0 0
      %459 = vmatmul.mubr.bf16.gmra.mrb[0].mxu0 %v420
      %v460 = vpop.f32.mrb[0].mxu0
      %v461 = vadd.f32 0.0, %v460
      %v462 = vpop.f32.mrb[0].mxu0
      %v463 = vpop.f32.mrb[0].mxu0
      %v464 = vpop.f32.mrb[0].mxu0
      %465 = vdwg.mxu0
      %v466 = vadd.f32 %v417, %v461
      %467 = vst.msk [vmem:[#allocation4] sm:$0xff] %vm332, %v466
      %468 = vst.msk [vmem:[#allocation2] sm:$0xff] %vm409, %v391
      %v470 = vunpack.c.l.b16 %v328
      %v471 = vpack.c.b16 %v470, %v470
      %472 = vrot.lane.b32.xlu0 %v471, 120
      %v473 = vpop.permute.xlu0 %472
      %v475 = vunpack.c.l.b16 %v329
      %v476 = vpack.c.b16 %v475, %v475
      %477 = vrot.lane.b32.xlu0 %v476, 120
      %v478 = vpop.permute.xlu0 %477
      %v480 = vsel %vm332, %v473, 0
      %v483 = vsel %vm332, %v478, 0
      %485 = vmatprep.subr.bf16.mxu0 0
      %486 = vmatpush1.bf16.xpose.msra.mxu0 %v483
      %487 = vmatprep.subr.bf16.mxu0 0
      %488 = vmatpush1.bf16.xpose.msra.mxu0 0
      %489 = vmatprep.subr.bf16.mxu0 0
      %490 = vmatpush1.bf16.xpose.msra.mxu0 0
      %491 = vmatprep.subr.bf16.mxu0 0
      %492 = vmatpush1.bf16.xpose.msra.mxu0 0
      %493 = vmatprep.subr.bf16.mxu0 0
      %494 = vmatpush1.bf16.xpose.msra.mxu0 0
      %495 = vmatprep.subr.bf16.mxu0 0
      %496 = vmatpush1.bf16.xpose.msra.mxu0 0
      %497 = vmatprep.subr.bf16.mxu0 0
      %498 = vmatpush1.bf16.xpose.msra.mxu0 0
      %499 = vmatprep.subr.bf16.mxu0 0
      %500 = vmatpush1.bf16.xpose.msra.mxu0 0
      %501 = vmatprep.subr.bf16.mxu0 0
      %502 = vmatpush1.bf16.xpose.msra.mxu0 0
      %503 = vmatprep.subr.bf16.mxu0 0
      %504 = vmatpush1.bf16.xpose.msra.mxu0 0
      %505 = vmatprep.subr.bf16.mxu0 0
      %506 = vmatpush1.bf16.xpose.msra.mxu0 0
      %507 = vmatprep.subr.bf16.mxu0 0
      %508 = vmatpush1.bf16.xpose.msra.mxu0 0
      %509 = vmatprep.subr.bf16.mxu0 0
      %510 = vmatpush1.bf16.xpose.msra.mxu0 0
      %511 = vmatprep.subr.bf16.mxu0 0
      %512 = vmatpush1.bf16.xpose.msra.mxu0 0
      %513 = vmatprep.subr.bf16.mxu0 0
      %514 = vmatpush1.bf16.xpose.msra.mxu0 0
      %515 = vmatprep.subr.bf16.mxu0 0
      %516 = vmatpush1.bf16.xpose.msra.mxu0 0
      %517 = vmatprep.mubr.bf16.mxu0 0
      %518 = vmatmul.mubr.bf16.gmra.mrb[0].mxu0 %v480
      %v519 = vpop.f32.mrb[0].mxu0
      %v520 = vadd.f32 0.0, %v519
      %v521 = vpop.f32.mrb[0].mxu0
      %v522 = vpop.f32.mrb[0].mxu0
      %v523 = vpop.f32.mrb[0].mxu0
      %524 = vdwg.mxu0
      %v525 = vmul.f32 %v520, 0.35355338
      %v526 = vadd.f32 %v525, %v384
      %s527 = scalar_lea.vmem [#allocation2], 8
      %v528 = vld [vmem:[%s527] sm:$0xff]
      %v529 = vsel %vm332, %v526, -inf
      %530 = vmax.xlane.f32.xlu0 %v529
      %v531 = vpop.xlane.xlu0 %530
      %v532 = vmax.f32 %v528, %v531
      %v533 = vsub.f32 %v528, %v532
      %v534 = vmul.f32 %v533, 1.442695
      %v535 = vpow.pop %v534
      %537 = vset.pattern.permute.xlu0 0
      %538 = vperm.xlu0 %537, %v532
      %v539 = vpop.permute.xlu0 %538
      %v541 = vsub.f32 %v526, %v539
      %v542 = vmul.f32 %v541, 1.442695
      %v543 = vpow.pop %v542
      %s544 = scalar_lea.vmem [#allocation3], 8
      %v545 = vld [vmem:[%s544] sm:$0xff]
      %v546 = vmul.f32 %v535, %v545
      %v547 = vsel %vm332, %v543, 0.0
      %548 = vadd.xlane.f32.xlu0 %v547
      %v549 = vpop.xlane.xlu0 %548
      %v550 = vadd.f32 %v546, %v549
      %551 = vst.msk [vmem:[%s544] sm:$0xff] %vm409, %v550
      %v552 = vld [vmem:[#allocation4] sm:$0xff]
      %554 = vset.pattern.permute.xlu0 0
      %555 = vperm.xlu0 %554, %v535
      %v556 = vpop.permute.xlu0 %555
      %v558 = vmul.f32 %v556, %v552
      %v559 = vpack.c.bf16 %v543, %v543
      %v561 = vunpack.c.l.b16 %v330
      %v562 = vpack.c.b16 %v561, %v561
      %563 = vrot.lane.b32.xlu0 %v562, 120
      %v564 = vpop.permute.xlu0 %563
      %v566 = vsel %vm332, %v559, 0
      %v569 = vsel %vm422, %v564, 0
      %571 = vmatprep.subr.bf16.mxu0 0
      %572 = vmatpush1.bf16.msra.mxu0 %v569
      %573 = vmatprep.subr.bf16.mxu0 0
      %574 = vmatpush1.bf16.msra.mxu0 0
      %575 = vmatprep.subr.bf16.mxu0 0
      %576 = vmatpush1.bf16.msra.mxu0 0
      %577 = vmatprep.subr.bf16.mxu0 0
      %578 = vmatpush1.bf16.msra.mxu0 0
      %579 = vmatprep.subr.bf16.mxu0 0
      %580 = vmatpush1.bf16.msra.mxu0 0
      %581 = vmatprep.subr.bf16.mxu0 0
      %582 = vmatpush1.bf16.msra.mxu0 0
      %583 = vmatprep.subr.bf16.mxu0 0
      %584 = vmatpush1.bf16.msra.mxu0 0
      %585 = vmatprep.subr.bf16.mxu0 0
      %586 = vmatpush1.bf16.msra.mxu0 0
      %587 = vmatprep.subr.bf16.mxu0 0
      %588 = vmatpush1.bf16.msra.mxu0 0
      %589 = vmatprep.subr.bf16.mxu0 0
      %590 = vmatpush1.bf16.msra.mxu0 0
      %591 = vmatprep.subr.bf16.mxu0 0
      %592 = vmatpush1.bf16.msra.mxu0 0
      %593 = vmatprep.subr.bf16.mxu0 0
      %594 = vmatpush1.bf16.msra.mxu0 0
      %595 = vmatprep.subr.bf16.mxu0 0
      %596 = vmatpush1.bf16.msra.mxu0 0
      %597 = vmatprep.subr.bf16.mxu0 0
      %598 = vmatpush1.bf16.msra.mxu0 0
      %599 = vmatprep.subr.bf16.mxu0 0
      %600 = vmatpush1.bf16.msra.mxu0 0
      %601 = vmatprep.subr.bf16.mxu0 0
      %602 = vmatpush1.bf16.msra.mxu0 0
      %603 = vmatprep.mubr.bf16.mxu0 0
      %604 = vmatmul.mubr.bf16.gmra.mrb[0].mxu0 %v566
      %v605 = vpop.f32.mrb[0].mxu0
      %v606 = vadd.f32 0.0, %v605
      %v607 = vpop.f32.mrb[0].mxu0
      %v608 = vpop.f32.mrb[0].mxu0
      %v609 = vpop.f32.mrb[0].mxu0
      %610 = vdwg.mxu0
      %612 = vrot.lane.b32.xlu0 %v606, 8
      %v613 = vpop.permute.xlu0 %612
      %v615 = vadd.f32 %v558, %v613
      %vm616 = vcmask 130112
      %617 = vst.msk [vmem:[#allocation4] sm:$0xff] %vm616, %v615
      %618 = vst.msk [vmem:[%s527] sm:$0xff] %vm409, %v532
      %619 = vrot.lane.b32.xlu0 %v471, 112
      %v620 = vpop.permute.xlu0 %619
      %621 = vrot.lane.b32.xlu0 %v476, 112
      %v622 = vpop.permute.xlu0 %621
      %v624 = vsel %vm332, %v620, 0
      %v627 = vsel %vm332, %v622, 0
      %629 = vmatprep.subr.bf16.mxu0 0
      %630 = vmatpush1.bf16.xpose.msra.mxu0 %v627
      %631 = vmatprep.subr.bf16.mxu0 0
      %632 = vmatpush1.bf16.xpose.msra.mxu0 0
      %633 = vmatprep.subr.bf16.mxu0 0
      %634 = vmatpush1.bf16.xpose.msra.mxu0 0
      %635 = vmatprep.subr.bf16.mxu0 0
      %636 = vmatpush1.bf16.xpose.msra.mxu0 0
      %637 = vmatprep.subr.bf16.mxu0 0
      %638 = vmatpush1.bf16.xpose.msra.mxu0 0
      %639 = vmatprep.subr.bf16.mxu0 0
      %640 = vmatpush1.bf16.xpose.msra.mxu0 0
      %641 = vmatprep.subr.bf16.mxu0 0
      %642 = vmatpush1.bf16.xpose.msra.mxu0 0
      %643 = vmatprep.subr.bf16.mxu0 0
      %644 = vmatpush1.bf16.xpose.msra.mxu0 0
      %645 = vmatprep.subr.bf16.mxu0 0
      %646 = vmatpush1.bf16.xpose.msra.mxu0 0
      %647 = vmatprep.subr.bf16.mxu0 0
      %648 = vmatpush1.bf16.xpose.msra.mxu0 0
      %649 = vmatprep.subr.bf16.mxu0 0
      %650 = vmatpush1.bf16.xpose.msra.mxu0 0
      %651 = vmatprep.subr.bf16.mxu0 0
      %652 = vmatpush1.bf16.xpose.msra.mxu0 0
      %653 = vmatprep.subr.bf16.mxu0 0
      %654 = vmatpush1.bf16.xpose.msra.mxu0 0
      %655 = vmatprep.subr.bf16.mxu0 0
      %656 = vmatpush1.bf16.xpose.msra.mxu0 0
      %657 = vmatprep.subr.bf16.mxu0 0
      %658 = vmatpush1.bf16.xpose.msra.mxu0 0
      %659 = vmatprep.subr.bf16.mxu0 0
      %660 = vmatpush1.bf16.xpose.msra.mxu0 0
      %661 = vmatprep.mubr.bf16.mxu0 0
      %662 = vmatmul.mubr.bf16.gmra.mrb[0].mxu0 %v624
      %v663 = vpop.f32.mrb[0].mxu0
      %v664 = vadd.f32 0.0, %v663
      %v665 = vpop.f32.mrb[0].mxu0
      %v666 = vpop.f32.mrb[0].mxu0
      %v667 = vpop.f32.mrb[0].mxu0
      %668 = vdwg.mxu0
      %v669 = vmul.f32 %v664, 0.35355338
      %v670 = vadd.f32 %v669, %v384
      %s671 = scalar_lea.vmem [#allocation2], 16
      %v672 = vld [vmem:[%s671] sm:$0xff]
      %v673 = vsel %vm332, %v670, -inf
      %674 = vmax.xlane.f32.xlu0 %v673
      %v675 = vpop.xlane.xlu0 %674
      %v676 = vmax.f32 %v672, %v675
      %v677 = vsub.f32 %v672, %v676
      %v678 = vmul.f32 %v677, 1.442695
      %v679 = vpow.pop %v678
      %681 = vset.pattern.permute.xlu0 0
      %682 = vperm.xlu0 %681, %v676
      %v683 = vpop.permute.xlu0 %682
      %v685 = vsub.f32 %v670, %v683
      %v686 = vmul.f32 %v685, 1.442695
      %v687 = vpow.pop %v686
      %s688 = scalar_lea.vmem [#allocation3], 16
      %v689 = vld [vmem:[%s688] sm:$0xff]
      %v690 = vmul.f32 %v679, %v689
      %v691 = vsel %vm332, %v687, 0.0
      %692 = vadd.xlane.f32.xlu0 %v691
      %v693 = vpop.xlane.xlu0 %692
      %v694 = vadd.f32 %v690, %v693
      %695 = vst.msk [vmem:[%s688] sm:$0xff] %vm409, %v694
      %v696 = vld [vmem:[#allocation4] sm:$0xff]
      %698 = vset.pattern.permute.xlu0 0
      %699 = vperm.xlu0 %698, %v679
      %v700 = vpop.permute.xlu0 %699
      %v702 = vmul.f32 %v700, %v696
      %v703 = vpack.c.bf16 %v687, %v687
      %704 = vrot.lane.b32.xlu0 %v562, 112
      %v705 = vpop.permute.xlu0 %704
      %v707 = vsel %vm332, %v703, 0
      %v710 = vsel %vm422, %v705, 0
      %712 = vmatprep.subr.bf16.mxu0 0
      %713 = vmatpush1.bf16.msra.mxu0 %v710
      %714 = vmatprep.subr.bf16.mxu0 0
      %715 = vmatpush1.bf16.msra.mxu0 0
      %716 = vmatprep.subr.bf16.mxu0 0
      %717 = vmatpush1.bf16.msra.mxu0 0
      %718 = vmatprep.subr.bf16.mxu0 0
      %719 = vmatpush1.bf16.msra.mxu0 0
      %720 = vmatprep.subr.bf16.mxu0 0
      %721 = vmatpush1.bf16.msra.mxu0 0
      %722 = vmatprep.subr.bf16.mxu0 0
      %723 = vmatpush1.bf16.msra.mxu0 0
      %724 = vmatprep.subr.bf16.mxu0 0
      %725 = vmatpush1.bf16.msra.mxu0 0
      %726 = vmatprep.subr.bf16.mxu0 0
      %727 = vmatpush1.bf16.msra.mxu0 0
      %728 = vmatprep.subr.bf16.mxu0 0
      %729 = vmatpush1.bf16.msra.mxu0 0
      %730 = vmatprep.subr.bf16.mxu0 0
      %731 = vmatpush1.bf16.msra.mxu0 0
      %732 = vmatprep.subr.bf16.mxu0 0
      %733 = vmatpush1.bf16.msra.mxu0 0
      %734 = vmatprep.subr.bf16.mxu0 0
      %735 = vmatpush1.bf16.msra.mxu0 0
      %736 = vmatprep.subr.bf16.mxu0 0
      %737 = vmatpush1.bf16.msra.mxu0 0
      %738 = vmatprep.subr.bf16.mxu0 0
      %739 = vmatpush1.bf16.msra.mxu0 0
      %740 = vmatprep.subr.bf16.mxu0 0
      %741 = vmatpush1.bf16.msra.mxu0 0
      %742 = vmatprep.subr.bf16.mxu0 0
      %743 = vmatpush1.bf16.msra.mxu0 0
      %744 = vmatprep.mubr.bf16.mxu0 0
      %745 = vmatmul.mubr.bf16.gmra.mrb[0].mxu0 %v707
      %v746 = vpop.f32.mrb[0].mxu0
      %v747 = vadd.f32 0.0, %v746
      %v748 = vpop.f32.mrb[0].mxu0
      %v749 = vpop.f32.mrb[0].mxu0
      %v750 = vpop.f32.mrb[0].mxu0
      %751 = vdwg.mxu0
      %753 = vrot.lane.b32.xlu0 %v747, 16
      %v754 = vpop.permute.xlu0 %753
      %v756 = vadd.f32 %v702, %v754
      %vm757 = vcmask 195712
      %758 = vst.msk [vmem:[#allocation4] sm:$0xff] %vm757, %v756
      %759 = vst.msk [vmem:[%s671] sm:$0xff] %vm409, %v676
      %760 = vrot.lane.b32.xlu0 %v471, 104
      %v761 = vpop.permute.xlu0 %760
      %762 = vrot.lane.b32.xlu0 %v476, 104
      %v763 = vpop.permute.xlu0 %762
      %v765 = vsel %vm332, %v761, 0
      %v768 = vsel %vm332, %v763, 0
      %770 = vmatprep.subr.bf16.mxu0 0
      %771 = vmatpush1.bf16.xpose.msra.mxu0 %v768
      %772 = vmatprep.subr.bf16.mxu0 0
      %773 = vmatpush1.bf16.xpose.msra.mxu0 0
      %774 = vmatprep.subr.bf16.mxu0 0
      %775 = vmatpush1.bf16.xpose.msra.mxu0 0
      %776 = vmatprep.subr.bf16.mxu0 0
      %777 = vmatpush1.bf16.xpose.msra.mxu0 0
      %778 = vmatprep.subr.bf16.mxu0 0
      %779 = vmatpush1.bf16.xpose.msra.mxu0 0
      %780 = vmatprep.subr.bf16.mxu0 0
      %781 = vmatpush1.bf16.xpose.msra.mxu0 0
      %782 = vmatprep.subr.bf16.mxu0 0
      %783 = vmatpush1.bf16.xpose.msra.mxu0 0
      %784 = vmatprep.subr.bf16.mxu0 0
      %785 = vmatpush1.bf16.xpose.msra.mxu0 0
      %786 = vmatprep.subr.bf16.mxu0 0
      %787 = vmatpush1.bf16.xpose.msra.mxu0 0
      %788 = vmatprep.subr.bf16.mxu0 0
      %789 = vmatpush1.bf16.xpose.msra.mxu0 0
      %790 = vmatprep.subr.bf16.mxu0 0
      %791 = vmatpush1.bf16.xpose.msra.mxu0 0
      %792 = vmatprep.subr.bf16.mxu0 0
      %793 = vmatpush1.bf16.xpose.msra.mxu0 0
      %794 = vmatprep.subr.bf16.mxu0 0
      %795 = vmatpush1.bf16.xpose.msra.mxu0 0
      %796 = vmatprep.subr.bf16.mxu0 0
      %797 = vmatpush1.bf16.xpose.msra.mxu0 0
      %798 = vmatprep.subr.bf16.mxu0 0
      %799 = vmatpush1.bf16.xpose.msra.mxu0 0
      %800 = vmatprep.subr.bf16.mxu0 0
      %801 = vmatpush1.bf16.xpose.msra.mxu0 0
      %802 = vmatprep.mubr.bf16.mxu0 0
      %803 = vmatmul.mubr.bf16.gmra.mrb[0].mxu0 %v765
      %v804 = vpop.f32.mrb[0].mxu0
      %v805 = vadd.f32 0.0, %v804
      %v806 = vpop.f32.mrb[0].mxu0
      %v807 = vpop.f32.mrb[0].mxu0
      %v808 = vpop.f32.mrb[0].mxu0
      %809 = vdwg.mxu0
      %v810 = vmul.f32 %v805, 0.35355338
      %v811 = vadd.f32 %v810, %v384
      %s812 = scalar_lea.vmem [#allocation2], 24
      %v813 = vld [vmem:[%s812] sm:$0xff]
      %v814 = vsel %vm332, %v811, -inf
      %815 = vmax.xlane.f32.xlu0 %v814
      %v816 = vpop.xlane.xlu0 %815
      %v817 = vmax.f32 %v813, %v816
      %v818 = vsub.f32 %v813, %v817
      %v819 = vmul.f32 %v818, 1.442695
      %v820 = vpow.pop %v819
      %822 = vset.pattern.permute.xlu0 0
      %823 = vperm.xlu0 %822, %v817
      %v824 = vpop.permute.xlu0 %823
      %v826 = vsub.f32 %v811, %v824
      %v827 = vmul.f32 %v826, 1.442695
      %v828 = vpow.pop %v827
      %s829 = scalar_lea.vmem [#allocation3], 24
      %v830 = vld [vmem:[%s829] sm:$0xff]
      %v831 = vmul.f32 %v820, %v830
      %v832 = vsel %vm332, %v828, 0.0
      %833 = vadd.xlane.f32.xlu0 %v832
      %v834 = vpop.xlane.xlu0 %833
      %v835 = vadd.f32 %v831, %v834
      %836 = vst.msk [vmem:[%s829] sm:$0xff] %vm409, %v835
      %v837 = vld [vmem:[#allocation4] sm:$0xff]
      %839 = vset.pattern.permute.xlu0 0
      %840 = vperm.xlu0 %839, %v820
      %v841 = vpop.permute.xlu0 %840
      %v843 = vmul.f32 %v841, %v837
      %v844 = vpack.c.bf16 %v828, %v828
      %845 = vrot.lane.b32.xlu0 %v562, 104
      %v846 = vpop.permute.xlu0 %845
      %v848 = vsel %vm332, %v844, 0
      %v851 = vsel %vm422, %v846, 0
      %853 = vmatprep.subr.bf16.mxu0 0
      %854 = vmatpush1.bf16.msra.mxu0 %v851
      %855 = vmatprep.subr.bf16.mxu0 0
      %856 = vmatpush1.bf16.msra.mxu0 0
      %857 = vmatprep.subr.bf16.mxu0 0
      %858 = vmatpush1.bf16.msra.mxu0 0
      %859 = vmatprep.subr.bf16.mxu0 0
      %860 = vmatpush1.bf16.msra.mxu0 0
      %861 = vmatprep.subr.bf16.mxu0 0
      %862 = vmatpush1.bf16.msra.mxu0 0
      %863 = vmatprep.subr.bf16.mxu0 0
      %864 = vmatpush1.bf16.msra.mxu0 0
      %865 = vmatprep.subr.bf16.mxu0 0
      %866 = vmatpush1.bf16.msra.mxu0 0
      %867 = vmatprep.subr.bf16.mxu0 0
      %868 = vmatpush1.bf16.msra.mxu0 0
      %869 = vmatprep.subr.bf16.mxu0 0
      %870 = vmatpush1.bf16.msra.mxu0 0
      %871 = vmatprep.subr.bf16.mxu0 0
      %872 = vmatpush1.bf16.msra.mxu0 0
      %873 = vmatprep.subr.bf16.mxu0 0
      %874 = vmatpush1.bf16.msra.mxu0 0
      %875 = vmatprep.subr.bf16.mxu0 0
      %876 = vmatpush1.bf16.msra.mxu0 0
      %877 = vmatprep.subr.bf16.mxu0 0
      %878 = vmatpush1.bf16.msra.mxu0 0
      %879 = vmatprep.subr.bf16.mxu0 0
      %880 = vmatpush1.bf16.msra.mxu0 0
      %881 = vmatprep.subr.bf16.mxu0 0
      %882 = vmatpush1.bf16.msra.mxu0 0
      %883 = vmatprep.subr.bf16.mxu0 0
      %884 = vmatpush1.bf16.msra.mxu0 0
      %885 = vmatprep.mubr.bf16.mxu0 0
      %886 = vmatmul.mubr.bf16.gmra.mrb[0].mxu0 %v848
      %v887 = vpop.f32.mrb[0].mxu0
      %v888 = vadd.f32 0.0, %v887
      %v889 = vpop.f32.mrb[0].mxu0
      %v890 = vpop.f32.mrb[0].mxu0
      %v891 = vpop.f32.mrb[0].mxu0
      %892 = vdwg.mxu0
      %894 = vrot.lane.b32.xlu0 %v888, 24
      %v895 = vpop.permute.xlu0 %894
      %v897 = vadd.f32 %v843, %v895
      %vm898 = vcmask 261312
      %899 = vst.msk [vmem:[#allocation4] sm:$0xff] %vm898, %v897
      %900 = vst.msk [vmem:[%s812] sm:$0xff] %vm409, %v817
      // Predicated region
      $region41: #{sentence_pair_classifier_forward.14} parent=35 // pred_check
        %p901 = pneg %p313
      $region42: #{sentence_pair_classifier_forward.14} parent=35 // pred_check_branch
        %903 = sbr.rel (%p901) target = $region44
      $region43: #{sentence_pair_classifier_forward.14} parent=35 // pred_region
        %v904 = vld [vmem:[#allocation4] sm:$0xff]
        %v905 = vld [vmem:[#allocation3] sm:$0xff]
        %v906 = vrcp.pop %v905
        %908 = vset.pattern.permute.xlu0 0
        %909 = vperm.xlu0 %908, %v906
        %v910 = vpop.permute.xlu0 %909
        %v912 = vmul.f32 %v904, %v910
        %913 = vst.msk [vmem:[#allocation4] sm:$0xff] %vm332, %v912
        %v914 = vld [vmem:[#allocation4] sm:$0xff]
        %v915 = vld [vmem:[%s544] sm:$0xff]
        %v916 = vrcp.pop %v915
        %918 = vset.pattern.permute.xlu0 0
        %919 = vperm.xlu0 %918, %v916
        %v920 = vpop.permute.xlu0 %919
        %v922 = vmul.f32 %v914, %v920
        %923 = vst.msk [vmem:[#allocation4] sm:$0xff] %vm616, %v922
        %v924 = vld [vmem:[#allocation4] sm:$0xff]
        %v925 = vld [vmem:[%s688] sm:$0xff]
        %v926 = vrcp.pop %v925
        %928 = vset.pattern.permute.xlu0 0
        %929 = vperm.xlu0 %928, %v926
        %v930 = vpop.permute.xlu0 %929
        %v932 = vmul.f32 %v924, %v930
        %933 = vst.msk [vmem:[#allocation4] sm:$0xff] %vm757, %v932
        %v934 = vld [vmem:[#allocation4] sm:$0xff]
        %v935 = vld [vmem:[%s829] sm:$0xff]
        %v936 = vrcp.pop %v935
        %938 = vset.pattern.permute.xlu0 0
        %939 = vperm.xlu0 %938, %v936
        %v940 = vpop.permute.xlu0 %939
        %v942 = vmul.f32 %v934, %v940
        %943 = vst.msk [vmem:[#allocation4] sm:$0xff] %vm898, %v942
        %v944 = vld [vmem:[#allocation4] sm:$0xff]
        %v945 = vpack.c.bf16 %v944, %v944
        %vm946 = vcmask 257024
        %947 = vst.msk [vmem:[%s311] sm:$0xf] %vm946, %v945
      $region44: #{sentence_pair_classifier_forward.14} parent=35 // pred_fallthru
        _
      %p948 = scmp.lt.s32.totalorder %s20, 1
      %s949 = scalar_select %p948, %s20, 1
      %p950 = scmp.lt.s32.totalorder %s21, 0
      %s951 = scalar_select %p950, %s21, 0
      %s952 = sadd.s32 %s951, %s949
      %s953 = smul.addr %s952, 4
      %s954 = scalar_lea.vmem %s4, %s953
      // Predicated region
      $region45: #{sentence_pair_classifier_forward.14} parent=35 // pred_check
        %p955 = pneg %p166
      $region46: #{sentence_pair_classifier_forward.14} parent=35 // pred_check_branch
        %957 = sbr.rel (%p955) target = $region48
      $region47: #{sentence_pair_classifier_forward.14} parent=35 // pred_region
        _
      $region48: #{sentence_pair_classifier_forward.14} parent=35 // pred_fallthru
        _
    $region36: #{sentence_pair_classifier_forward.14} parent=5 // pred_fallthru
      _
    %p958 = scmp.le.s32.totalorder 2, %s10
    // Predicated region
    $region49: #{sentence_pair_classifier_forward.14} parent=5 // pred_check
      %p959 = pneg %p958
    $region50: #{sentence_pair_classifier_forward.14} parent=5 // pred_check_branch
      %961 = sbr.rel (%p959) target = $region52
    $region51: #{sentence_pair_classifier_forward.14} parent=5 // pred_region
      %s962 = ssub.s32 %s10, 2
      // Predicated region
      $region53: #{sentence_pair_classifier_forward.14} parent=51 // pred_check
        %p963 = pneg %p172
      $region54: #{sentence_pair_classifier_forward.14} parent=51 // pred_check_branch
        %965 = sbr.rel (%p963) target = $region56
      $region55: #{sentence_pair_classifier_forward.14} parent=51 // pred_region
        %p966 = scmp.lt.s32.totalorder %s23, 1
        %s967 = scalar_select %p966, %s23, 1
        %p968 = scmp.lt.s32.totalorder %s24, 0
        %s969 = scalar_select %p968, %s24, 0
        %s970 = sadd.s32 %s969, %s967
        %s971 = smul.addr %s970, 4
        %s972 = scalar_lea.vmem %s4, %s971
      $region56: #{sentence_pair_classifier_forward.14} parent=51 // pred_fallthru
        _
    $region52: #{sentence_pair_classifier_forward.14} parent=5 // pred_fallthru
      _
  $region6: #{sentence_pair_classifier_forward.14} parent=0 // loop_footer
    %s14 = sadd.s32 1, %s10
  $region7: #{sentence_pair_classifier_forward.14} parent=0 // loop_footer_branch
    %9 = sbr.rel target = $region3
  $region8: #{sentence_pair_classifier_forward.14} parent=0 // loop_exit
    _

// kernel: sentence_pair_classifier_forward.17
$region0: #{sentence_pair_classifier_forward.17}
  #allocation0 [shape = 'u32[]', space=smem, size = 0x4, offset = 0x4, fixed_abs, tag = 'smem constant byte address 0x4 - core index']
  #allocation1 [shape = 'u32[144,128]{1,0:T(1,128)}', space=vmem, size = 0x12000, scoped, tag = 'internal scratch']
  #allocation2 [shape = 'f32[16,32]{1,0:T(8,128)}', space=vmem, size = 0x2000, scoped, tag = 'scratch operand']
  %s0 = inlined_call_operand.vmem [shape: bf16[16,128], index: 0, kind: input, shape index: {}]
  %s1 = inlined_call_operand.vmem [shape: bf16[128,32], index: 1, kind: input, shape index: {}]
  %s2 = inlined_call_operand.vmem [shape: f32[1,32], index: 2, kind: input, shape index: {}]
  %s3 = inlined_call_operand.vmem [shape: bf16[16,32], index: 3, kind: input, shape index: {}]
  %s4 = inlined_call_operand.vmem [shape: f32[1,32], index: 4, kind: input, shape index: {}]
  %s5 = inlined_call_operand.vmem [shape: f32[1,32], index: 5, kind: input, shape index: {}]
  %s6 = inlined_call_operand.vmem [shape: bf16[16,32], index: 6, kind: output, shape index: {}]
  %s7 = sld [smem:[#allocation0]]
  $region42: #{sentence_pair_classifier_forward.17} parent=0
    _
  %s9 = ssub.s32 1, %s7
  %s10 = scalar_select 0, %s9, %s7
  // Predicated region
  $region2: #{sentence_pair_classifier_forward.17} parent=0 // pred_check
    _
  $region3: #{sentence_pair_classifier_forward.17} parent=0 // pred_check_branch
    %12 = sbr.rel (0) target = $region5
  $region4: #{sentence_pair_classifier_forward.17} parent=0 // pred_region
    _
  $region5: #{sentence_pair_classifier_forward.17} parent=0 // pred_fallthru
    _
  // Predicated region
  $region6: #{sentence_pair_classifier_forward.17} parent=0 // pred_check
    _
  $region7: #{sentence_pair_classifier_forward.17} parent=0 // pred_check_branch
    %14 = sbr.rel (0) target = $region9
  $region8: #{sentence_pair_classifier_forward.17} parent=0 // pred_region
    _
  $region9: #{sentence_pair_classifier_forward.17} parent=0 // pred_fallthru
    _
  // Predicated region
  $region10: #{sentence_pair_classifier_forward.17} parent=0 // pred_check
    _
  $region11: #{sentence_pair_classifier_forward.17} parent=0 // pred_check_branch
    %16 = sbr.rel (0) target = $region13
  $region12: #{sentence_pair_classifier_forward.17} parent=0 // pred_region
    _
  $region13: #{sentence_pair_classifier_forward.17} parent=0 // pred_fallthru
    _
  // Predicated region
  $region14: #{sentence_pair_classifier_forward.17} parent=0 // pred_check
    _
  $region15: #{sentence_pair_classifier_forward.17} parent=0 // pred_check_branch
    %18 = sbr.rel (0) target = $region17
  $region16: #{sentence_pair_classifier_forward.17} parent=0 // pred_region
    _
  $region17: #{sentence_pair_classifier_forward.17} parent=0 // pred_fallthru
    _
  // Predicated region
  $region18: #{sentence_pair_classifier_forward.17} parent=0 // pred_check
    _
  $region19: #{sentence_pair_classifier_forward.17} parent=0 // pred_check_branch
    %20 = sbr.rel (0) target = $region21
  $region20: #{sentence_pair_classifier_forward.17} parent=0 // pred_region
    _
  $region21: #{sentence_pair_classifier_forward.17} parent=0 // pred_fallthru
    _
  // Predicated region
  $region22: #{sentence_pair_classifier_forward.17} parent=0 // pred_check
    _
  $region23: #{sentence_pair_classifier_forward.17} parent=0 // pred_check_branch
    %22 = sbr.rel (0) target = $region25
  $region24: #{sentence_pair_classifier_forward.17} parent=0 // pred_region
    _
  $region25: #{sentence_pair_classifier_forward.17} parent=0 // pred_fallthru
    _
  %p24 = scmp.eq.s32.totalorder 0, 0
  // Predicated region
  $region26: #{sentence_pair_classifier_forward.17} parent=0 // pred_check
    %p25 = pneg %p24
  $region27: #{sentence_pair_classifier_forward.17} parent=0 // pred_check_branch
    %27 = sbr.rel (%p25) target = $region29
  $region28: #{sentence_pair_classifier_forward.17} parent=0 // pred_region
    %vm28 = vcmask 261120
    %29 = vst.msk [vmem:[#allocation2] sm:$0xff] %vm28, 0.0
    %30 = vst.msk [vmem:[#allocation2 + $0x8] sm:$0xff] %vm28, 0.0
  $region29: #{sentence_pair_classifier_forward.17} parent=0 // pred_fallthru
    _
  %v31 = vld [vmem:[#allocation2] sm:$0xff]
  %v32 = vld [vmem:[#allocation2 + $0x8] sm:$0xff]
  %v33 = vld [vmem:[%s0] sm:$0xf]
  %v34 = vld [vmem:[%s0 + $0x4] sm:$0xf]
  %v35 = vld [vmem:[%s1] sm:$0xf]
  %v36 = vld [vmem:[%s1 + $0x4] sm:$0xf]
  %v37 = vld [vmem:[%s1 + $0x8] sm:$0xf]
  %v38 = vld [vmem:[%s1 + $0xc] sm:$0xf]
  %v39 = vld [vmem:[%s1 + $0x10] sm:$0xf]
  %v40 = vld [vmem:[%s1 + $0x14] sm:$0xf]
  %v41 = vld [vmem:[%s1 + $0x18] sm:$0xf]
  %v42 = vld [vmem:[%s1 + $0x1c] sm:$0xf]
  %v43 = vld [vmem:[%s1 + $0x20] sm:$0xf]
  %v44 = vld [vmem:[%s1 + $0x24] sm:$0xf]
  %v45 = vld [vmem:[%s1 + $0x28] sm:$0xf]
  %v46 = vld [vmem:[%s1 + $0x2c] sm:$0xf]
  %v47 = vld [vmem:[%s1 + $0x30] sm:$0xf]
  %v48 = vld [vmem:[%s1 + $0x34] sm:$0xf]
  %v49 = vld [vmem:[%s1 + $0x38] sm:$0xf]
  %v50 = vld [vmem:[%s1 + $0x3c] sm:$0xf]
  %v53 = vunpack.c.l.b16 %v33
  %v54 = vunpack.c.l.b16 %v34
  %v55 = vpack.c.b16 %v54, %v53
  %v73 = vunpack.c.l.b16 %v35
  %v74 = vunpack.c.l.b16 %v36
  %v75 = vunpack.c.l.b16 %v37
  %v76 = vunpack.c.l.b16 %v38
  %v77 = vunpack.c.l.b16 %v39
  %v78 = vunpack.c.l.b16 %v40
  %v79 = vunpack.c.l.b16 %v41
  %v80 = vunpack.c.l.b16 %v42
  %v81 = vunpack.c.l.b16 %v43
  %v82 = vunpack.c.l.b16 %v44
  %v83 = vunpack.c.l.b16 %v45
  %v84 = vunpack.c.l.b16 %v46
  %v85 = vunpack.c.l.b16 %v47
  %v86 = vunpack.c.l.b16 %v48
  %v87 = vunpack.c.l.b16 %v49
  %v88 = vunpack.c.l.b16 %v50
  %v89 = vpack.c.b16 %v74, %v73
  %v90 = vpack.c.b16 %v76, %v75
  %v91 = vpack.c.b16 %v78, %v77
  %v92 = vpack.c.b16 %v80, %v79
  %v93 = vpack.c.b16 %v82, %v81
  %v94 = vpack.c.b16 %v84, %v83
  %v95 = vpack.c.b16 %v86, %v85
  %v96 = vpack.c.b16 %v88, %v87
  %105 = vmatprep.subr.bf16.mxu0 0
  %106 = vmatpush1.bf16.msra.mxu0 %v89
  %107 = vmatprep.subr.bf16.mxu0 0
  %108 = vmatpush1.bf16.msra.mxu0 %v90
  %109 = vmatprep.subr.bf16.mxu0 0
  %110 = vmatpush1.bf16.msra.mxu0 %v91
  %111 = vmatprep.subr.bf16.mxu0 0
  %112 = vmatpush1.bf16.msra.mxu0 %v92
  %113 = vmatprep.subr.bf16.mxu0 0
  %114 = vmatpush1.bf16.msra.mxu0 %v93
  %115 = vmatprep.subr.bf16.mxu0 0
  %116 = vmatpush1.bf16.msra.mxu0 %v94
  %117 = vmatprep.subr.bf16.mxu0 0
  %118 = vmatpush1.bf16.msra.mxu0 %v95
  %119 = vmatprep.subr.bf16.mxu0 0
  %120 = vmatpush1.bf16.msra.mxu0 %v96
  %121 = vmatprep.subr.bf16.mxu0 0
  %122 = vmatpush1.bf16.msra.mxu0 0
  %123 = vmatprep.subr.bf16.mxu0 0
  %124 = vmatpush1.bf16.msra.mxu0 0
  %125 = vmatprep.subr.bf16.mxu0 0
  %126 = vmatpush1.bf16.msra.mxu0 0
  %127 = vmatprep.subr.bf16.mxu0 0
  %128 = vmatpush1.bf16.msra.mxu0 0
  %129 = vmatprep.subr.bf16.mxu0 0
  %130 = vmatpush1.bf16.msra.mxu0 0
  %131 = vmatprep.subr.bf16.mxu0 0
  %132 = vmatpush1.bf16.msra.mxu0 0
  %133 = vmatprep.subr.bf16.mxu0 0
  %134 = vmatpush1.bf16.msra.mxu0 0
  %135 = vmatprep.subr.bf16.mxu0 0
  %136 = vmatpush1.bf16.msra.mxu0 0
  %137 = vmatprep.mubr.bf16.mxu0 0
  %138 = vmatmul.mubr.bf16.gmra.mrb[0].mxu0 %v55
  %v139 = vpop.f32.mrb[0].mxu0
  %v140 = vadd.f32 0.0, %v139
  %v141 = vpop.f32.mrb[0].mxu0
  %v142 = vpop.f32.mrb[0].mxu0
  %v143 = vadd.f32 0.0, %v142
  %v144 = vpop.f32.mrb[0].mxu0
  %145 = vdwg.mxu0
  %v146 = vadd.f32 %v31, %v140
  %v147 = vadd.f32 %v32, %v143
  %vm148 = vcmask 261120
  %149 = vst.msk [vmem:[#allocation2] sm:$0xff] %vm148, %v146
  %150 = vst.msk [vmem:[#allocation2 + $0x8] sm:$0xff] %vm148, %v147
  // Predicated region
  $region30: #{sentence_pair_classifier_forward.17} parent=0 // pred_check
    %p151 = pneg %p24
  $region31: #{sentence_pair_classifier_forward.17} parent=0 // pred_check_branch
    %153 = sbr.rel (%p151) target = $region33
  $region32: #{sentence_pair_classifier_forward.17} parent=0 // pred_region
    %v154 = vld [vmem:[#allocation2] sm:$0xff]
    %v155 = vld [vmem:[#allocation2 + $0x8] sm:$0xff]
    %v156 = vld [vmem:[%s2] sm:$0x1]
    %v158 = vlaneseq
    %v159 = vshrl.u32 %v158, 7
    %v160 = vsub.s32 0, %v159
    %v161 = vrot.slane %v156, %v160
    %v163 = vadd.f32 %v154, %v161
    %v164 = vadd.f32 %v155, %v161
    %v165 = vld [vmem:[%s3] sm:$0xf]
    %v166 = vld [vmem:[%s3 + $0x4] sm:$0xf]
    %v167 = vunpack.c.l.bf16 %v165
    %v168 = vunpack.c.l.bf16 %v166
    %v169 = vadd.f32 %v163, %v167
    %v170 = vadd.f32 %v164, %v168
    %v171 = vsel %vm148, %v169, 0.0
    %172 = vadd.xlane.f32.xlu0 %v171
    %v173 = vpop.xlane.xlu0 %172
    %v174 = vsel %vm148, %v170, 0.0
    %175 = vadd.xlane.f32.xlu0 %v174
    %v176 = vpop.xlane.xlu0 %175
    %v177 = vrcp.pop 32.0
    %v178 = vmul.f32 %v173, %v177
    %v179 = vmul.f32 %v176, %v177
    %v180 = vsub.f32 %v169, %v178
    %v181 = vsub.f32 %v170, %v179
    %v182 = vmul.f32 %v180, %v180
    %v183 = vmul.f32 %v181, %v181
    %v184 = vsel %vm148, %v182, 0.0
    %185 = vadd.xlane.f32.xlu0 %v184
    %v186 = vpop.xlane.xlu0 %185
    %v187 = vsel %vm148, %v183, 0.0
    %188 = vadd.xlane.f32.xlu0 %v187
    %v189 = vpop.xlane.xlu0 %188
    %v190 = vmul.f32 %v186, %v177
    %v191 = vmul.f32 %v189, %v177
    %v192 = vadd.f32 %v190, 1e-12
    %v193 = vadd.f32 %v191, 1e-12
    %v194 = vrsqrt.pop %v192
    %v195 = vrsqrt.pop %v193
    %v196 = vmul.f32 %v180, %v194
    %v197 = vmul.f32 %v181, %v195
    %v198 = vld [vmem:[%s4] sm:$0x1]
    %v200 = vlaneseq
    %v201 = vshrl.u32 %v200, 7
    %v202 = vsub.s32 0, %v201
    %v203 = vrot.slane %v198, %v202
    %v205 = vmul.f32 %v196, %v203
    %v206 = vmul.f32 %v197, %v203
    %v207 = vld [vmem:[%s5] sm:$0x1]
    %v209 = vlaneseq
    %v210 = vshrl.u32 %v209, 7
    %v211 = vsub.s32 0, %v210
    %v212 = vrot.slane %v207, %v211
    %v214 = vadd.f32 %v205, %v212
    %v215 = vadd.f32 %v206, %v212
    %v216 = vpack.c.bf16 %v215, %v214
    %v218 = vunpack.c.l.b16 %v216
    %v219 = vunpack.c.h.b16 %v216
    %v220 = vpack.c.b16 %v218, %v218
    %v221 = vpack.c.b16 %v219, %v219
    %vm224 = vcmask 257024
    %225 = vst.msk [vmem:[%s6] sm:$0xf] %vm224, %v220
    %226 = vst.msk [vmem:[%s6 + $0x4] sm:$0xf] %vm224, %v221
  $region33: #{sentence_pair_classifier_forward.17} parent=0 // pred_fallthru
    _
  // Predicated region
  $region34: #{sentence_pair_classifier_forward.17} parent=0 // pred_check
    _
  $region35: #{sentence_pair_classifier_forward.17} parent=0 // pred_check_branch
    %228 = sbr.rel (0) target = $region37
  $region36: #{sentence_pair_classifier_forward.17} parent=0 // pred_region
    _
  $region37: #{sentence_pair_classifier_forward.17} parent=0 // pred_fallthru
    _
  // Predicated region
  $region38: #{sentence_pair_classifier_forward.17} parent=0 // pred_check
    _
  $region39: #{sentence_pair_classifier_forward.17} parent=0 // pred_check_branch
    %230 = sbr.rel (0) target = $region41
  $region40: #{sentence_pair_classifier_forward.17} parent=0 // pred_region
    _
  $region41: #{sentence_pair_classifier_forward.17} parent=0 // pred_fallthru
    _

// kernel: sentence_pair_classifier_forward.23
$region0: #{sentence_pair_classifier_forward.23}
  #allocation0 [shape = 'u32[]', space=smem, size = 0x4, offset = 0x4, fixed_abs, tag = 'smem constant byte address 0x4 - core index']
  #allocation1 [shape = 'u32[144,128]{1,0:T(1,128)}', space=vmem, size = 0x12000, scoped, tag = 'internal scratch']
  #allocation2 [shape = 'f32[1,1]{1,0:T(1,128)S(1)}', space=vmem, size = 0x200, scoped, tag = 'scoped memory for sentence_pair_classifier_forward.23']
  %s0 = inlined_call_operand.vmem [shape: bf16[8,32], index: 0, kind: input, shape index: {}]
  %s1 = inlined_call_operand.vmem [shape: bf16[32,32], index: 1, kind: input, shape index: {}]
  %s2 = inlined_call_operand.vmem [shape: f32[1,32], index: 2, kind: input, shape index: {}]
  %s3 = inlined_call_operand.vmem [shape: bf16[32,1], index: 3, kind: input, shape index: {}]
  %s4 = inlined_call_operand.<no memory space> [shape: f32[1,1], index: 4, kind: input, shape index: {}]
  %s5 = inlined_call_operand.vmem [shape: f32[8,1], index: 5, kind: output, shape index: {}]
  %s6 = sld [smem:[#allocation0]]
  $region30: #{sentence_pair_classifier_forward.23} parent=0
    _
  %s8 = ssub.s32 1, %s6
  %s9 = scalar_select 0, %s8, %s6
  %v10 = vstv %s4
  %11 = vst [vmem:[#allocation2] sm:$0x1] %v10
  // Predicated region
  $region2: #{sentence_pair_classifier_forward.23} parent=0 // pred_check
    _
  $region3: #{sentence_pair_classifier_forward.23} parent=0 // pred_check_branch
    %13 = sbr.rel (0) target = $region5
  $region4: #{sentence_pair_classifier_forward.23} parent=0 // pred_region
    _
  $region5: #{sentence_pair_classifier_forward.23} parent=0 // pred_fallthru
    _
  // Predicated region
  $region6: #{sentence_pair_classifier_forward.23} parent=0 // pred_check
    _
  $region7: #{sentence_pair_classifier_forward.23} parent=0 // pred_check_branch
    %15 = sbr.rel (0) target = $region9
  $region8: #{sentence_pair_classifier_forward.23} parent=0 // pred_region
    _
  $region9: #{sentence_pair_classifier_forward.23} parent=0 // pred_fallthru
    _
  // Predicated region
  $region10: #{sentence_pair_classifier_forward.23} parent=0 // pred_check
    _
  $region11: #{sentence_pair_classifier_forward.23} parent=0 // pred_check_branch
    %17 = sbr.rel (0) target = $region13
  $region12: #{sentence_pair_classifier_forward.23} parent=0 // pred_region
    _
  $region13: #{sentence_pair_classifier_forward.23} parent=0 // pred_fallthru
    _
  // Predicated region
  $region14: #{sentence_pair_classifier_forward.23} parent=0 // pred_check
    _
  $region15: #{sentence_pair_classifier_forward.23} parent=0 // pred_check_branch
    %19 = sbr.rel (0) target = $region17
  $region16: #{sentence_pair_classifier_forward.23} parent=0 // pred_region
    _
  $region17: #{sentence_pair_classifier_forward.23} parent=0 // pred_fallthru
    _
  // Predicated region
  $region18: #{sentence_pair_classifier_forward.23} parent=0 // pred_check
    _
  $region19: #{sentence_pair_classifier_forward.23} parent=0 // pred_check_branch
    %21 = sbr.rel (0) target = $region21
  $region20: #{sentence_pair_classifier_forward.23} parent=0 // pred_region
    _
  $region21: #{sentence_pair_classifier_forward.23} parent=0 // pred_fallthru
    _
  %v23 = vld [vmem:[%s0] sm:$0xf]
  %v24 = vld [vmem:[%s1] sm:$0xf]
  %v25 = vld [vmem:[%s1 + $0x4] sm:$0xf]
  %v26 = vld [vmem:[%s1 + $0x8] sm:$0xf]
  %v27 = vld [vmem:[%s1 + $0xc] sm:$0xf]
  %v28 = vld [vmem:[%s2] sm:$0x1]
  %v30 = vlaneseq
  %v31 = vshrl.u32 %v30, 7
  %v32 = vsub.s32 0, %v31
  %v33 = vrot.slane %v28, %v32
  %v39 = vunpack.c.l.b16 %v24
  %v40 = vunpack.c.l.b16 %v25
  %v41 = vunpack.c.l.b16 %v26
  %v42 = vunpack.c.l.b16 %v27
  %v43 = vpack.c.b16 %v40, %v39
  %v44 = vpack.c.b16 %v42, %v41
  %vm47 = vcmask 261120
  %v49 = vsel %vm47, %v23, 0
  %51 = vmatprep.subr.bf16.mxu0 0
  %52 = vmatpush1.bf16.msra.mxu0 %v43
  %53 = vmatprep.subr.bf16.mxu0 0
  %54 = vmatpush1.bf16.msra.mxu0 %v44
  %55 = vmatprep.subr.bf16.mxu0 0
  %56 = vmatpush1.bf16.msra.mxu0 0
  %57 = vmatprep.subr.bf16.mxu0 0
  %58 = vmatpush1.bf16.msra.mxu0 0
  %59 = vmatprep.subr.bf16.mxu0 0
  %60 = vmatpush1.bf16.msra.mxu0 0
  %61 = vmatprep.subr.bf16.mxu0 0
  %62 = vmatpush1.bf16.msra.mxu0 0
  %63 = vmatprep.subr.bf16.mxu0 0
  %64 = vmatpush1.bf16.msra.mxu0 0
  %65 = vmatprep.subr.bf16.mxu0 0
  %66 = vmatpush1.bf16.msra.mxu0 0
  %67 = vmatprep.subr.bf16.mxu0 0
  %68 = vmatpush1.bf16.msra.mxu0 0
  %69 = vmatprep.subr.bf16.mxu0 0
  %70 = vmatpush1.bf16.msra.mxu0 0
  %71 = vmatprep.subr.bf16.mxu0 0
  %72 = vmatpush1.bf16.msra.mxu0 0
  %73 = vmatprep.subr.bf16.mxu0 0
  %74 = vmatpush1.bf16.msra.mxu0 0
  %75 = vmatprep.subr.bf16.mxu0 0
  %76 = vmatpush1.bf16.msra.mxu0 0
  %77 = vmatprep.subr.bf16.mxu0 0
  %78 = vmatpush1.bf16.msra.mxu0 0
  %79 = vmatprep.subr.bf16.mxu0 0
  %80 = vmatpush1.bf16.msra.mxu0 0
  %81 = vmatprep.subr.bf16.mxu0 0
  %82 = vmatpush1.bf16.msra.mxu0 0
  %83 = vmatprep.mubr.bf16.mxu0 0
  %84 = vmatmul.mubr.bf16.gmra.mrb[0].mxu0 %v49
  %v85 = vpop.f32.mrb[0].mxu0
  %v86 = vadd.f32 %v33, %v85
  %v87 = vpop.f32.mrb[0].mxu0
  %v88 = vpop.f32.mrb[0].mxu0
  %v89 = vpop.f32.mrb[0].mxu0
  %90 = vdwg.mxu0
  %v91 = vtanh.pop %v86
  %v92 = vpack.c.bf16 %v91, %v91
  %v93 = vld [vmem:[%s3] sm:$0xf]
  %v94 = vld [vmem:[%s3 + $0x4] sm:$0xf]
  %v95 = vld [vmem:[%s3 + $0x8] sm:$0xf]
  %v96 = vld [vmem:[%s3 + $0xc] sm:$0xf]
  %v97 = vld [vmem:[#allocation2] sm:$0x1]
  %v99 = vlaneseq
  %v100 = vshrl.u32 %v99, 7
  %v101 = vsub.s32 0, %v100
  %v102 = vrot.slane %v97, %v101
  %v108 = vunpack.c.l.b16 %v93
  %v109 = vunpack.c.l.b16 %v94
  %v110 = vunpack.c.l.b16 %v95
  %v111 = vunpack.c.l.b16 %v96
  %v112 = vpack.c.b16 %v109, %v108
  %v113 = vpack.c.b16 %v111, %v110
  %v117 = vsel %vm47, %v92, 0
  %119 = vmatprep.subr.bf16.mxu0 0
  %120 = vmatpush1.bf16.msra.mxu0 %v112
  %121 = vmatprep.subr.bf16.mxu0 0
  %122 = vmatpush1.bf16.msra.mxu0 %v113
  %123 = vmatprep.subr.bf16.mxu0 0
  %124 = vmatpush1.bf16.msra.mxu0 0
  %125 = vmatprep.subr.bf16.mxu0 0
  %126 = vmatpush1.bf16.msra.mxu0 0
  %127 = vmatprep.subr.bf16.mxu0 0
  %128 = vmatpush1.bf16.msra.mxu0 0
  %129 = vmatprep.subr.bf16.mxu0 0
  %130 = vmatpush1.bf16.msra.mxu0 0
  %131 = vmatprep.subr.bf16.mxu0 0
  %132 = vmatpush1.bf16.msra.mxu0 0
  %133 = vmatprep.subr.bf16.mxu0 0
  %134 = vmatpush1.bf16.msra.mxu0 0
  %135 = vmatprep.subr.bf16.mxu0 0
  %136 = vmatpush1.bf16.msra.mxu0 0
  %137 = vmatprep.subr.bf16.mxu0 0
  %138 = vmatpush1.bf16.msra.mxu0 0
  %139 = vmatprep.subr.bf16.mxu0 0
  %140 = vmatpush1.bf16.msra.mxu0 0
  %141 = vmatprep.subr.bf16.mxu0 0
  %142 = vmatpush1.bf16.msra.mxu0 0
  %143 = vmatprep.subr.bf16.mxu0 0
  %144 = vmatpush1.bf16.msra.mxu0 0
  %145 = vmatprep.subr.bf16.mxu0 0
  %146 = vmatpush1.bf16.msra.mxu0 0
  %147 = vmatprep.subr.bf16.mxu0 0
  %148 = vmatpush1.bf16.msra.mxu0 0
  %149 = vmatprep.subr.bf16.mxu0 0
  %150 = vmatpush1.bf16.msra.mxu0 0
  %151 = vmatprep.mubr.bf16.mxu0 0
  %152 = vmatmul.mubr.bf16.gmra.mrb[0].mxu0 %v117
  %v153 = vpop.f32.mrb[0].mxu0
  %v154 = vadd.f32 %v102, %v153
  %v155 = vpop.f32.mrb[0].mxu0
  %v156 = vpop.f32.mrb[0].mxu0
  %v157 = vpop.f32.mrb[0].mxu0
  %158 = vdwg.mxu0
  %vm159 = vcmask 7168
  %160 = vst.msk [vmem:[%s5] sm:$0xff] %vm159, %v154
  // Predicated region
  $region22: #{sentence_pair_classifier_forward.23} parent=0 // pred_check
    _
  $region23: #{sentence_pair_classifier_forward.23} parent=0 // pred_check_branch
    %162 = sbr.rel (0) target = $region25
  $region24: #{sentence_pair_classifier_forward.23} parent=0 // pred_region
    _
  $region25: #{sentence_pair_classifier_forward.23} parent=0 // pred_fallthru
    _
  // Predicated region
  $region26: #{sentence_pair_classifier_forward.23} parent=0 // pred_check
    _
  $region27: #{sentence_pair_classifier_forward.23} parent=0 // pred_check_branch
    %164 = sbr.rel (0) target = $region29
  $region28: #{sentence_pair_classifier_forward.23} parent=0 // pred_region
    _
  $region29: #{sentence_pair_classifier_forward.23} parent=0 // pred_fallthru
    _

</llo_original>
